<compile_context>
chip_gen: v7x
topology: tpu7x:2x2x1
jax: 0.10.0
libtpu: 0.0.40
codegen_flags: <defaults>
</compile_context>

<pallas_src>
import jax
import jax.numpy as jnp
import numpy as np
from jax.experimental import pallas as pl
from jax.experimental.pallas import tpu as pltpu

EPS = 1e-5


def _bn_fold(y, g, b):
    # Train-mode BatchNorm over the M (= N*H*W) rows of y:[M, C], folded into a
    # per-channel scale/shift so the whole-tile normalize is one mul-add pass.
    #   scale = gamma * rsqrt(var + eps);  shift = beta - mean * scale
    inv_m = 1.0 / y.shape[0]
    mean = jnp.sum(y, axis=0, keepdims=True) * inv_m
    var = jnp.sum(y * y, axis=0, keepdims=True) * inv_m - mean * mean   # biased var
    scale = g * jax.lax.rsqrt(var + EPS)
    shift = b - mean * scale
    return y * scale + shift


# ------------------------------ fused Pallas kernel ------------------------------

def fused_bottleneck_kernel(x_ref, w1_ref, g1_ref, b1_ref,
                            w2_ref, g2_ref, b2_ref,
                            w3_ref, g3_ref, b3_ref,
                            o_ref, xpad_ref, col_ref):
    # x:    [M, Cin]  f32   (conv1 input AND residual; Cin == 4*P)
    # w1:   [Cin, P]  bf16
    # w2:   [9*P, P]  bf16  (HWIO reshaped, tap-major: row = (dy*3+dx)*P + cin)
    # w3:   [P, 4*P]  bf16
    # g*/b*:[1, C]    f32
    # o:    [M, 4*P]  f32
    # xpad: [N, H+2, W+2, P] f32 scratch (zero border = conv2 padding)
    # col:  [N, H, W, 9*P]   bf16 scratch (im2col of xpad)
    N, Hp, Wp, P = xpad_ref.shape
    H, W = Hp - 2, Wp - 2
    M = N * H * W

    # ---- conv1 (1x1) + BN1 + ReLU (bf16 MXU, f32 accumulate) --------------------
    y1 = jnp.dot(x_ref[...].astype(jnp.bfloat16), w1_ref[...],
                 preferred_element_type=jnp.float32)
    y1 = jnp.maximum(_bn_fold(y1, g1_ref[...], b1_ref[...]), 0.0)

    # zero padding done in VMEM (no jnp.pad / HBM round trip between stages)
    xpad_ref[...] = jnp.zeros_like(xpad_ref)
    xpad_ref[:, 1:H + 1, 1:W + 1, :] = y1.reshape(N, H, W, P)

    # ---- conv2 (3x3, pad=1, stride=1) as a SINGLE im2col matmul + BN2 + ReLU ----
    for t in range(9):                       # static tap loop only fills im2col
        dy, dx = t // 3, t % 3
        col_ref[:, :, :, t * P:(t + 1) * P] = (
            xpad_ref[:, dy:dy + H, dx:dx + W, :].astype(jnp.bfloat16))
    y2 = jnp.dot(col_ref[...].reshape(M, 9 * P), w2_ref[...],
                 preferred_element_type=jnp.float32)
    y2 = jnp.maximum(_bn_fold(y2, g2_ref[...], b2_ref[...]), 0.0)

    # ---- conv3 (1x1) + BN3 + residual add + ReLU (single fused epilogue) --------
    y3 = jnp.dot(y2.astype(jnp.bfloat16), w3_ref[...],
                 preferred_element_type=jnp.float32)
    y3 = _bn_fold(y3, g3_ref[...], b3_ref[...])
    o_ref[...] = jnp.maximum(y3 + x_ref[...], 0.0)


# ----------------------------------- wrappers ------------------------------------

def bottleneck_forward_nhwc(x_nhwc, params):
    N, H, W, Cin = x_nhwc.shape
    P = params["w1"].shape[1]
    assert Cin == 4 * P, "identity residual requires inplanes == 4*planes"
    M = N * H * W

    x_flat = x_nhwc.reshape(M, Cin).astype(jnp.float32)
    w1 = params["w1"].astype(jnp.bfloat16)                     # [Cin, P]
    w2 = params["w2"].reshape(9 * P, P).astype(jnp.bfloat16)   # HWIO -> [9P, P]
    w3 = params["w3"].astype(jnp.bfloat16)                     # [P, 4P]

    n_in = 10
    out_flat = pl.pallas_call(
        fused_bottleneck_kernel,
        out_shape=jax.ShapeDtypeStruct((M, 4 * P), jnp.float32),
        in_specs=[pl.BlockSpec(memory_space=pltpu.MemorySpace.VMEM)] * n_in,
        out_specs=pl.BlockSpec(memory_space=pltpu.MemorySpace.VMEM),
        scratch_shapes=[
            pltpu.VMEM((N, H + 2, W + 2, P), jnp.float32),   # padded conv1 output
            pltpu.VMEM((N, H, W, 9 * P), jnp.bfloat16),      # im2col buffer
        ],
        # Explicit VMEM budget: well under v5e's 16 MiB scoped default and v7x's
        # 64 MiB physical at these shapes.
        compiler_params=pltpu.CompilerParams(vmem_limit_bytes=32 * 1024 * 1024),
    )(x_flat, w1, params["g1"], params["b1"],
      w2, params["g2"], params["b2"],
      w3, params["g3"], params["b3"])

    return out_flat.reshape(N, H, W, 4 * P)


def bottleneck_forward(x_nchw, params, stride=1):
    # NCHW-compatible entry matching the PyTorch module. Prefer the NHWC entry in
    # an NHWC pipeline to avoid the layout round trip through HBM.
    assert stride == 1  # TODO(synk): stride>1 / downsample branch not implemented.
    x = jnp.transpose(x_nchw, (0, 2, 3, 1))
    y = bottleneck_forward_nhwc(x, params)
    return jnp.transpose(y, (0, 3, 1, 2))


# ------------------------------ pure-JAX reference -------------------------------

def bottleneck_reference(x_nchw, params):
    x = jnp.transpose(x_nchw, (0, 2, 3, 1)).astype(jnp.float32)
    dn = ('NHWC', 'HWIO', 'NHWC')

    def bn(y, g, b):
        m = jnp.mean(y, axis=(0, 1, 2), keepdims=True)
        v = jnp.mean((y - m) ** 2, axis=(0, 1, 2), keepdims=True)
        return (y - m) * jax.lax.rsqrt(v + EPS) * g.reshape(1, 1, 1, -1) + b.reshape(1, 1, 1, -1)

    y = jax.lax.conv_general_dilated(x, params["w1"][None, None], (1, 1), 'VALID',
                                     dimension_numbers=dn)
    y = jnp.maximum(bn(y, params["g1"], params["b1"]), 0.0)
    y = jax.lax.conv_general_dilated(y, params["w2"], (1, 1), 'SAME',
                                     dimension_numbers=dn)
    y = jnp.maximum(bn(y, params["g2"], params["b2"]), 0.0)
    y = jax.lax.conv_general_dilated(y, params["w3"][None, None], (1, 1), 'VALID',
                                     dimension_numbers=dn)
    y = bn(y, params["g3"], params["b3"])
    y = jnp.maximum(y + x, 0.0)
    return jnp.transpose(y, (0, 3, 1, 2))


# -------------------------------------- main --------------------------------------

if __name__ == "__main__":
    # expansion=4: identity residual requires inplanes == 4*planes. Channels chosen
    # so the input/output channel axis is lane-dense (128 lanes).
    planes = 32
    inplanes = 4 * planes
    N, H, W = 2, 16, 16

    key = jax.random.PRNGKey(0)
    ks = jax.random.split(key, 10)
    params = {
        # conv1.weight [planes, inplanes, 1, 1] stored as matmul weight [inplanes, planes]
        "w1": jax.random.normal(ks[0], (inplanes, planes), jnp.float32) * (1.0 / inplanes ** 0.5),
        "g1": 1.0 + 0.1 * jax.random.normal(ks[1], (1, planes), jnp.float32),
        "b1": 0.1 * jax.random.normal(ks[2], (1, planes), jnp.float32),
        # conv2.weight [planes, planes, 3, 3] stored HWIO [3, 3, planes, planes]
        "w2": jax.random.normal(ks[3], (3, 3, planes, planes), jnp.float32) * (1.0 / (9 * planes) ** 0.5),
        "g2": 1.0 + 0.1 * jax.random.normal(ks[4], (1, planes), jnp.float32),
        "b2": 0.1 * jax.random.normal(ks[5], (1, planes), jnp.float32),
        # conv3.weight [4*planes, planes, 1, 1] stored as matmul weight [planes, 4*planes]
        "w3": jax.random.normal(ks[6], (planes, 4 * planes), jnp.float32) * (1.0 / planes ** 0.5),
        "g3": 1.0 + 0.1 * jax.random.normal(ks[7], (1, 4 * planes), jnp.float32),
        "b3": 0.1 * jax.random.normal(ks[8], (1, 4 * planes), jnp.float32),
    }

    x = jax.random.normal(ks[9], (N, inplanes, H, W), jnp.float32)   # NCHW like PyTorch

    out = bottleneck_forward(x, params)
    out = jax.block_until_ready(out)
    assert out.shape == (N, planes * 4, H, W)

    ref = bottleneck_reference(x, params)
    # Tolerance accounts for bf16 MXU operands in the kernel vs. full-f32 reference.
    np.testing.assert_allclose(np.asarray(out), np.asarray(ref), rtol=3e-2, atol=3e-2)

    print("KERNEL_OK")
</pallas_src>

<mosaic_0001>
module attributes {stable_mosaic.version = 11 : i64} {
  func.func @fused_bottleneck_kernel(%arg0: memref<512x128xf32, #tpu.memory_space<vmem>>, %arg1: memref<128x32xbf16, #tpu.memory_space<vmem>>, %arg2: memref<1x32xf32, #tpu.memory_space<vmem>>, %arg3: memref<1x32xf32, #tpu.memory_space<vmem>>, %arg4: memref<288x32xbf16, #tpu.memory_space<vmem>>, %arg5: memref<1x32xf32, #tpu.memory_space<vmem>>, %arg6: memref<1x32xf32, #tpu.memory_space<vmem>>, %arg7: memref<32x128xbf16, #tpu.memory_space<vmem>>, %arg8: memref<1x128xf32, #tpu.memory_space<vmem>>, %arg9: memref<1x128xf32, #tpu.memory_space<vmem>>, %arg10: memref<512x128xf32, #tpu.memory_space<vmem>>, %arg11: memref<2x18x18x32xf32, #tpu.memory_space<vmem>>, %arg12: memref<2x16x16x288xbf16, #tpu.memory_space<vmem>>) attributes {dimension_semantics = [], scalar_prefetch = 0 : i64, scratch_operands = 2 : i64, tpu.core_type = #tpu.core_type<tc>} {
    %c0 = arith.constant 0 : index
    %c0_0 = arith.constant 0 : index
    %0 = vector.load %arg0[%c0, %c0_0] : memref<512x128xf32, #tpu.memory_space<vmem>>, vector<512x128xf32>
    %1 = arith.truncf %0 : vector<512x128xf32> to vector<512x128xbf16>
    %c0_1 = arith.constant 0 : index
    %c0_2 = arith.constant 0 : index
    %2 = vector.load %arg1[%c0_1, %c0_2] : memref<128x32xbf16, #tpu.memory_space<vmem>>, vector<128x32xbf16>
    %cst = arith.constant dense<0.000000e+00> : vector<512x32xf32>
    %3 = tpu.matmul %1, %2, %cst {dimension_numbers = #tpu.dot_dimension_numbers<[1], [0], [0], [1], [0, 0, 1, 1], [], []>} : vector<512x128xbf16>, vector<128x32xbf16>, vector<512x32xf32> -> vector<512x32xf32>
    %c0_3 = arith.constant 0 : index
    %c0_4 = arith.constant 0 : index
    %4 = vector.load %arg2[%c0_3, %c0_4] : memref<1x32xf32, #tpu.memory_space<vmem>>, vector<1x32xf32>
    %c0_5 = arith.constant 0 : index
    %c0_6 = arith.constant 0 : index
    %5 = vector.load %arg3[%c0_5, %c0_6] : memref<1x32xf32, #tpu.memory_space<vmem>>, vector<1x32xf32>
    %cst_7 = arith.constant dense<0.000000e+00> : vector<32xf32>
    %6 = vector.multi_reduction <add>, %3, %cst_7 [0] : vector<512x32xf32> to vector<32xf32>
    %7 = vector.shape_cast %6 : vector<32xf32> to vector<1x32xf32>
    %cst_8 = arith.constant 0.001953125 : f32
    %8 = vector.broadcast %cst_8 : f32 to vector<1x32xf32>
    %9 = arith.mulf %7, %8 : vector<1x32xf32>
    %10 = arith.mulf %3, %3 : vector<512x32xf32>
    %cst_9 = arith.constant dense<0.000000e+00> : vector<32xf32>
    %11 = vector.multi_reduction <add>, %10, %cst_9 [0] : vector<512x32xf32> to vector<32xf32>
    %12 = vector.shape_cast %11 : vector<32xf32> to vector<1x32xf32>
    %cst_10 = arith.constant 0.001953125 : f32
    %13 = vector.broadcast %cst_10 : f32 to vector<1x32xf32>
    %14 = arith.mulf %12, %13 : vector<1x32xf32>
    %15 = arith.mulf %9, %9 : vector<1x32xf32>
    %16 = arith.subf %14, %15 : vector<1x32xf32>
    %cst_11 = arith.constant 9.99999974E-6 : f32
    %17 = vector.broadcast %cst_11 : f32 to vector<1x32xf32>
    %18 = arith.addf %16, %17 : vector<1x32xf32>
    %19 = math.rsqrt %18 : vector<1x32xf32>
    %20 = arith.mulf %4, %19 : vector<1x32xf32>
    %21 = arith.mulf %9, %20 : vector<1x32xf32>
    %22 = arith.subf %5, %21 : vector<1x32xf32>
    %23 = vector.broadcast %20 : vector<1x32xf32> to vector<512x32xf32>
    %24 = arith.mulf %3, %23 : vector<512x32xf32>
    %25 = vector.broadcast %22 : vector<1x32xf32> to vector<512x32xf32>
    %26 = arith.addf %24, %25 : vector<512x32xf32>
    %cst_12 = arith.constant 0.000000e+00 : f32
    %27 = vector.broadcast %cst_12 : f32 to vector<512x32xf32>
    %28 = arith.maximumf %26, %27 : vector<512x32xf32>
    %cst_13 = arith.constant 0.000000e+00 : f32
    %29 = vector.broadcast %cst_13 : f32 to vector<2x18x18x32xf32>
    %c0_14 = arith.constant 0 : index
    %c0_15 = arith.constant 0 : index
    %c0_16 = arith.constant 0 : index
    %c0_17 = arith.constant 0 : index
    %30 = vector.load %arg11[%c0_14, %c0_15, %c0_16, %c0_17] : memref<2x18x18x32xf32, #tpu.memory_space<vmem>>, vector<2x18x18x32xf32>
    tpu.vector_store %arg11[%c0_14, %c0_15, %c0_16, %c0_17], %29 {strides = array<i32>} : memref<2x18x18x32xf32, #tpu.memory_space<vmem>>, vector<2x18x18x32xf32>,
    %31 = vector.shape_cast %28 : vector<512x32xf32> to vector<2x16x16x32xf32>
    %c0_18 = arith.constant 0 : index
    %c1 = arith.constant 1 : index
    %c1_19 = arith.constant 1 : index
    %c0_20 = arith.constant 0 : index
    %32 = vector.load %arg11[%c0_18, %c1, %c1_19, %c0_20] : memref<2x18x18x32xf32, #tpu.memory_space<vmem>>, vector<2x16x16x32xf32>
    tpu.vector_store %arg11[%c0_18, %c1, %c1_19, %c0_20], %31 {strides = array<i32>} : memref<2x18x18x32xf32, #tpu.memory_space<vmem>>, vector<2x16x16x32xf32>,
    %c0_21 = arith.constant 0 : index
    %c0_22 = arith.constant 0 : index
    %c0_23 = arith.constant 0 : index
    %c0_24 = arith.constant 0 : index
    %33 = vector.load %arg11[%c0_21, %c0_22, %c0_23, %c0_24] : memref<2x18x18x32xf32, #tpu.memory_space<vmem>>, vector<2x16x16x32xf32>
    %34 = arith.truncf %33 : vector<2x16x16x32xf32> to vector<2x16x16x32xbf16>
    %c0_25 = arith.constant 0 : index
    %c0_26 = arith.constant 0 : index
    %c0_27 = arith.constant 0 : index
    %c0_28 = arith.constant 0 : index
    %35 = vector.load %arg12[%c0_25, %c0_26, %c0_27, %c0_28] : memref<2x16x16x288xbf16, #tpu.memory_space<vmem>>, vector<2x16x16x32xbf16>
    tpu.vector_store %arg12[%c0_25, %c0_26, %c0_27, %c0_28], %34 {strides = array<i32>} : memref<2x16x16x288xbf16, #tpu.memory_space<vmem>>, vector<2x16x16x32xbf16>,
    %c0_29 = arith.constant 0 : index
    %c0_30 = arith.constant 0 : index
    %c1_31 = arith.constant 1 : index
    %c0_32 = arith.constant 0 : index
    %36 = vector.load %arg11[%c0_29, %c0_30, %c1_31, %c0_32] : memref<2x18x18x32xf32, #tpu.memory_space<vmem>>, vector<2x16x16x32xf32>
    %37 = arith.truncf %36 : vector<2x16x16x32xf32> to vector<2x16x16x32xbf16>
    %c0_33 = arith.constant 0 : index
    %c0_34 = arith.constant 0 : index
    %c0_35 = arith.constant 0 : index
    %c32 = arith.constant 32 : index
    %38 = vector.load %arg12[%c0_33, %c0_34, %c0_35, %c32] : memref<2x16x16x288xbf16, #tpu.memory_space<vmem>>, vector<2x16x16x32xbf16>
    tpu.vector_store %arg12[%c0_33, %c0_34, %c0_35, %c32], %37 {strides = array<i32>} : memref<2x16x16x288xbf16, #tpu.memory_space<vmem>>, vector<2x16x16x32xbf16>,
    %c0_36 = arith.constant 0 : index
    %c0_37 = arith.constant 0 : index
    %c2 = arith.constant 2 : index
    %c0_38 = arith.constant 0 : index
    %39 = vector.load %arg11[%c0_36, %c0_37, %c2, %c0_38] : memref<2x18x18x32xf32, #tpu.memory_space<vmem>>, vector<2x16x16x32xf32>
    %40 = arith.truncf %39 : vector<2x16x16x32xf32> to vector<2x16x16x32xbf16>
    %c0_39 = arith.constant 0 : index
    %c0_40 = arith.constant 0 : index
    %c0_41 = arith.constant 0 : index
    %c64 = arith.constant 64 : index
    %41 = vector.load %arg12[%c0_39, %c0_40, %c0_41, %c64] : memref<2x16x16x288xbf16, #tpu.memory_space<vmem>>, vector<2x16x16x32xbf16>
    tpu.vector_store %arg12[%c0_39, %c0_40, %c0_41, %c64], %40 {strides = array<i32>} : memref<2x16x16x288xbf16, #tpu.memory_space<vmem>>, vector<2x16x16x32xbf16>,
    %c0_42 = arith.constant 0 : index
    %c1_43 = arith.constant 1 : index
    %c0_44 = arith.constant 0 : index
    %c0_45 = arith.constant 0 : index
    %42 = vector.load %arg11[%c0_42, %c1_43, %c0_44, %c0_45] : memref<2x18x18x32xf32, #tpu.memory_space<vmem>>, vector<2x16x16x32xf32>
    %43 = arith.truncf %42 : vector<2x16x16x32xf32> to vector<2x16x16x32xbf16>
    %c0_46 = arith.constant 0 : index
    %c0_47 = arith.constant 0 : index
    %c0_48 = arith.constant 0 : index
    %c96 = arith.constant 96 : index
    %44 = vector.load %arg12[%c0_46, %c0_47, %c0_48, %c96] : memref<2x16x16x288xbf16, #tpu.memory_space<vmem>>, vector<2x16x16x32xbf16>
    tpu.vector_store %arg12[%c0_46, %c0_47, %c0_48, %c96], %43 {strides = array<i32>} : memref<2x16x16x288xbf16, #tpu.memory_space<vmem>>, vector<2x16x16x32xbf16>,
    %c0_49 = arith.constant 0 : index
    %c1_50 = arith.constant 1 : index
    %c1_51 = arith.constant 1 : index
    %c0_52 = arith.constant 0 : index
    %45 = vector.load %arg11[%c0_49, %c1_50, %c1_51, %c0_52] : memref<2x18x18x32xf32, #tpu.memory_space<vmem>>, vector<2x16x16x32xf32>
    %46 = arith.truncf %45 : vector<2x16x16x32xf32> to vector<2x16x16x32xbf16>
    %c0_53 = arith.constant 0 : index
    %c0_54 = arith.constant 0 : index
    %c0_55 = arith.constant 0 : index
    %c128 = arith.constant 128 : index
    %47 = vector.load %arg12[%c0_53, %c0_54, %c0_55, %c128] : memref<2x16x16x288xbf16, #tpu.memory_space<vmem>>, vector<2x16x16x32xbf16>
    tpu.vector_store %arg12[%c0_53, %c0_54, %c0_55, %c128], %46 {strides = array<i32>} : memref<2x16x16x288xbf16, #tpu.memory_space<vmem>>, vector<2x16x16x32xbf16>,
    %c0_56 = arith.constant 0 : index
    %c1_57 = arith.constant 1 : index
    %c2_58 = arith.constant 2 : index
    %c0_59 = arith.constant 0 : index
    %48 = vector.load %arg11[%c0_56, %c1_57, %c2_58, %c0_59] : memref<2x18x18x32xf32, #tpu.memory_space<vmem>>, vector<2x16x16x32xf32>
    %49 = arith.truncf %48 : vector<2x16x16x32xf32> to vector<2x16x16x32xbf16>
    %c0_60 = arith.constant 0 : index
    %c0_61 = arith.constant 0 : index
    %c0_62 = arith.constant 0 : index
    %c160 = arith.constant 160 : index
    %50 = vector.load %arg12[%c0_60, %c0_61, %c0_62, %c160] : memref<2x16x16x288xbf16, #tpu.memory_space<vmem>>, vector<2x16x16x32xbf16>
    tpu.vector_store %arg12[%c0_60, %c0_61, %c0_62, %c160], %49 {strides = array<i32>} : memref<2x16x16x288xbf16, #tpu.memory_space<vmem>>, vector<2x16x16x32xbf16>,
    %c0_63 = arith.constant 0 : index
    %c2_64 = arith.constant 2 : index
    %c0_65 = arith.constant 0 : index
    %c0_66 = arith.constant 0 : index
    %51 = vector.load %arg11[%c0_63, %c2_64, %c0_65, %c0_66] : memref<2x18x18x32xf32, #tpu.memory_space<vmem>>, vector<2x16x16x32xf32>
    %52 = arith.truncf %51 : vector<2x16x16x32xf32> to vector<2x16x16x32xbf16>
    %c0_67 = arith.constant 0 : index
    %c0_68 = arith.constant 0 : index
    %c0_69 = arith.constant 0 : index
    %c192 = arith.constant 192 : index
    %53 = vector.load %arg12[%c0_67, %c0_68, %c0_69, %c192] : memref<2x16x16x288xbf16, #tpu.memory_space<vmem>>, vector<2x16x16x32xbf16>
    tpu.vector_store %arg12[%c0_67, %c0_68, %c0_69, %c192], %52 {strides = array<i32>} : memref<2x16x16x288xbf16, #tpu.memory_space<vmem>>, vector<2x16x16x32xbf16>,
    %c0_70 = arith.constant 0 : index
    %c2_71 = arith.constant 2 : index
    %c1_72 = arith.constant 1 : index
    %c0_73 = arith.constant 0 : index
    %54 = vector.load %arg11[%c0_70, %c2_71, %c1_72, %c0_73] : memref<2x18x18x32xf32, #tpu.memory_space<vmem>>, vector<2x16x16x32xf32>
    %55 = arith.truncf %54 : vector<2x16x16x32xf32> to vector<2x16x16x32xbf16>
    %c0_74 = arith.constant 0 : index
    %c0_75 = arith.constant 0 : index
    %c0_76 = arith.constant 0 : index
    %c224 = arith.constant 224 : index
    %56 = vector.load %arg12[%c0_74, %c0_75, %c0_76, %c224] : memref<2x16x16x288xbf16, #tpu.memory_space<vmem>>, vector<2x16x16x32xbf16>
    tpu.vector_store %arg12[%c0_74, %c0_75, %c0_76, %c224], %55 {strides = array<i32>} : memref<2x16x16x288xbf16, #tpu.memory_space<vmem>>, vector<2x16x16x32xbf16>,
    %c0_77 = arith.constant 0 : index
    %c2_78 = arith.constant 2 : index
    %c2_79 = arith.constant 2 : index
    %c0_80 = arith.constant 0 : index
    %57 = vector.load %arg11[%c0_77, %c2_78, %c2_79, %c0_80] : memref<2x18x18x32xf32, #tpu.memory_space<vmem>>, vector<2x16x16x32xf32>
    %58 = arith.truncf %57 : vector<2x16x16x32xf32> to vector<2x16x16x32xbf16>
    %c0_81 = arith.constant 0 : index
    %c0_82 = arith.constant 0 : index
    %c0_83 = arith.constant 0 : index
    %c256 = arith.constant 256 : index
    %59 = vector.load %arg12[%c0_81, %c0_82, %c0_83, %c256] : memref<2x16x16x288xbf16, #tpu.memory_space<vmem>>, vector<2x16x16x32xbf16>
    tpu.vector_store %arg12[%c0_81, %c0_82, %c0_83, %c256], %58 {strides = array<i32>} : memref<2x16x16x288xbf16, #tpu.memory_space<vmem>>, vector<2x16x16x32xbf16>,
    %c0_84 = arith.constant 0 : index
    %c0_85 = arith.constant 0 : index
    %c0_86 = arith.constant 0 : index
    %c0_87 = arith.constant 0 : index
    %60 = vector.load %arg12[%c0_84, %c0_85, %c0_86, %c0_87] : memref<2x16x16x288xbf16, #tpu.memory_space<vmem>>, vector<2x16x16x288xbf16>
    %61 = vector.shape_cast %60 : vector<2x16x16x288xbf16> to vector<512x288xbf16>
    %c0_88 = arith.constant 0 : index
    %c0_89 = arith.constant 0 : index
    %62 = vector.load %arg4[%c0_88, %c0_89] : memref<288x32xbf16, #tpu.memory_space<vmem>>, vector<288x32xbf16>
    %cst_90 = arith.constant dense<0.000000e+00> : vector<512x32xf32>
    %63 = tpu.matmul %61, %62, %cst_90 {dimension_numbers = #tpu.dot_dimension_numbers<[1], [0], [0], [1], [0, 0, 1, 1], [], []>} : vector<512x288xbf16>, vector<288x32xbf16>, vector<512x32xf32> -> vector<512x32xf32>
    %c0_91 = arith.constant 0 : index
    %c0_92 = arith.constant 0 : index
    %64 = vector.load %arg5[%c0_91, %c0_92] : memref<1x32xf32, #tpu.memory_space<vmem>>, vector<1x32xf32>
    %c0_93 = arith.constant 0 : index
    %c0_94 = arith.constant 0 : index
    %65 = vector.load %arg6[%c0_93, %c0_94] : memref<1x32xf32, #tpu.memory_space<vmem>>, vector<1x32xf32>
    %cst_95 = arith.constant dense<0.000000e+00> : vector<32xf32>
    %66 = vector.multi_reduction <add>, %63, %cst_95 [0] : vector<512x32xf32> to vector<32xf32>
    %67 = vector.shape_cast %66 : vector<32xf32> to vector<1x32xf32>
    %cst_96 = arith.constant 0.001953125 : f32
    %68 = vector.broadcast %cst_96 : f32 to vector<1x32xf32>
    %69 = arith.mulf %67, %68 : vector<1x32xf32>
    %70 = arith.mulf %63, %63 : vector<512x32xf32>
    %cst_97 = arith.constant dense<0.000000e+00> : vector<32xf32>
    %71 = vector.multi_reduction <add>, %70, %cst_97 [0] : vector<512x32xf32> to vector<32xf32>
    %72 = vector.shape_cast %71 : vector<32xf32> to vector<1x32xf32>
    %cst_98 = arith.constant 0.001953125 : f32
    %73 = vector.broadcast %cst_98 : f32 to vector<1x32xf32>
    %74 = arith.mulf %72, %73 : vector<1x32xf32>
    %75 = arith.mulf %69, %69 : vector<1x32xf32>
    %76 = arith.subf %74, %75 : vector<1x32xf32>
    %cst_99 = arith.constant 9.99999974E-6 : f32
    %77 = vector.broadcast %cst_99 : f32 to vector<1x32xf32>
    %78 = arith.addf %76, %77 : vector<1x32xf32>
    %79 = math.rsqrt %78 : vector<1x32xf32>
    %80 = arith.mulf %64, %79 : vector<1x32xf32>
    %81 = arith.mulf %69, %80 : vector<1x32xf32>
    %82 = arith.subf %65, %81 : vector<1x32xf32>
    %83 = vector.broadcast %80 : vector<1x32xf32> to vector<512x32xf32>
    %84 = arith.mulf %63, %83 : vector<512x32xf32>
    %85 = vector.broadcast %82 : vector<1x32xf32> to vector<512x32xf32>
    %86 = arith.addf %84, %85 : vector<512x32xf32>
    %cst_100 = arith.constant 0.000000e+00 : f32
    %87 = vector.broadcast %cst_100 : f32 to vector<512x32xf32>
    %88 = arith.maximumf %86, %87 : vector<512x32xf32>
    %89 = arith.truncf %88 : vector<512x32xf32> to vector<512x32xbf16>
    %c0_101 = arith.constant 0 : index
    %c0_102 = arith.constant 0 : index
    %90 = vector.load %arg7[%c0_101, %c0_102] : memref<32x128xbf16, #tpu.memory_space<vmem>>, vector<32x128xbf16>
    %cst_103 = arith.constant dense<0.000000e+00> : vector<512x128xf32>
    %91 = tpu.matmul %89, %90, %cst_103 {dimension_numbers = #tpu.dot_dimension_numbers<[1], [0], [0], [1], [0, 0, 1, 1], [], []>} : vector<512x32xbf16>, vector<32x128xbf16>, vector<512x128xf32> -> vector<512x128xf32>
    %c0_104 = arith.constant 0 : index
    %c0_105 = arith.constant 0 : index
    %92 = vector.load %arg8[%c0_104, %c0_105] : memref<1x128xf32, #tpu.memory_space<vmem>>, vector<1x128xf32>
    %c0_106 = arith.constant 0 : index
    %c0_107 = arith.constant 0 : index
    %93 = vector.load %arg9[%c0_106, %c0_107] : memref<1x128xf32, #tpu.memory_space<vmem>>, vector<1x128xf32>
    %cst_108 = arith.constant dense<0.000000e+00> : vector<128xf32>
    %94 = vector.multi_reduction <add>, %91, %cst_108 [0] : vector<512x128xf32> to vector<128xf32>
    %95 = vector.shape_cast %94 : vector<128xf32> to vector<1x128xf32>
    %cst_109 = arith.constant 0.001953125 : f32
    %96 = vector.broadcast %cst_109 : f32 to vector<1x128xf32>
    %97 = arith.mulf %95, %96 : vector<1x128xf32>
    %98 = arith.mulf %91, %91 : vector<512x128xf32>
    %cst_110 = arith.constant dense<0.000000e+00> : vector<128xf32>
    %99 = vector.multi_reduction <add>, %98, %cst_110 [0] : vector<512x128xf32> to vector<128xf32>
    %100 = vector.shape_cast %99 : vector<128xf32> to vector<1x128xf32>
    %cst_111 = arith.constant 0.001953125 : f32
    %101 = vector.broadcast %cst_111 : f32 to vector<1x128xf32>
    %102 = arith.mulf %100, %101 : vector<1x128xf32>
    %103 = arith.mulf %97, %97 : vector<1x128xf32>
    %104 = arith.subf %102, %103 : vector<1x128xf32>
    %cst_112 = arith.constant 9.99999974E-6 : f32
    %105 = vector.broadcast %cst_112 : f32 to vector<1x128xf32>
    %106 = arith.addf %104, %105 : vector<1x128xf32>
    %107 = math.rsqrt %106 : vector<1x128xf32>
    %108 = arith.mulf %92, %107 : vector<1x128xf32>
    %109 = arith.mulf %97, %108 : vector<1x128xf32>
    %110 = arith.subf %93, %109 : vector<1x128xf32>
    %111 = vector.broadcast %108 : vector<1x128xf32> to vector<512x128xf32>
    %112 = arith.mulf %91, %111 : vector<512x128xf32>
    %113 = vector.broadcast %110 : vector<1x128xf32> to vector<512x128xf32>
    %114 = arith.addf %112, %113 : vector<512x128xf32>
    %c0_113 = arith.constant 0 : index
    %c0_114 = arith.constant 0 : index
    %115 = vector.load %arg0[%c0_113, %c0_114] : memref<512x128xf32, #tpu.memory_space<vmem>>, vector<512x128xf32>
    %116 = arith.addf %114, %115 : vector<512x128xf32>
    %cst_115 = arith.constant 0.000000e+00 : f32
    %117 = vector.broadcast %cst_115 : f32 to vector<512x128xf32>
    %118 = arith.maximumf %116, %117 : vector<512x128xf32>
    %c0_116 = arith.constant 0 : index
    %c0_117 = arith.constant 0 : index
    %119 = vector.load %arg10[%c0_116, %c0_117] : memref<512x128xf32, #tpu.memory_space<vmem>>, vector<512x128xf32>
    tpu.vector_store %arg10[%c0_116, %c0_117], %118 {strides = array<i32>} : memref<512x128xf32, #tpu.memory_space<vmem>>, vector<512x128xf32>,
    return
  }
}

</mosaic_0001>

<llo_original>
// kernel: tpu_custom_call.1
$region0: #{tpu_custom_call.1}
  #allocation0 [shape = 'u32[]', space=smem, size = 0x4, offset = 0x4, fixed_abs, tag = 'smem constant byte address 0x4 - core index']
  #allocation1 [shape = 'u32[144,128]{1,0:T(1,128)}', space=vmem, size = 0x12000, scoped, tag = 'internal scratch']
  #allocation2 [shape = 'f32[2,18,18,32]{3,2,1,0:T(8,128)}', space=vmem, size = 0x6c000, scoped, tag = 'scratch operand']
  #allocation3 [shape = 'bf16[2,16,16,288]{3,2,1,0:T(16,128)(2,1)}', space=vmem, size = 0x60000, scoped, tag = 'scratch operand']
  %s0 = inlined_call_operand.hbm [shape: f32[512,128], index: 0, kind: input, shape index: {}]
  %s1 = inlined_call_operand.vmem [shape: bf16[128,32], index: 1, kind: input, shape index: {}]
  %s2 = inlined_call_operand.vmem [shape: f32[1,32], index: 2, kind: input, shape index: {}]
  %s3 = inlined_call_operand.vmem [shape: f32[1,32], index: 3, kind: input, shape index: {}]
  %s4 = inlined_call_operand.vmem [shape: bf16[288,32], index: 4, kind: input, shape index: {}]
  %s5 = inlined_call_operand.vmem [shape: f32[1,32], index: 5, kind: input, shape index: {}]
  %s6 = inlined_call_operand.vmem [shape: f32[1,32], index: 6, kind: input, shape index: {}]
  %s7 = inlined_call_operand.vmem [shape: bf16[32,128], index: 7, kind: input, shape index: {}]
  %s8 = inlined_call_operand.vmem [shape: f32[1,128], index: 8, kind: input, shape index: {}]
  %s9 = inlined_call_operand.vmem [shape: f32[1,128], index: 9, kind: input, shape index: {}]
  %s10 = inlined_call_operand.hbm [shape: f32[512,128], index: 10, kind: output, shape index: {}]
  %s11 = sld [smem:[#allocation0]]
  $region54: #{tpu_custom_call.1} parent=0
    _
  %s13 = ssub.s32 1, %s11
  %s14 = scalar_select 0, %s13, %s11
  $region1: #{tpu_custom_call.1} parent=0
    #allocation4 [shape = 'u8[262144]{0}', space=vmem, size = 0x40000, scoped, tag = 'input window, operand 0, single buffered']
    #allocation5 [shape = 's32[1]{0}', space=sflag, size = 0x4, scoped, tag = 'scoped memory for tpu_custom_call.1']
    #allocation6 [shape = 's32[1]{0}', space=sflag, size = 0x4, scoped, tag = 'scoped memory for tpu_custom_call.1']
    #allocation7 [shape = 'u8[262144]{0}', space=vmem, size = 0x40000, scoped, tag = 'output window, operand 0, single buffered']
    %15 = vsyncpa [#allocation5], 0
    %16 = vsyncpa [#allocation6], 0
    // Predicated region
    $region2: #{tpu_custom_call.1} parent=1 // pred_check
      _
    $region3: #{tpu_custom_call.1} parent=1 // pred_check_branch
      %18 = sbr.rel (0) target = $region5
    $region4: #{tpu_custom_call.1} parent=1 // pred_region
      %s20 = ssub.s32 8192, 8192
      %21 = vsyncadd [#allocation5], %s20
      %s22 = sshll.u32 [#allocation4], 4
      %s23 = int_to_ptr.vmem [resolvable:$true] %s22
      %28 = dma.hbm_to_vmem [thread:$0]  %s0, 8192, %s23, [#allocation5], 128, 128, 8
    $region5: #{tpu_custom_call.1} parent=1 // pred_fallthru
      _
    // Predicated region
    $region6: #{tpu_custom_call.1} parent=1 // pred_check
      _
    $region7: #{tpu_custom_call.1} parent=1 // pred_check_branch
      %30 = sbr.rel (0) target = $region9
    $region8: #{tpu_custom_call.1} parent=1 // pred_region
      _
    $region9: #{tpu_custom_call.1} parent=1 // pred_fallthru
      _
    // Predicated region
    $region10: #{tpu_custom_call.1} parent=1 // pred_check
      _
    $region11: #{tpu_custom_call.1} parent=1 // pred_check_branch
      %32 = sbr.rel (0) target = $region13
    $region12: #{tpu_custom_call.1} parent=1 // pred_region
      _
    $region13: #{tpu_custom_call.1} parent=1 // pred_fallthru
      _
    // Predicated region
    $region14: #{tpu_custom_call.1} parent=1 // pred_check
      _
    $region15: #{tpu_custom_call.1} parent=1 // pred_check_branch
      %34 = sbr.rel (0) target = $region17
    $region16: #{tpu_custom_call.1} parent=1 // pred_region
      _
    $region17: #{tpu_custom_call.1} parent=1 // pred_fallthru
      _
    // Predicated region
    $region18: #{tpu_custom_call.1} parent=1 // pred_check
      _
    $region19: #{tpu_custom_call.1} parent=1 // pred_check_branch
      %36 = sbr.rel (0) target = $region21
    $region20: #{tpu_custom_call.1} parent=1 // pred_region
      _
    $region21: #{tpu_custom_call.1} parent=1 // pred_fallthru
      _
    // Predicated region
    $region22: #{tpu_custom_call.1} parent=1 // pred_check
      _
    $region23: #{tpu_custom_call.1} parent=1 // pred_check_branch
      %38 = sbr.rel (0) target = $region25
    $region24: #{tpu_custom_call.1} parent=1 // pred_region
      _
    $region25: #{tpu_custom_call.1} parent=1 // pred_fallthru
      _
    // Predicated region
    $region26: #{tpu_custom_call.1} parent=1 // pred_check
      _
    $region27: #{tpu_custom_call.1} parent=1 // pred_check_branch
      %40 = sbr.rel (0) target = $region29
    $region28: #{tpu_custom_call.1} parent=1 // pred_region
      _
    $region29: #{tpu_custom_call.1} parent=1 // pred_fallthru
      _
    // Predicated region
    $region30: #{tpu_custom_call.1} parent=1 // pred_check
      _
    $region31: #{tpu_custom_call.1} parent=1 // pred_check_branch
      %42 = sbr.rel (0) target = $region33
    $region32: #{tpu_custom_call.1} parent=1 // pred_region
      _
    $region33: #{tpu_custom_call.1} parent=1 // pred_fallthru
      _
    // Predicated region
    $region34: #{tpu_custom_call.1} parent=1 // pred_check
      _
    $region35: #{tpu_custom_call.1} parent=1 // pred_check_branch
      %44 = sbr.rel (0) target = $region37
    $region36: #{tpu_custom_call.1} parent=1 // pred_region
      _
    $region37: #{tpu_custom_call.1} parent=1 // pred_fallthru
      _
    // Predicated region
    $region38: #{tpu_custom_call.1} parent=1 // pred_check
      _
    $region39: #{tpu_custom_call.1} parent=1 // pred_check_branch
      %46 = sbr.rel (0) target = $region41
    $region40: #{tpu_custom_call.1} parent=1 // pred_region
      _
    $region41: #{tpu_custom_call.1} parent=1 // pred_fallthru
      _
    // Predicated region
    $region42: #{tpu_custom_call.1} parent=1 // pred_check
      _
    $region43: #{tpu_custom_call.1} parent=1 // pred_check_branch
      %48 = sbr.rel (0) target = $region45
    $region44: #{tpu_custom_call.1} parent=1 // pred_region
      %49 = dma.done [#allocation5], 8192
    $region45: #{tpu_custom_call.1} parent=1 // pred_fallthru
      _
    %v51 = vld [vmem:[#allocation4] sm:$0xff]
    %v52 = vld [vmem:[#allocation4 + $0x8] sm:$0xff]
    %v53 = vld [vmem:[#allocation4 + $0x10] sm:$0xff]
    %v54 = vld [vmem:[#allocation4 + $0x18] sm:$0xff]
    %v55 = vld [vmem:[#allocation4 + $0x20] sm:$0xff]
    %v56 = vld [vmem:[#allocation4 + $0x28] sm:$0xff]
    %v57 = vld [vmem:[#allocation4 + $0x30] sm:$0xff]
    %v58 = vld [vmem:[#allocation4 + $0x38] sm:$0xff]
    %v59 = vld [vmem:[#allocation4 + $0x40] sm:$0xff]
    %v60 = vld [vmem:[#allocation4 + $0x48] sm:$0xff]
    %v61 = vld [vmem:[#allocation4 + $0x50] sm:$0xff]
    %v62 = vld [vmem:[#allocation4 + $0x58] sm:$0xff]
    %v63 = vld [vmem:[#allocation4 + $0x60] sm:$0xff]
    %v64 = vld [vmem:[#allocation4 + $0x68] sm:$0xff]
    %v65 = vld [vmem:[#allocation4 + $0x70] sm:$0xff]
    %v66 = vld [vmem:[#allocation4 + $0x78] sm:$0xff]
    %v67 = vld [vmem:[#allocation4 + $0x80] sm:$0xff]
    %v68 = vld [vmem:[#allocation4 + $0x88] sm:$0xff]
    %v69 = vld [vmem:[#allocation4 + $0x90] sm:$0xff]
    %v70 = vld [vmem:[#allocation4 + $0x98] sm:$0xff]
    %v71 = vld [vmem:[#allocation4 + $0xa0] sm:$0xff]
    %v72 = vld [vmem:[#allocation4 + $0xa8] sm:$0xff]
    %v73 = vld [vmem:[#allocation4 + $0xb0] sm:$0xff]
    %v74 = vld [vmem:[#allocation4 + $0xb8] sm:$0xff]
    %v75 = vld [vmem:[#allocation4 + $0xc0] sm:$0xff]
    %v76 = vld [vmem:[#allocation4 + $0xc8] sm:$0xff]
    %v77 = vld [vmem:[#allocation4 + $0xd0] sm:$0xff]
    %v78 = vld [vmem:[#allocation4 + $0xd8] sm:$0xff]
    %v79 = vld [vmem:[#allocation4 + $0xe0] sm:$0xff]
    %v80 = vld [vmem:[#allocation4 + $0xe8] sm:$0xff]
    %v81 = vld [vmem:[#allocation4 + $0xf0] sm:$0xff]
    %v82 = vld [vmem:[#allocation4 + $0xf8] sm:$0xff]
    %v83 = vld [vmem:[#allocation4 + $0x100] sm:$0xff]
    %v84 = vld [vmem:[#allocation4 + $0x108] sm:$0xff]
    %v85 = vld [vmem:[#allocation4 + $0x110] sm:$0xff]
    %v86 = vld [vmem:[#allocation4 + $0x118] sm:$0xff]
    %v87 = vld [vmem:[#allocation4 + $0x120] sm:$0xff]
    %v88 = vld [vmem:[#allocation4 + $0x128] sm:$0xff]
    %v89 = vld [vmem:[#allocation4 + $0x130] sm:$0xff]
    %v90 = vld [vmem:[#allocation4 + $0x138] sm:$0xff]
    %v91 = vld [vmem:[#allocation4 + $0x140] sm:$0xff]
    %v92 = vld [vmem:[#allocation4 + $0x148] sm:$0xff]
    %v93 = vld [vmem:[#allocation4 + $0x150] sm:$0xff]
    %v94 = vld [vmem:[#allocation4 + $0x158] sm:$0xff]
    %v95 = vld [vmem:[#allocation4 + $0x160] sm:$0xff]
    %v96 = vld [vmem:[#allocation4 + $0x168] sm:$0xff]
    %v97 = vld [vmem:[#allocation4 + $0x170] sm:$0xff]
    %v98 = vld [vmem:[#allocation4 + $0x178] sm:$0xff]
    %v99 = vld [vmem:[#allocation4 + $0x180] sm:$0xff]
    %v100 = vld [vmem:[#allocation4 + $0x188] sm:$0xff]
    %v101 = vld [vmem:[#allocation4 + $0x190] sm:$0xff]
    %v102 = vld [vmem:[#allocation4 + $0x198] sm:$0xff]
    %v103 = vld [vmem:[#allocation4 + $0x1a0] sm:$0xff]
    %v104 = vld [vmem:[#allocation4 + $0x1a8] sm:$0xff]
    %v105 = vld [vmem:[#allocation4 + $0x1b0] sm:$0xff]
    %v106 = vld [vmem:[#allocation4 + $0x1b8] sm:$0xff]
    %v107 = vld [vmem:[#allocation4 + $0x1c0] sm:$0xff]
    %v108 = vld [vmem:[#allocation4 + $0x1c8] sm:$0xff]
    %v109 = vld [vmem:[#allocation4 + $0x1d0] sm:$0xff]
    %v110 = vld [vmem:[#allocation4 + $0x1d8] sm:$0xff]
    %v111 = vld [vmem:[#allocation4 + $0x1e0] sm:$0xff]
    %v112 = vld [vmem:[#allocation4 + $0x1e8] sm:$0xff]
    %v113 = vld [vmem:[#allocation4 + $0x1f0] sm:$0xff]
    %v114 = vld [vmem:[#allocation4 + $0x1f8] sm:$0xff]
    %v115 = vpack.c.bf16 %v52, %v51
    %v116 = vpack.c.bf16 %v54, %v53
    %v117 = vpack.c.bf16 %v56, %v55
    %v118 = vpack.c.bf16 %v58, %v57
    %v119 = vpack.c.bf16 %v60, %v59
    %v120 = vpack.c.bf16 %v62, %v61
    %v121 = vpack.c.bf16 %v64, %v63
    %v122 = vpack.c.bf16 %v66, %v65
    %v123 = vpack.c.bf16 %v68, %v67
    %v124 = vpack.c.bf16 %v70, %v69
    %v125 = vpack.c.bf16 %v72, %v71
    %v126 = vpack.c.bf16 %v74, %v73
    %v127 = vpack.c.bf16 %v76, %v75
    %v128 = vpack.c.bf16 %v78, %v77
    %v129 = vpack.c.bf16 %v80, %v79
    %v130 = vpack.c.bf16 %v82, %v81
    %v131 = vpack.c.bf16 %v84, %v83
    %v132 = vpack.c.bf16 %v86, %v85
    %v133 = vpack.c.bf16 %v88, %v87
    %v134 = vpack.c.bf16 %v90, %v89
    %v135 = vpack.c.bf16 %v92, %v91
    %v136 = vpack.c.bf16 %v94, %v93
    %v137 = vpack.c.bf16 %v96, %v95
    %v138 = vpack.c.bf16 %v98, %v97
    %v139 = vpack.c.bf16 %v100, %v99
    %v140 = vpack.c.bf16 %v102, %v101
    %v141 = vpack.c.bf16 %v104, %v103
    %v142 = vpack.c.bf16 %v106, %v105
    %v143 = vpack.c.bf16 %v108, %v107
    %v144 = vpack.c.bf16 %v110, %v109
    %v145 = vpack.c.bf16 %v112, %v111
    %v146 = vpack.c.bf16 %v114, %v113
    %v147 = vld [vmem:[%s1] sm:$0xf]
    %v148 = vld [vmem:[%s1 + $0x4] sm:$0xf]
    %v149 = vld [vmem:[%s1 + $0x8] sm:$0xf]
    %v150 = vld [vmem:[%s1 + $0xc] sm:$0xf]
    %v151 = vld [vmem:[%s1 + $0x10] sm:$0xf]
    %v152 = vld [vmem:[%s1 + $0x14] sm:$0xf]
    %v153 = vld [vmem:[%s1 + $0x18] sm:$0xf]
    %v154 = vld [vmem:[%s1 + $0x1c] sm:$0xf]
    %v155 = vld [vmem:[%s1 + $0x20] sm:$0xf]
    %v156 = vld [vmem:[%s1 + $0x24] sm:$0xf]
    %v157 = vld [vmem:[%s1 + $0x28] sm:$0xf]
    %v158 = vld [vmem:[%s1 + $0x2c] sm:$0xf]
    %v159 = vld [vmem:[%s1 + $0x30] sm:$0xf]
    %v160 = vld [vmem:[%s1 + $0x34] sm:$0xf]
    %v161 = vld [vmem:[%s1 + $0x38] sm:$0xf]
    %v162 = vld [vmem:[%s1 + $0x3c] sm:$0xf]
    %v179 = vunpack.c.l.b16 %v147
    %v180 = vunpack.c.l.b16 %v148
    %v181 = vunpack.c.l.b16 %v149
    %v182 = vunpack.c.l.b16 %v150
    %v183 = vunpack.c.l.b16 %v151
    %v184 = vunpack.c.l.b16 %v152
    %v185 = vunpack.c.l.b16 %v153
    %v186 = vunpack.c.l.b16 %v154
    %v187 = vunpack.c.l.b16 %v155
    %v188 = vunpack.c.l.b16 %v156
    %v189 = vunpack.c.l.b16 %v157
    %v190 = vunpack.c.l.b16 %v158
    %v191 = vunpack.c.l.b16 %v159
    %v192 = vunpack.c.l.b16 %v160
    %v193 = vunpack.c.l.b16 %v161
    %v194 = vunpack.c.l.b16 %v162
    %v195 = vpack.c.b16 %v180, %v179
    %v196 = vpack.c.b16 %v182, %v181
    %v197 = vpack.c.b16 %v184, %v183
    %v198 = vpack.c.b16 %v186, %v185
    %v199 = vpack.c.b16 %v188, %v187
    %v200 = vpack.c.b16 %v190, %v189
    %v201 = vpack.c.b16 %v192, %v191
    %v202 = vpack.c.b16 %v194, %v193
    %211 = vmatprep.subr.bf16.mxu0 0
    %212 = vmatpush1.bf16.msra.mxu0 %v195
    %213 = vmatprep.subr.bf16.mxu0 0
    %214 = vmatpush1.bf16.msra.mxu0 %v196
    %215 = vmatprep.subr.bf16.mxu0 0
    %216 = vmatpush1.bf16.msra.mxu0 %v197
    %217 = vmatprep.subr.bf16.mxu0 0
    %218 = vmatpush1.bf16.msra.mxu0 %v198
    %219 = vmatprep.subr.bf16.mxu0 0
    %220 = vmatpush1.bf16.msra.mxu0 %v199
    %221 = vmatprep.subr.bf16.mxu0 0
    %222 = vmatpush1.bf16.msra.mxu0 %v200
    %223 = vmatprep.subr.bf16.mxu0 0
    %224 = vmatpush1.bf16.msra.mxu0 %v201
    %225 = vmatprep.subr.bf16.mxu0 0
    %226 = vmatpush1.bf16.msra.mxu0 %v202
    %227 = vmatprep.subr.bf16.mxu0 0
    %228 = vmatpush1.bf16.msra.mxu0 0
    %229 = vmatprep.subr.bf16.mxu0 0
    %230 = vmatpush1.bf16.msra.mxu0 0
    %231 = vmatprep.subr.bf16.mxu0 0
    %232 = vmatpush1.bf16.msra.mxu0 0
    %233 = vmatprep.subr.bf16.mxu0 0
    %234 = vmatpush1.bf16.msra.mxu0 0
    %235 = vmatprep.subr.bf16.mxu0 0
    %236 = vmatpush1.bf16.msra.mxu0 0
    %237 = vmatprep.subr.bf16.mxu0 0
    %238 = vmatpush1.bf16.msra.mxu0 0
    %239 = vmatprep.subr.bf16.mxu0 0
    %240 = vmatpush1.bf16.msra.mxu0 0
    %241 = vmatprep.subr.bf16.mxu0 0
    %242 = vmatpush1.bf16.msra.mxu0 0
    %243 = vmatprep.mubr.bf16.mxu0 0
    %244 = vmatmul.mubr.bf16.gmra.mrb[0].mxu0 %v115
    %v245 = vpop.f32.mrb[0].mxu0
    %v246 = vadd.f32 0.0, %v245
    %v247 = vpop.f32.mrb[0].mxu0
    %v248 = vpop.f32.mrb[0].mxu0
    %v249 = vadd.f32 0.0, %v248
    %v250 = vpop.f32.mrb[0].mxu0
    %251 = vmatprep.mubr.bf16.mxu0 0
    %252 = vmatmul.mubr.bf16.gmra.mrb[0].mxu0 %v116
    %v253 = vpop.f32.mrb[0].mxu0
    %v254 = vadd.f32 0.0, %v253
    %v255 = vpop.f32.mrb[0].mxu0
    %v256 = vpop.f32.mrb[0].mxu0
    %v257 = vadd.f32 0.0, %v256
    %v258 = vpop.f32.mrb[0].mxu0
    %259 = vmatprep.mubr.bf16.mxu0 0
    %260 = vmatmul.mubr.bf16.gmra.mrb[0].mxu0 %v117
    %v261 = vpop.f32.mrb[0].mxu0
    %v262 = vadd.f32 0.0, %v261
    %v263 = vpop.f32.mrb[0].mxu0
    %v264 = vpop.f32.mrb[0].mxu0
    %v265 = vadd.f32 0.0, %v264
    %v266 = vpop.f32.mrb[0].mxu0
    %267 = vmatprep.mubr.bf16.mxu0 0
    %268 = vmatmul.mubr.bf16.gmra.mrb[0].mxu0 %v118
    %v269 = vpop.f32.mrb[0].mxu0
    %v270 = vadd.f32 0.0, %v269
    %v271 = vpop.f32.mrb[0].mxu0
    %v272 = vpop.f32.mrb[0].mxu0
    %v273 = vadd.f32 0.0, %v272
    %v274 = vpop.f32.mrb[0].mxu0
    %275 = vmatprep.mubr.bf16.mxu0 0
    %276 = vmatmul.mubr.bf16.gmra.mrb[0].mxu0 %v119
    %v277 = vpop.f32.mrb[0].mxu0
    %v278 = vadd.f32 0.0, %v277
    %v279 = vpop.f32.mrb[0].mxu0
    %v280 = vpop.f32.mrb[0].mxu0
    %v281 = vadd.f32 0.0, %v280
    %v282 = vpop.f32.mrb[0].mxu0
    %283 = vmatprep.mubr.bf16.mxu0 0
    %284 = vmatmul.mubr.bf16.gmra.mrb[0].mxu0 %v120
    %v285 = vpop.f32.mrb[0].mxu0
    %v286 = vadd.f32 0.0, %v285
    %v287 = vpop.f32.mrb[0].mxu0
    %v288 = vpop.f32.mrb[0].mxu0
    %v289 = vadd.f32 0.0, %v288
    %v290 = vpop.f32.mrb[0].mxu0
    %291 = vmatprep.mubr.bf16.mxu0 0
    %292 = vmatmul.mubr.bf16.gmra.mrb[0].mxu0 %v121
    %v293 = vpop.f32.mrb[0].mxu0
    %v294 = vadd.f32 0.0, %v293
    %v295 = vpop.f32.mrb[0].mxu0
    %v296 = vpop.f32.mrb[0].mxu0
    %v297 = vadd.f32 0.0, %v296
    %v298 = vpop.f32.mrb[0].mxu0
    %299 = vmatprep.mubr.bf16.mxu0 0
    %300 = vmatmul.mubr.bf16.gmra.mrb[0].mxu0 %v122
    %v301 = vpop.f32.mrb[0].mxu0
    %v302 = vadd.f32 0.0, %v301
    %v303 = vpop.f32.mrb[0].mxu0
    %v304 = vpop.f32.mrb[0].mxu0
    %v305 = vadd.f32 0.0, %v304
    %v306 = vpop.f32.mrb[0].mxu0
    %307 = vmatprep.mubr.bf16.mxu0 0
    %308 = vmatmul.mubr.bf16.gmra.mrb[0].mxu0 %v123
    %v309 = vpop.f32.mrb[0].mxu0
    %v310 = vadd.f32 0.0, %v309
    %v311 = vpop.f32.mrb[0].mxu0
    %v312 = vpop.f32.mrb[0].mxu0
    %v313 = vadd.f32 0.0, %v312
    %v314 = vpop.f32.mrb[0].mxu0
    %315 = vmatprep.mubr.bf16.mxu0 0
    %316 = vmatmul.mubr.bf16.gmra.mrb[0].mxu0 %v124
    %v317 = vpop.f32.mrb[0].mxu0
    %v318 = vadd.f32 0.0, %v317
    %v319 = vpop.f32.mrb[0].mxu0
    %v320 = vpop.f32.mrb[0].mxu0
    %v321 = vadd.f32 0.0, %v320
    %v322 = vpop.f32.mrb[0].mxu0
    %323 = vmatprep.mubr.bf16.mxu0 0
    %324 = vmatmul.mubr.bf16.gmra.mrb[0].mxu0 %v125
    %v325 = vpop.f32.mrb[0].mxu0
    %v326 = vadd.f32 0.0, %v325
    %v327 = vpop.f32.mrb[0].mxu0
    %v328 = vpop.f32.mrb[0].mxu0
    %v329 = vadd.f32 0.0, %v328
    %v330 = vpop.f32.mrb[0].mxu0
    %331 = vmatprep.mubr.bf16.mxu0 0
    %332 = vmatmul.mubr.bf16.gmra.mrb[0].mxu0 %v126
    %v333 = vpop.f32.mrb[0].mxu0
    %v334 = vadd.f32 0.0, %v333
    %v335 = vpop.f32.mrb[0].mxu0
    %v336 = vpop.f32.mrb[0].mxu0
    %v337 = vadd.f32 0.0, %v336
    %v338 = vpop.f32.mrb[0].mxu0
    %339 = vmatprep.mubr.bf16.mxu0 0
    %340 = vmatmul.mubr.bf16.gmra.mrb[0].mxu0 %v127
    %v341 = vpop.f32.mrb[0].mxu0
    %v342 = vadd.f32 0.0, %v341
    %v343 = vpop.f32.mrb[0].mxu0
    %v344 = vpop.f32.mrb[0].mxu0
    %v345 = vadd.f32 0.0, %v344
    %v346 = vpop.f32.mrb[0].mxu0
    %347 = vmatprep.mubr.bf16.mxu0 0
    %348 = vmatmul.mubr.bf16.gmra.mrb[0].mxu0 %v128
    %v349 = vpop.f32.mrb[0].mxu0
    %v350 = vadd.f32 0.0, %v349
    %v351 = vpop.f32.mrb[0].mxu0
    %v352 = vpop.f32.mrb[0].mxu0
    %v353 = vadd.f32 0.0, %v352
    %v354 = vpop.f32.mrb[0].mxu0
    %355 = vmatprep.mubr.bf16.mxu0 0
    %356 = vmatmul.mubr.bf16.gmra.mrb[0].mxu0 %v129
    %v357 = vpop.f32.mrb[0].mxu0
    %v358 = vadd.f32 0.0, %v357
    %v359 = vpop.f32.mrb[0].mxu0
    %v360 = vpop.f32.mrb[0].mxu0
    %v361 = vadd.f32 0.0, %v360
    %v362 = vpop.f32.mrb[0].mxu0
    %363 = vmatprep.mubr.bf16.mxu0 0
    %364 = vmatmul.mubr.bf16.gmra.mrb[0].mxu0 %v130
    %v365 = vpop.f32.mrb[0].mxu0
    %v366 = vadd.f32 0.0, %v365
    %v367 = vpop.f32.mrb[0].mxu0
    %v368 = vpop.f32.mrb[0].mxu0
    %v369 = vadd.f32 0.0, %v368
    %v370 = vpop.f32.mrb[0].mxu0
    %371 = vmatprep.mubr.bf16.mxu0 0
    %372 = vmatmul.mubr.bf16.gmra.mrb[0].mxu0 %v131
    %v373 = vpop.f32.mrb[0].mxu0
    %v374 = vadd.f32 0.0, %v373
    %v375 = vpop.f32.mrb[0].mxu0
    %v376 = vpop.f32.mrb[0].mxu0
    %v377 = vadd.f32 0.0, %v376
    %v378 = vpop.f32.mrb[0].mxu0
    %379 = vmatprep.mubr.bf16.mxu0 0
    %380 = vmatmul.mubr.bf16.gmra.mrb[0].mxu0 %v132
    %v381 = vpop.f32.mrb[0].mxu0
    %v382 = vadd.f32 0.0, %v381
    %v383 = vpop.f32.mrb[0].mxu0
    %v384 = vpop.f32.mrb[0].mxu0
    %v385 = vadd.f32 0.0, %v384
    %v386 = vpop.f32.mrb[0].mxu0
    %387 = vmatprep.mubr.bf16.mxu0 0
    %388 = vmatmul.mubr.bf16.gmra.mrb[0].mxu0 %v133
    %v389 = vpop.f32.mrb[0].mxu0
    %v390 = vadd.f32 0.0, %v389
    %v391 = vpop.f32.mrb[0].mxu0
    %v392 = vpop.f32.mrb[0].mxu0
    %v393 = vadd.f32 0.0, %v392
    %v394 = vpop.f32.mrb[0].mxu0
    %395 = vmatprep.mubr.bf16.mxu0 0
    %396 = vmatmul.mubr.bf16.gmra.mrb[0].mxu0 %v134
    %v397 = vpop.f32.mrb[0].mxu0
    %v398 = vadd.f32 0.0, %v397
    %v399 = vpop.f32.mrb[0].mxu0
    %v400 = vpop.f32.mrb[0].mxu0
    %v401 = vadd.f32 0.0, %v400
    %v402 = vpop.f32.mrb[0].mxu0
    %403 = vmatprep.mubr.bf16.mxu0 0
    %404 = vmatmul.mubr.bf16.gmra.mrb[0].mxu0 %v135
    %v405 = vpop.f32.mrb[0].mxu0
    %v406 = vadd.f32 0.0, %v405
    %v407 = vpop.f32.mrb[0].mxu0
    %v408 = vpop.f32.mrb[0].mxu0
    %v409 = vadd.f32 0.0, %v408
    %v410 = vpop.f32.mrb[0].mxu0
    %411 = vmatprep.mubr.bf16.mxu0 0
    %412 = vmatmul.mubr.bf16.gmra.mrb[0].mxu0 %v136
    %v413 = vpop.f32.mrb[0].mxu0
    %v414 = vadd.f32 0.0, %v413
    %v415 = vpop.f32.mrb[0].mxu0
    %v416 = vpop.f32.mrb[0].mxu0
    %v417 = vadd.f32 0.0, %v416
    %v418 = vpop.f32.mrb[0].mxu0
    %419 = vmatprep.mubr.bf16.mxu0 0
    %420 = vmatmul.mubr.bf16.gmra.mrb[0].mxu0 %v137
    %v421 = vpop.f32.mrb[0].mxu0
    %v422 = vadd.f32 0.0, %v421
    %v423 = vpop.f32.mrb[0].mxu0
    %v424 = vpop.f32.mrb[0].mxu0
    %v425 = vadd.f32 0.0, %v424
    %v426 = vpop.f32.mrb[0].mxu0
    %427 = vmatprep.mubr.bf16.mxu0 0
    %428 = vmatmul.mubr.bf16.gmra.mrb[0].mxu0 %v138
    %v429 = vpop.f32.mrb[0].mxu0
    %v430 = vadd.f32 0.0, %v429
    %v431 = vpop.f32.mrb[0].mxu0
    %v432 = vpop.f32.mrb[0].mxu0
    %v433 = vadd.f32 0.0, %v432
    %v434 = vpop.f32.mrb[0].mxu0
    %435 = vmatprep.mubr.bf16.mxu0 0
    %436 = vmatmul.mubr.bf16.gmra.mrb[0].mxu0 %v139
    %v437 = vpop.f32.mrb[0].mxu0
    %v438 = vadd.f32 0.0, %v437
    %v439 = vpop.f32.mrb[0].mxu0
    %v440 = vpop.f32.mrb[0].mxu0
    %v441 = vadd.f32 0.0, %v440
    %v442 = vpop.f32.mrb[0].mxu0
    %443 = vmatprep.mubr.bf16.mxu0 0
    %444 = vmatmul.mubr.bf16.gmra.mrb[0].mxu0 %v140
    %v445 = vpop.f32.mrb[0].mxu0
    %v446 = vadd.f32 0.0, %v445
    %v447 = vpop.f32.mrb[0].mxu0
    %v448 = vpop.f32.mrb[0].mxu0
    %v449 = vadd.f32 0.0, %v448
    %v450 = vpop.f32.mrb[0].mxu0
    %451 = vmatprep.mubr.bf16.mxu0 0
    %452 = vmatmul.mubr.bf16.gmra.mrb[0].mxu0 %v141
    %v453 = vpop.f32.mrb[0].mxu0
    %v454 = vadd.f32 0.0, %v453
    %v455 = vpop.f32.mrb[0].mxu0
    %v456 = vpop.f32.mrb[0].mxu0
    %v457 = vadd.f32 0.0, %v456
    %v458 = vpop.f32.mrb[0].mxu0
    %459 = vmatprep.mubr.bf16.mxu0 0
    %460 = vmatmul.mubr.bf16.gmra.mrb[0].mxu0 %v142
    %v461 = vpop.f32.mrb[0].mxu0
    %v462 = vadd.f32 0.0, %v461
    %v463 = vpop.f32.mrb[0].mxu0
    %v464 = vpop.f32.mrb[0].mxu0
    %v465 = vadd.f32 0.0, %v464
    %v466 = vpop.f32.mrb[0].mxu0
    %467 = vmatprep.mubr.bf16.mxu0 0
    %468 = vmatmul.mubr.bf16.gmra.mrb[0].mxu0 %v143
    %v469 = vpop.f32.mrb[0].mxu0
    %v470 = vadd.f32 0.0, %v469
    %v471 = vpop.f32.mrb[0].mxu0
    %v472 = vpop.f32.mrb[0].mxu0
    %v473 = vadd.f32 0.0, %v472
    %v474 = vpop.f32.mrb[0].mxu0
    %475 = vmatprep.mubr.bf16.mxu0 0
    %476 = vmatmul.mubr.bf16.gmra.mrb[0].mxu0 %v144
    %v477 = vpop.f32.mrb[0].mxu0
    %v478 = vadd.f32 0.0, %v477
    %v479 = vpop.f32.mrb[0].mxu0
    %v480 = vpop.f32.mrb[0].mxu0
    %v481 = vadd.f32 0.0, %v480
    %v482 = vpop.f32.mrb[0].mxu0
    %483 = vmatprep.mubr.bf16.mxu0 0
    %484 = vmatmul.mubr.bf16.gmra.mrb[0].mxu0 %v145
    %v485 = vpop.f32.mrb[0].mxu0
    %v486 = vadd.f32 0.0, %v485
    %v487 = vpop.f32.mrb[0].mxu0
    %v488 = vpop.f32.mrb[0].mxu0
    %v489 = vadd.f32 0.0, %v488
    %v490 = vpop.f32.mrb[0].mxu0
    %491 = vmatprep.mubr.bf16.mxu0 0
    %492 = vmatmul.mubr.bf16.gmra.mrb[0].mxu0 %v146
    %v493 = vpop.f32.mrb[0].mxu0
    %v494 = vadd.f32 0.0, %v493
    %v495 = vpop.f32.mrb[0].mxu0
    %v496 = vpop.f32.mrb[0].mxu0
    %v497 = vadd.f32 0.0, %v496
    %v498 = vpop.f32.mrb[0].mxu0
    %499 = vdwg.mxu0
    %v500 = vld [vmem:[%s2] sm:$0x1]
    %v501 = vld [vmem:[%s3] sm:$0x1]
    %vm502 = vcmask 261120
    %v503 = vsel %vm502, %v246, 0.0
    %v504 = vsel %vm502, %v249, 0.0
    %v505 = vadd.f32 %v503, %v504
    %v506 = vsel %vm502, %v254, 0.0
    %v507 = vadd.f32 %v505, %v506
    %v508 = vsel %vm502, %v257, 0.0
    %v509 = vadd.f32 %v507, %v508
    %v510 = vsel %vm502, %v262, 0.0
    %v511 = vadd.f32 %v509, %v510
    %v512 = vsel %vm502, %v265, 0.0
    %v513 = vadd.f32 %v511, %v512
    %v514 = vsel %vm502, %v270, 0.0
    %v515 = vadd.f32 %v513, %v514
    %v516 = vsel %vm502, %v273, 0.0
    %v517 = vadd.f32 %v515, %v516
    %v518 = vsel %vm502, %v278, 0.0
    %v519 = vadd.f32 %v517, %v518
    %v520 = vsel %vm502, %v281, 0.0
    %v521 = vadd.f32 %v519, %v520
    %v522 = vsel %vm502, %v286, 0.0
    %v523 = vadd.f32 %v521, %v522
    %v524 = vsel %vm502, %v289, 0.0
    %v525 = vadd.f32 %v523, %v524
    %v526 = vsel %vm502, %v294, 0.0
    %v527 = vadd.f32 %v525, %v526
    %v528 = vsel %vm502, %v297, 0.0
    %v529 = vadd.f32 %v527, %v528
    %v530 = vsel %vm502, %v302, 0.0
    %v531 = vadd.f32 %v529, %v530
    %v532 = vsel %vm502, %v305, 0.0
    %v533 = vadd.f32 %v531, %v532
    %v534 = vsel %vm502, %v310, 0.0
    %v535 = vadd.f32 %v533, %v534
    %v536 = vsel %vm502, %v313, 0.0
    %v537 = vadd.f32 %v535, %v536
    %v538 = vsel %vm502, %v318, 0.0
    %v539 = vadd.f32 %v537, %v538
    %v540 = vsel %vm502, %v321, 0.0
    %v541 = vadd.f32 %v539, %v540
    %v542 = vsel %vm502, %v326, 0.0
    %v543 = vadd.f32 %v541, %v542
    %v544 = vsel %vm502, %v329, 0.0
    %v545 = vadd.f32 %v543, %v544
    %v546 = vsel %vm502, %v334, 0.0
    %v547 = vadd.f32 %v545, %v546
    %v548 = vsel %vm502, %v337, 0.0
    %v549 = vadd.f32 %v547, %v548
    %v550 = vsel %vm502, %v342, 0.0
    %v551 = vadd.f32 %v549, %v550
    %v552 = vsel %vm502, %v345, 0.0
    %v553 = vadd.f32 %v551, %v552
    %v554 = vsel %vm502, %v350, 0.0
    %v555 = vadd.f32 %v553, %v554
    %v556 = vsel %vm502, %v353, 0.0
    %v557 = vadd.f32 %v555, %v556
    %v558 = vsel %vm502, %v358, 0.0
    %v559 = vadd.f32 %v557, %v558
    %v560 = vsel %vm502, %v361, 0.0
    %v561 = vadd.f32 %v559, %v560
    %v562 = vsel %vm502, %v366, 0.0
    %v563 = vadd.f32 %v561, %v562
    %v564 = vsel %vm502, %v369, 0.0
    %v565 = vadd.f32 %v563, %v564
    %v566 = vsel %vm502, %v374, 0.0
    %v567 = vadd.f32 %v565, %v566
    %v568 = vsel %vm502, %v377, 0.0
    %v569 = vadd.f32 %v567, %v568
    %v570 = vsel %vm502, %v382, 0.0
    %v571 = vadd.f32 %v569, %v570
    %v572 = vsel %vm502, %v385, 0.0
    %v573 = vadd.f32 %v571, %v572
    %v574 = vsel %vm502, %v390, 0.0
    %v575 = vadd.f32 %v573, %v574
    %v576 = vsel %vm502, %v393, 0.0
    %v577 = vadd.f32 %v575, %v576
    %v578 = vsel %vm502, %v398, 0.0
    %v579 = vadd.f32 %v577, %v578
    %v580 = vsel %vm502, %v401, 0.0
    %v581 = vadd.f32 %v579, %v580
    %v582 = vsel %vm502, %v406, 0.0
    %v583 = vadd.f32 %v581, %v582
    %v584 = vsel %vm502, %v409, 0.0
    %v585 = vadd.f32 %v583, %v584
    %v586 = vsel %vm502, %v414, 0.0
    %v587 = vadd.f32 %v585, %v586
    %v588 = vsel %vm502, %v417, 0.0
    %v589 = vadd.f32 %v587, %v588
    %v590 = vsel %vm502, %v422, 0.0
    %v591 = vadd.f32 %v589, %v590
    %v592 = vsel %vm502, %v425, 0.0
    %v593 = vadd.f32 %v591, %v592
    %v594 = vsel %vm502, %v430, 0.0
    %v595 = vadd.f32 %v593, %v594
    %v596 = vsel %vm502, %v433, 0.0
    %v597 = vadd.f32 %v595, %v596
    %v598 = vsel %vm502, %v438, 0.0
    %v599 = vadd.f32 %v597, %v598
    %v600 = vsel %vm502, %v441, 0.0
    %v601 = vadd.f32 %v599, %v600
    %v602 = vsel %vm502, %v446, 0.0
    %v603 = vadd.f32 %v601, %v602
    %v604 = vsel %vm502, %v449, 0.0
    %v605 = vadd.f32 %v603, %v604
    %v606 = vsel %vm502, %v454, 0.0
    %v607 = vadd.f32 %v605, %v606
    %v608 = vsel %vm502, %v457, 0.0
    %v609 = vadd.f32 %v607, %v608
    %v610 = vsel %vm502, %v462, 0.0
    %v611 = vadd.f32 %v609, %v610
    %v612 = vsel %vm502, %v465, 0.0
    %v613 = vadd.f32 %v611, %v612
    %v614 = vsel %vm502, %v470, 0.0
    %v615 = vadd.f32 %v613, %v614
    %v616 = vsel %vm502, %v473, 0.0
    %v617 = vadd.f32 %v615, %v616
    %v618 = vsel %vm502, %v478, 0.0
    %v619 = vadd.f32 %v617, %v618
    %v620 = vsel %vm502, %v481, 0.0
    %v621 = vadd.f32 %v619, %v620
    %v622 = vsel %vm502, %v486, 0.0
    %v623 = vadd.f32 %v621, %v622
    %v624 = vsel %vm502, %v489, 0.0
    %v625 = vadd.f32 %v623, %v624
    %v626 = vsel %vm502, %v494, 0.0
    %v627 = vadd.f32 %v625, %v626
    %v628 = vsel %vm502, %v497, 0.0
    %v629 = vadd.f32 %v627, %v628
    %v630 = vrot.slane %v629, 4
    %v631 = vadd.f32 %v629, %v630
    %v632 = vrot.slane %v631, 2
    %v633 = vadd.f32 %v631, %v632
    %v634 = vrot.slane %v633, 1
    %v635 = vadd.f32 %v633, %v634
    %v636 = vmul.f32 %v635, 0.001953125
    %v637 = vmul.f32 %v246, %v246
    %v638 = vmul.f32 %v249, %v249
    %v639 = vmul.f32 %v254, %v254
    %v640 = vmul.f32 %v257, %v257
    %v641 = vmul.f32 %v262, %v262
    %v642 = vmul.f32 %v265, %v265
    %v643 = vmul.f32 %v270, %v270
    %v644 = vmul.f32 %v273, %v273
    %v645 = vmul.f32 %v278, %v278
    %v646 = vmul.f32 %v281, %v281
    %v647 = vmul.f32 %v286, %v286
    %v648 = vmul.f32 %v289, %v289
    %v649 = vmul.f32 %v294, %v294
    %v650 = vmul.f32 %v297, %v297
    %v651 = vmul.f32 %v302, %v302
    %v652 = vmul.f32 %v305, %v305
    %v653 = vmul.f32 %v310, %v310
    %v654 = vmul.f32 %v313, %v313
    %v655 = vmul.f32 %v318, %v318
    %v656 = vmul.f32 %v321, %v321
    %v657 = vmul.f32 %v326, %v326
    %v658 = vmul.f32 %v329, %v329
    %v659 = vmul.f32 %v334, %v334
    %v660 = vmul.f32 %v337, %v337
    %v661 = vmul.f32 %v342, %v342
    %v662 = vmul.f32 %v345, %v345
    %v663 = vmul.f32 %v350, %v350
    %v664 = vmul.f32 %v353, %v353
    %v665 = vmul.f32 %v358, %v358
    %v666 = vmul.f32 %v361, %v361
    %v667 = vmul.f32 %v366, %v366
    %v668 = vmul.f32 %v369, %v369
    %v669 = vmul.f32 %v374, %v374
    %v670 = vmul.f32 %v377, %v377
    %v671 = vmul.f32 %v382, %v382
    %v672 = vmul.f32 %v385, %v385
    %v673 = vmul.f32 %v390, %v390
    %v674 = vmul.f32 %v393, %v393
    %v675 = vmul.f32 %v398, %v398
    %v676 = vmul.f32 %v401, %v401
    %v677 = vmul.f32 %v406, %v406
    %v678 = vmul.f32 %v409, %v409
    %v679 = vmul.f32 %v414, %v414
    %v680 = vmul.f32 %v417, %v417
    %v681 = vmul.f32 %v422, %v422
    %v682 = vmul.f32 %v425, %v425
    %v683 = vmul.f32 %v430, %v430
    %v684 = vmul.f32 %v433, %v433
    %v685 = vmul.f32 %v438, %v438
    %v686 = vmul.f32 %v441, %v441
    %v687 = vmul.f32 %v446, %v446
    %v688 = vmul.f32 %v449, %v449
    %v689 = vmul.f32 %v454, %v454
    %v690 = vmul.f32 %v457, %v457
    %v691 = vmul.f32 %v462, %v462
    %v692 = vmul.f32 %v465, %v465
    %v693 = vmul.f32 %v470, %v470
    %v694 = vmul.f32 %v473, %v473
    %v695 = vmul.f32 %v478, %v478
    %v696 = vmul.f32 %v481, %v481
    %v697 = vmul.f32 %v486, %v486
    %v698 = vmul.f32 %v489, %v489
    %v699 = vmul.f32 %v494, %v494
    %v700 = vmul.f32 %v497, %v497
    %v701 = vsel %vm502, %v637, 0.0
    %v702 = vsel %vm502, %v638, 0.0
    %v703 = vadd.f32 %v701, %v702
    %v704 = vsel %vm502, %v639, 0.0
    %v705 = vadd.f32 %v703, %v704
    %v706 = vsel %vm502, %v640, 0.0
    %v707 = vadd.f32 %v705, %v706
    %v708 = vsel %vm502, %v641, 0.0
    %v709 = vadd.f32 %v707, %v708
    %v710 = vsel %vm502, %v642, 0.0
    %v711 = vadd.f32 %v709, %v710
    %v712 = vsel %vm502, %v643, 0.0
    %v713 = vadd.f32 %v711, %v712
    %v714 = vsel %vm502, %v644, 0.0
    %v715 = vadd.f32 %v713, %v714
    %v716 = vsel %vm502, %v645, 0.0
    %v717 = vadd.f32 %v715, %v716
    %v718 = vsel %vm502, %v646, 0.0
    %v719 = vadd.f32 %v717, %v718
    %v720 = vsel %vm502, %v647, 0.0
    %v721 = vadd.f32 %v719, %v720
    %v722 = vsel %vm502, %v648, 0.0
    %v723 = vadd.f32 %v721, %v722
    %v724 = vsel %vm502, %v649, 0.0
    %v725 = vadd.f32 %v723, %v724
    %v726 = vsel %vm502, %v650, 0.0
    %v727 = vadd.f32 %v725, %v726
    %v728 = vsel %vm502, %v651, 0.0
    %v729 = vadd.f32 %v727, %v728
    %v730 = vsel %vm502, %v652, 0.0
    %v731 = vadd.f32 %v729, %v730
    %v732 = vsel %vm502, %v653, 0.0
    %v733 = vadd.f32 %v731, %v732
    %v734 = vsel %vm502, %v654, 0.0
    %v735 = vadd.f32 %v733, %v734
    %v736 = vsel %vm502, %v655, 0.0
    %v737 = vadd.f32 %v735, %v736
    %v738 = vsel %vm502, %v656, 0.0
    %v739 = vadd.f32 %v737, %v738
    %v740 = vsel %vm502, %v657, 0.0
    %v741 = vadd.f32 %v739, %v740
    %v742 = vsel %vm502, %v658, 0.0
    %v743 = vadd.f32 %v741, %v742
    %v744 = vsel %vm502, %v659, 0.0
    %v745 = vadd.f32 %v743, %v744
    %v746 = vsel %vm502, %v660, 0.0
    %v747 = vadd.f32 %v745, %v746
    %v748 = vsel %vm502, %v661, 0.0
    %v749 = vadd.f32 %v747, %v748
    %v750 = vsel %vm502, %v662, 0.0
    %v751 = vadd.f32 %v749, %v750
    %v752 = vsel %vm502, %v663, 0.0
    %v753 = vadd.f32 %v751, %v752
    %v754 = vsel %vm502, %v664, 0.0
    %v755 = vadd.f32 %v753, %v754
    %v756 = vsel %vm502, %v665, 0.0
    %v757 = vadd.f32 %v755, %v756
    %v758 = vsel %vm502, %v666, 0.0
    %v759 = vadd.f32 %v757, %v758
    %v760 = vsel %vm502, %v667, 0.0
    %v761 = vadd.f32 %v759, %v760
    %v762 = vsel %vm502, %v668, 0.0
    %v763 = vadd.f32 %v761, %v762
    %v764 = vsel %vm502, %v669, 0.0
    %v765 = vadd.f32 %v763, %v764
    %v766 = vsel %vm502, %v670, 0.0
    %v767 = vadd.f32 %v765, %v766
    %v768 = vsel %vm502, %v671, 0.0
    %v769 = vadd.f32 %v767, %v768
    %v770 = vsel %vm502, %v672, 0.0
    %v771 = vadd.f32 %v769, %v770
    %v772 = vsel %vm502, %v673, 0.0
    %v773 = vadd.f32 %v771, %v772
    %v774 = vsel %vm502, %v674, 0.0
    %v775 = vadd.f32 %v773, %v774
    %v776 = vsel %vm502, %v675, 0.0
    %v777 = vadd.f32 %v775, %v776
    %v778 = vsel %vm502, %v676, 0.0
    %v779 = vadd.f32 %v777, %v778
    %v780 = vsel %vm502, %v677, 0.0
    %v781 = vadd.f32 %v779, %v780
    %v782 = vsel %vm502, %v678, 0.0
    %v783 = vadd.f32 %v781, %v782
    %v784 = vsel %vm502, %v679, 0.0
    %v785 = vadd.f32 %v783, %v784
    %v786 = vsel %vm502, %v680, 0.0
    %v787 = vadd.f32 %v785, %v786
    %v788 = vsel %vm502, %v681, 0.0
    %v789 = vadd.f32 %v787, %v788
    %v790 = vsel %vm502, %v682, 0.0
    %v791 = vadd.f32 %v789, %v790
    %v792 = vsel %vm502, %v683, 0.0
    %v793 = vadd.f32 %v791, %v792
    %v794 = vsel %vm502, %v684, 0.0
    %v795 = vadd.f32 %v793, %v794
    %v796 = vsel %vm502, %v685, 0.0
    %v797 = vadd.f32 %v795, %v796
    %v798 = vsel %vm502, %v686, 0.0
    %v799 = vadd.f32 %v797, %v798
    %v800 = vsel %vm502, %v687, 0.0
    %v801 = vadd.f32 %v799, %v800
    %v802 = vsel %vm502, %v688, 0.0
    %v803 = vadd.f32 %v801, %v802
    %v804 = vsel %vm502, %v689, 0.0
    %v805 = vadd.f32 %v803, %v804
    %v806 = vsel %vm502, %v690, 0.0
    %v807 = vadd.f32 %v805, %v806
    %v808 = vsel %vm502, %v691, 0.0
    %v809 = vadd.f32 %v807, %v808
    %v810 = vsel %vm502, %v692, 0.0
    %v811 = vadd.f32 %v809, %v810
    %v812 = vsel %vm502, %v693, 0.0
    %v813 = vadd.f32 %v811, %v812
    %v814 = vsel %vm502, %v694, 0.0
    %v815 = vadd.f32 %v813, %v814
    %v816 = vsel %vm502, %v695, 0.0
    %v817 = vadd.f32 %v815, %v816
    %v818 = vsel %vm502, %v696, 0.0
    %v819 = vadd.f32 %v817, %v818
    %v820 = vsel %vm502, %v697, 0.0
    %v821 = vadd.f32 %v819, %v820
    %v822 = vsel %vm502, %v698, 0.0
    %v823 = vadd.f32 %v821, %v822
    %v824 = vsel %vm502, %v699, 0.0
    %v825 = vadd.f32 %v823, %v824
    %v826 = vsel %vm502, %v700, 0.0
    %v827 = vadd.f32 %v825, %v826
    %v828 = vrot.slane %v827, 4
    %v829 = vadd.f32 %v827, %v828
    %v830 = vrot.slane %v829, 2
    %v831 = vadd.f32 %v829, %v830
    %v832 = vrot.slane %v831, 1
    %v833 = vadd.f32 %v831, %v832
    %v834 = vmul.f32 %v833, 0.001953125
    %v835 = vmul.f32 %v636, %v636
    %v836 = vsub.f32 %v834, %v835
    %v837 = vadd.f32 %v836, 1e-05
    %v838 = vrsqrt.pop %v837
    %v839 = vmul.f32 %v500, %v838
    %v840 = vmul.f32 %v636, %v839
    %v841 = vsub.f32 %v501, %v840
    %v843 = vlaneseq
    %v844 = vshrl.u32 %v843, 7
    %v845 = vsub.s32 0, %v844
    %v846 = vrot.slane %v839, %v845
    %v848 = vmul.f32 %v246, %v846
    %v849 = vmul.f32 %v249, %v846
    %v850 = vmul.f32 %v254, %v846
    %v851 = vmul.f32 %v257, %v846
    %v852 = vmul.f32 %v262, %v846
    %v853 = vmul.f32 %v265, %v846
    %v854 = vmul.f32 %v270, %v846
    %v855 = vmul.f32 %v273, %v846
    %v856 = vmul.f32 %v278, %v846
    %v857 = vmul.f32 %v281, %v846
    %v858 = vmul.f32 %v286, %v846
    %v859 = vmul.f32 %v289, %v846
    %v860 = vmul.f32 %v294, %v846
    %v861 = vmul.f32 %v297, %v846
    %v862 = vmul.f32 %v302, %v846
    %v863 = vmul.f32 %v305, %v846
    %v864 = vmul.f32 %v310, %v846
    %v865 = vmul.f32 %v313, %v846
    %v866 = vmul.f32 %v318, %v846
    %v867 = vmul.f32 %v321, %v846
    %v868 = vmul.f32 %v326, %v846
    %v869 = vmul.f32 %v329, %v846
    %v870 = vmul.f32 %v334, %v846
    %v871 = vmul.f32 %v337, %v846
    %v872 = vmul.f32 %v342, %v846
    %v873 = vmul.f32 %v345, %v846
    %v874 = vmul.f32 %v350, %v846
    %v875 = vmul.f32 %v353, %v846
    %v876 = vmul.f32 %v358, %v846
    %v877 = vmul.f32 %v361, %v846
    %v878 = vmul.f32 %v366, %v846
    %v879 = vmul.f32 %v369, %v846
    %v880 = vmul.f32 %v374, %v846
    %v881 = vmul.f32 %v377, %v846
    %v882 = vmul.f32 %v382, %v846
    %v883 = vmul.f32 %v385, %v846
    %v884 = vmul.f32 %v390, %v846
    %v885 = vmul.f32 %v393, %v846
    %v886 = vmul.f32 %v398, %v846
    %v887 = vmul.f32 %v401, %v846
    %v888 = vmul.f32 %v406, %v846
    %v889 = vmul.f32 %v409, %v846
    %v890 = vmul.f32 %v414, %v846
    %v891 = vmul.f32 %v417, %v846
    %v892 = vmul.f32 %v422, %v846
    %v893 = vmul.f32 %v425, %v846
    %v894 = vmul.f32 %v430, %v846
    %v895 = vmul.f32 %v433, %v846
    %v896 = vmul.f32 %v438, %v846
    %v897 = vmul.f32 %v441, %v846
    %v898 = vmul.f32 %v446, %v846
    %v899 = vmul.f32 %v449, %v846
    %v900 = vmul.f32 %v454, %v846
    %v901 = vmul.f32 %v457, %v846
    %v902 = vmul.f32 %v462, %v846
    %v903 = vmul.f32 %v465, %v846
    %v904 = vmul.f32 %v470, %v846
    %v905 = vmul.f32 %v473, %v846
    %v906 = vmul.f32 %v478, %v846
    %v907 = vmul.f32 %v481, %v846
    %v908 = vmul.f32 %v486, %v846
    %v909 = vmul.f32 %v489, %v846
    %v910 = vmul.f32 %v494, %v846
    %v911 = vmul.f32 %v497, %v846
    %v913 = vlaneseq
    %v914 = vshrl.u32 %v913, 7
    %v915 = vsub.s32 0, %v914
    %v916 = vrot.slane %v841, %v915
    %v918 = vadd.f32 %v848, %v916
    %v919 = vadd.f32 %v849, %v916
    %v920 = vadd.f32 %v850, %v916
    %v921 = vadd.f32 %v851, %v916
    %v922 = vadd.f32 %v852, %v916
    %v923 = vadd.f32 %v853, %v916
    %v924 = vadd.f32 %v854, %v916
    %v925 = vadd.f32 %v855, %v916
    %v926 = vadd.f32 %v856, %v916
    %v927 = vadd.f32 %v857, %v916
    %v928 = vadd.f32 %v858, %v916
    %v929 = vadd.f32 %v859, %v916
    %v930 = vadd.f32 %v860, %v916
    %v931 = vadd.f32 %v861, %v916
    %v932 = vadd.f32 %v862, %v916
    %v933 = vadd.f32 %v863, %v916
    %v934 = vadd.f32 %v864, %v916
    %v935 = vadd.f32 %v865, %v916
    %v936 = vadd.f32 %v866, %v916
    %v937 = vadd.f32 %v867, %v916
    %v938 = vadd.f32 %v868, %v916
    %v939 = vadd.f32 %v869, %v916
    %v940 = vadd.f32 %v870, %v916
    %v941 = vadd.f32 %v871, %v916
    %v942 = vadd.f32 %v872, %v916
    %v943 = vadd.f32 %v873, %v916
    %v944 = vadd.f32 %v874, %v916
    %v945 = vadd.f32 %v875, %v916
    %v946 = vadd.f32 %v876, %v916
    %v947 = vadd.f32 %v877, %v916
    %v948 = vadd.f32 %v878, %v916
    %v949 = vadd.f32 %v879, %v916
    %v950 = vadd.f32 %v880, %v916
    %v951 = vadd.f32 %v881, %v916
    %v952 = vadd.f32 %v882, %v916
    %v953 = vadd.f32 %v883, %v916
    %v954 = vadd.f32 %v884, %v916
    %v955 = vadd.f32 %v885, %v916
    %v956 = vadd.f32 %v886, %v916
    %v957 = vadd.f32 %v887, %v916
    %v958 = vadd.f32 %v888, %v916
    %v959 = vadd.f32 %v889, %v916
    %v960 = vadd.f32 %v890, %v916
    %v961 = vadd.f32 %v891, %v916
    %v962 = vadd.f32 %v892, %v916
    %v963 = vadd.f32 %v893, %v916
    %v964 = vadd.f32 %v894, %v916
    %v965 = vadd.f32 %v895, %v916
    %v966 = vadd.f32 %v896, %v916
    %v967 = vadd.f32 %v897, %v916
    %v968 = vadd.f32 %v898, %v916
    %v969 = vadd.f32 %v899, %v916
    %v970 = vadd.f32 %v900, %v916
    %v971 = vadd.f32 %v901, %v916
    %v972 = vadd.f32 %v902, %v916
    %v973 = vadd.f32 %v903, %v916
    %v974 = vadd.f32 %v904, %v916
    %v975 = vadd.f32 %v905, %v916
    %v976 = vadd.f32 %v906, %v916
    %v977 = vadd.f32 %v907, %v916
    %v978 = vadd.f32 %v908, %v916
    %v979 = vadd.f32 %v909, %v916
    %v980 = vadd.f32 %v910, %v916
    %v981 = vadd.f32 %v911, %v916
    %v982 = vmax.f32 %v918, 0.0
    %v983 = vmax.f32 %v919, 0.0
    %v984 = vmax.f32 %v920, 0.0
    %v985 = vmax.f32 %v921, 0.0
    %v986 = vmax.f32 %v922, 0.0
    %v987 = vmax.f32 %v923, 0.0
    %v988 = vmax.f32 %v924, 0.0
    %v989 = vmax.f32 %v925, 0.0
    %v990 = vmax.f32 %v926, 0.0
    %v991 = vmax.f32 %v927, 0.0
    %v992 = vmax.f32 %v928, 0.0
    %v993 = vmax.f32 %v929, 0.0
    %v994 = vmax.f32 %v930, 0.0
    %v995 = vmax.f32 %v931, 0.0
    %v996 = vmax.f32 %v932, 0.0
    %v997 = vmax.f32 %v933, 0.0
    %v998 = vmax.f32 %v934, 0.0
    %v999 = vmax.f32 %v935, 0.0
    %v1000 = vmax.f32 %v936, 0.0
    %v1001 = vmax.f32 %v937, 0.0
    %v1002 = vmax.f32 %v938, 0.0
    %v1003 = vmax.f32 %v939, 0.0
    %v1004 = vmax.f32 %v940, 0.0
    %v1005 = vmax.f32 %v941, 0.0
    %v1006 = vmax.f32 %v942, 0.0
    %v1007 = vmax.f32 %v943, 0.0
    %v1008 = vmax.f32 %v944, 0.0
    %v1009 = vmax.f32 %v945, 0.0
    %v1010 = vmax.f32 %v946, 0.0
    %v1011 = vmax.f32 %v947, 0.0
    %v1012 = vmax.f32 %v948, 0.0
    %v1013 = vmax.f32 %v949, 0.0
    %v1014 = vmax.f32 %v950, 0.0
    %v1015 = vmax.f32 %v951, 0.0
    %v1016 = vmax.f32 %v952, 0.0
    %v1017 = vmax.f32 %v953, 0.0
    %v1018 = vmax.f32 %v954, 0.0
    %v1019 = vmax.f32 %v955, 0.0
    %v1020 = vmax.f32 %v956, 0.0
    %v1021 = vmax.f32 %v957, 0.0
    %v1022 = vmax.f32 %v958, 0.0
    %v1023 = vmax.f32 %v959, 0.0
    %v1024 = vmax.f32 %v960, 0.0
    %v1025 = vmax.f32 %v961, 0.0
    %v1026 = vmax.f32 %v962, 0.0
    %v1027 = vmax.f32 %v963, 0.0
    %v1028 = vmax.f32 %v964, 0.0
    %v1029 = vmax.f32 %v965, 0.0
    %v1030 = vmax.f32 %v966, 0.0
    %v1031 = vmax.f32 %v967, 0.0
    %v1032 = vmax.f32 %v968, 0.0
    %v1033 = vmax.f32 %v969, 0.0
    %v1034 = vmax.f32 %v970, 0.0
    %v1035 = vmax.f32 %v971, 0.0
    %v1036 = vmax.f32 %v972, 0.0
    %v1037 = vmax.f32 %v973, 0.0
    %v1038 = vmax.f32 %v974, 0.0
    %v1039 = vmax.f32 %v975, 0.0
    %v1040 = vmax.f32 %v976, 0.0
    %v1041 = vmax.f32 %v977, 0.0
    %v1042 = vmax.f32 %v978, 0.0
    %v1043 = vmax.f32 %v979, 0.0
    %v1044 = vmax.f32 %v980, 0.0
    %v1045 = vmax.f32 %v981, 0.0
    %1046 = vst.msk [vmem:[#allocation2] sm:$0xff] %vm502, 0.0
    %1047 = vst.msk [vmem:[#allocation2 + $0x8] sm:$0xff] %vm502, 0.0
    %vm1048 = vcmask 254976
    %1049 = vst.msk [vmem:[#allocation2 + $0x10] sm:$0x3] %vm1048, 0.0
    %1050 = vst.msk [vmem:[#allocation2 + $0x18] sm:$0xff] %vm502, 0.0
    %1051 = vst.msk [vmem:[#allocation2 + $0x20] sm:$0xff] %vm502, 0.0
    %1052 = vst.msk [vmem:[#allocation2 + $0x28] sm:$0x3] %vm1048, 0.0
    %1053 = vst.msk [vmem:[#allocation2 + $0x30] sm:$0xff] %vm502, 0.0
    %1054 = vst.msk [vmem:[#allocation2 + $0x38] sm:$0xff] %vm502, 0.0
    %1055 = vst.msk [vmem:[#allocation2 + $0x40] sm:$0x3] %vm1048, 0.0
    %1056 = vst.msk [vmem:[#allocation2 + $0x48] sm:$0xff] %vm502, 0.0
    %1057 = vst.msk [vmem:[#allocation2 + $0x50] sm:$0xff] %vm502, 0.0
    %1058 = vst.msk [vmem:[#allocation2 + $0x58] sm:$0x3] %vm1048, 0.0
    %1059 = vst.msk [vmem:[#allocation2 + $0x60] sm:$0xff] %vm502, 0.0
    %1060 = vst.msk [vmem:[#allocation2 + $0x68] sm:$0xff] %vm502, 0.0
    %1061 = vst.msk [vmem:[#allocation2 + $0x70] sm:$0x3] %vm1048, 0.0
    %1062 = vst.msk [vmem:[#allocation2 + $0x78] sm:$0xff] %vm502, 0.0
    %1063 = vst.msk [vmem:[#allocation2 + $0x80] sm:$0xff] %vm502, 0.0
    %1064 = vst.msk [vmem:[#allocation2 + $0x88] sm:$0x3] %vm1048, 0.0
    %1065 = vst.msk [vmem:[#allocation2 + $0x90] sm:$0xff] %vm502, 0.0
    %1066 = vst.msk [vmem:[#allocation2 + $0x98] sm:$0xff] %vm502, 0.0
    %1067 = vst.msk [vmem:[#allocation2 + $0xa0] sm:$0x3] %vm1048, 0.0
    %1068 = vst.msk [vmem:[#allocation2 + $0xa8] sm:$0xff] %vm502, 0.0
    %1069 = vst.msk [vmem:[#allocation2 + $0xb0] sm:$0xff] %vm502, 0.0
    %1070 = vst.msk [vmem:[#allocation2 + $0xb8] sm:$0x3] %vm1048, 0.0
    %1071 = vst.msk [vmem:[#allocation2 + $0xc0] sm:$0xff] %vm502, 0.0
    %1072 = vst.msk [vmem:[#allocation2 + $0xc8] sm:$0xff] %vm502, 0.0
    %1073 = vst.msk [vmem:[#allocation2 + $0xd0] sm:$0x3] %vm1048, 0.0
    %1074 = vst.msk [vmem:[#allocation2 + $0xd8] sm:$0xff] %vm502, 0.0
    %1075 = vst.msk [vmem:[#allocation2 + $0xe0] sm:$0xff] %vm502, 0.0
    %1076 = vst.msk [vmem:[#allocation2 + $0xe8] sm:$0x3] %vm1048, 0.0
    %1077 = vst.msk [vmem:[#allocation2 + $0xf0] sm:$0xff] %vm502, 0.0
    %1078 = vst.msk [vmem:[#allocation2 + $0xf8] sm:$0xff] %vm502, 0.0
    %1079 = vst.msk [vmem:[#allocation2 + $0x100] sm:$0x3] %vm1048, 0.0
    %1080 = vst.msk [vmem:[#allocation2 + $0x108] sm:$0xff] %vm502, 0.0
    %1081 = vst.msk [vmem:[#allocation2 + $0x110] sm:$0xff] %vm502, 0.0
    %1082 = vst.msk [vmem:[#allocation2 + $0x118] sm:$0x3] %vm1048, 0.0
    %1083 = vst.msk [vmem:[#allocation2 + $0x120] sm:$0xff] %vm502, 0.0
    %1084 = vst.msk [vmem:[#allocation2 + $0x128] sm:$0xff] %vm502, 0.0
    %1085 = vst.msk [vmem:[#allocation2 + $0x130] sm:$0x3] %vm1048, 0.0
    %1086 = vst.msk [vmem:[#allocation2 + $0x138] sm:$0xff] %vm502, 0.0
    %1087 = vst.msk [vmem:[#allocation2 + $0x140] sm:$0xff] %vm502, 0.0
    %1088 = vst.msk [vmem:[#allocation2 + $0x148] sm:$0x3] %vm1048, 0.0
    %1089 = vst.msk [vmem:[#allocation2 + $0x150] sm:$0xff] %vm502, 0.0
    %1090 = vst.msk [vmem:[#allocation2 + $0x158] sm:$0xff] %vm502, 0.0
    %1091 = vst.msk [vmem:[#allocation2 + $0x160] sm:$0x3] %vm1048, 0.0
    %1092 = vst.msk [vmem:[#allocation2 + $0x168] sm:$0xff] %vm502, 0.0
    %1093 = vst.msk [vmem:[#allocation2 + $0x170] sm:$0xff] %vm502, 0.0
    %1094 = vst.msk [vmem:[#allocation2 + $0x178] sm:$0x3] %vm1048, 0.0
    %1095 = vst.msk [vmem:[#allocation2 + $0x180] sm:$0xff] %vm502, 0.0
    %1096 = vst.msk [vmem:[#allocation2 + $0x188] sm:$0xff] %vm502, 0.0
    %1097 = vst.msk [vmem:[#allocation2 + $0x190] sm:$0x3] %vm1048, 0.0
    %1098 = vst.msk [vmem:[#allocation2 + $0x198] sm:$0xff] %vm502, 0.0
    %1099 = vst.msk [vmem:[#allocation2 + $0x1a0] sm:$0xff] %vm502, 0.0
    %1100 = vst.msk [vmem:[#allocation2 + $0x1a8] sm:$0x3] %vm1048, 0.0
    %1101 = vst.msk [vmem:[#allocation2 + $0x1b0] sm:$0xff] %vm502, 0.0
    %1102 = vst.msk [vmem:[#allocation2 + $0x1b8] sm:$0xff] %vm502, 0.0
    %1103 = vst.msk [vmem:[#allocation2 + $0x1c0] sm:$0x3] %vm1048, 0.0
    %1104 = vst.msk [vmem:[#allocation2 + $0x1c8] sm:$0xff] %vm502, 0.0
    %1105 = vst.msk [vmem:[#allocation2 + $0x1d0] sm:$0xff] %vm502, 0.0
    %1106 = vst.msk [vmem:[#allocation2 + $0x1d8] sm:$0x3] %vm1048, 0.0
    %1107 = vst.msk [vmem:[#allocation2 + $0x1e0] sm:$0xff] %vm502, 0.0
    %1108 = vst.msk [vmem:[#allocation2 + $0x1e8] sm:$0xff] %vm502, 0.0
    %1109 = vst.msk [vmem:[#allocation2 + $0x1f0] sm:$0x3] %vm1048, 0.0
    %1110 = vst.msk [vmem:[#allocation2 + $0x1f8] sm:$0xff] %vm502, 0.0
    %1111 = vst.msk [vmem:[#allocation2 + $0x200] sm:$0xff] %vm502, 0.0
    %1112 = vst.msk [vmem:[#allocation2 + $0x208] sm:$0x3] %vm1048, 0.0
    %1113 = vst.msk [vmem:[#allocation2 + $0x210] sm:$0xff] %vm502, 0.0
    %1114 = vst.msk [vmem:[#allocation2 + $0x218] sm:$0xff] %vm502, 0.0
    %1115 = vst.msk [vmem:[#allocation2 + $0x220] sm:$0x3] %vm1048, 0.0
    %1116 = vst.msk [vmem:[#allocation2 + $0x228] sm:$0xff] %vm502, 0.0
    %1117 = vst.msk [vmem:[#allocation2 + $0x230] sm:$0xff] %vm502, 0.0
    %1118 = vst.msk [vmem:[#allocation2 + $0x238] sm:$0x3] %vm1048, 0.0
    %1119 = vst.msk [vmem:[#allocation2 + $0x240] sm:$0xff] %vm502, 0.0
    %1120 = vst.msk [vmem:[#allocation2 + $0x248] sm:$0xff] %vm502, 0.0
    %1121 = vst.msk [vmem:[#allocation2 + $0x250] sm:$0x3] %vm1048, 0.0
    %1122 = vst.msk [vmem:[#allocation2 + $0x258] sm:$0xff] %vm502, 0.0
    %1123 = vst.msk [vmem:[#allocation2 + $0x260] sm:$0xff] %vm502, 0.0
    %1124 = vst.msk [vmem:[#allocation2 + $0x268] sm:$0x3] %vm1048, 0.0
    %1125 = vst.msk [vmem:[#allocation2 + $0x270] sm:$0xff] %vm502, 0.0
    %1126 = vst.msk [vmem:[#allocation2 + $0x278] sm:$0xff] %vm502, 0.0
    %1127 = vst.msk [vmem:[#allocation2 + $0x280] sm:$0x3] %vm1048, 0.0
    %1128 = vst.msk [vmem:[#allocation2 + $0x288] sm:$0xff] %vm502, 0.0
    %1129 = vst.msk [vmem:[#allocation2 + $0x290] sm:$0xff] %vm502, 0.0
    %1130 = vst.msk [vmem:[#allocation2 + $0x298] sm:$0x3] %vm1048, 0.0
    %1131 = vst.msk [vmem:[#allocation2 + $0x2a0] sm:$0xff] %vm502, 0.0
    %1132 = vst.msk [vmem:[#allocation2 + $0x2a8] sm:$0xff] %vm502, 0.0
    %1133 = vst.msk [vmem:[#allocation2 + $0x2b0] sm:$0x3] %vm1048, 0.0
    %1134 = vst.msk [vmem:[#allocation2 + $0x2b8] sm:$0xff] %vm502, 0.0
    %1135 = vst.msk [vmem:[#allocation2 + $0x2c0] sm:$0xff] %vm502, 0.0
    %1136 = vst.msk [vmem:[#allocation2 + $0x2c8] sm:$0x3] %vm1048, 0.0
    %1137 = vst.msk [vmem:[#allocation2 + $0x2d0] sm:$0xff] %vm502, 0.0
    %1138 = vst.msk [vmem:[#allocation2 + $0x2d8] sm:$0xff] %vm502, 0.0
    %1139 = vst.msk [vmem:[#allocation2 + $0x2e0] sm:$0x3] %vm1048, 0.0
    %1140 = vst.msk [vmem:[#allocation2 + $0x2e8] sm:$0xff] %vm502, 0.0
    %1141 = vst.msk [vmem:[#allocation2 + $0x2f0] sm:$0xff] %vm502, 0.0
    %1142 = vst.msk [vmem:[#allocation2 + $0x2f8] sm:$0x3] %vm1048, 0.0
    %1143 = vst.msk [vmem:[#allocation2 + $0x300] sm:$0xff] %vm502, 0.0
    %1144 = vst.msk [vmem:[#allocation2 + $0x308] sm:$0xff] %vm502, 0.0
    %1145 = vst.msk [vmem:[#allocation2 + $0x310] sm:$0x3] %vm1048, 0.0
    %1146 = vst.msk [vmem:[#allocation2 + $0x318] sm:$0xff] %vm502, 0.0
    %1147 = vst.msk [vmem:[#allocation2 + $0x320] sm:$0xff] %vm502, 0.0
    %1148 = vst.msk [vmem:[#allocation2 + $0x328] sm:$0x3] %vm1048, 0.0
    %1149 = vst.msk [vmem:[#allocation2 + $0x330] sm:$0xff] %vm502, 0.0
    %1150 = vst.msk [vmem:[#allocation2 + $0x338] sm:$0xff] %vm502, 0.0
    %1151 = vst.msk [vmem:[#allocation2 + $0x340] sm:$0x3] %vm1048, 0.0
    %1152 = vst.msk [vmem:[#allocation2 + $0x348] sm:$0xff] %vm502, 0.0
    %1153 = vst.msk [vmem:[#allocation2 + $0x350] sm:$0xff] %vm502, 0.0
    %1154 = vst.msk [vmem:[#allocation2 + $0x358] sm:$0x3] %vm1048, 0.0
    %s1155 = scalar_lea.vmem [#allocation2], 24
    %1156 = vst.msk [vmem:[%s1155 + $0x1] sm:$0xff] %vm502, %v982
    %1157 = vst.msk [vmem:[%s1155 + $0x9] sm:$0xff] %vm502, %v983
    %1158 = vst.msk [vmem:[%s1155 + $0x19] sm:$0xff] %vm502, %v984
    %1159 = vst.msk [vmem:[%s1155 + $0x21] sm:$0xff] %vm502, %v985
    %1160 = vst.msk [vmem:[%s1155 + $0x31] sm:$0xff] %vm502, %v986
    %1161 = vst.msk [vmem:[%s1155 + $0x39] sm:$0xff] %vm502, %v987
    %1162 = vst.msk [vmem:[%s1155 + $0x49] sm:$0xff] %vm502, %v988
    %1163 = vst.msk [vmem:[%s1155 + $0x51] sm:$0xff] %vm502, %v989
    %1164 = vst.msk [vmem:[%s1155 + $0x61] sm:$0xff] %vm502, %v990
    %1165 = vst.msk [vmem:[%s1155 + $0x69] sm:$0xff] %vm502, %v991
    %1166 = vst.msk [vmem:[%s1155 + $0x79] sm:$0xff] %vm502, %v992
    %1167 = vst.msk [vmem:[%s1155 + $0x81] sm:$0xff] %vm502, %v993
    %1168 = vst.msk [vmem:[%s1155 + $0x91] sm:$0xff] %vm502, %v994
    %1169 = vst.msk [vmem:[%s1155 + $0x99] sm:$0xff] %vm502, %v995
    %1170 = vst.msk [vmem:[%s1155 + $0xa9] sm:$0xff] %vm502, %v996
    %1171 = vst.msk [vmem:[%s1155 + $0xb1] sm:$0xff] %vm502, %v997
    %1172 = vst.msk [vmem:[%s1155 + $0xc1] sm:$0xff] %vm502, %v998
    %1173 = vst.msk [vmem:[%s1155 + $0xc9] sm:$0xff] %vm502, %v999
    %1174 = vst.msk [vmem:[%s1155 + $0xd9] sm:$0xff] %vm502, %v1000
    %1175 = vst.msk [vmem:[%s1155 + $0xe1] sm:$0xff] %vm502, %v1001
    %1176 = vst.msk [vmem:[%s1155 + $0xf1] sm:$0xff] %vm502, %v1002
    %1177 = vst.msk [vmem:[%s1155 + $0xf9] sm:$0xff] %vm502, %v1003
    %1178 = vst.msk [vmem:[%s1155 + $0x109] sm:$0xff] %vm502, %v1004
    %1179 = vst.msk [vmem:[%s1155 + $0x111] sm:$0xff] %vm502, %v1005
    %1180 = vst.msk [vmem:[%s1155 + $0x121] sm:$0xff] %vm502, %v1006
    %1181 = vst.msk [vmem:[%s1155 + $0x129] sm:$0xff] %vm502, %v1007
    %1182 = vst.msk [vmem:[%s1155 + $0x139] sm:$0xff] %vm502, %v1008
    %1183 = vst.msk [vmem:[%s1155 + $0x141] sm:$0xff] %vm502, %v1009
    %1184 = vst.msk [vmem:[%s1155 + $0x151] sm:$0xff] %vm502, %v1010
    %1185 = vst.msk [vmem:[%s1155 + $0x159] sm:$0xff] %vm502, %v1011
    %1186 = vst.msk [vmem:[%s1155 + $0x169] sm:$0xff] %vm502, %v1012
    %1187 = vst.msk [vmem:[%s1155 + $0x171] sm:$0xff] %vm502, %v1013
    %1188 = vst.msk [vmem:[%s1155 + $0x1b1] sm:$0xff] %vm502, %v1014
    %1189 = vst.msk [vmem:[%s1155 + $0x1b9] sm:$0xff] %vm502, %v1015
    %1190 = vst.msk [vmem:[%s1155 + $0x1c9] sm:$0xff] %vm502, %v1016
    %1191 = vst.msk [vmem:[%s1155 + $0x1d1] sm:$0xff] %vm502, %v1017
    %1192 = vst.msk [vmem:[%s1155 + $0x1e1] sm:$0xff] %vm502, %v1018
    %1193 = vst.msk [vmem:[%s1155 + $0x1e9] sm:$0xff] %vm502, %v1019
    %1194 = vst.msk [vmem:[%s1155 + $0x1f9] sm:$0xff] %vm502, %v1020
    %1195 = vst.msk [vmem:[%s1155 + $0x201] sm:$0xff] %vm502, %v1021
    %1196 = vst.msk [vmem:[%s1155 + $0x211] sm:$0xff] %vm502, %v1022
    %1197 = vst.msk [vmem:[%s1155 + $0x219] sm:$0xff] %vm502, %v1023
    %1198 = vst.msk [vmem:[%s1155 + $0x229] sm:$0xff] %vm502, %v1024
    %1199 = vst.msk [vmem:[%s1155 + $0x231] sm:$0xff] %vm502, %v1025
    %1200 = vst.msk [vmem:[%s1155 + $0x241] sm:$0xff] %vm502, %v1026
    %1201 = vst.msk [vmem:[%s1155 + $0x249] sm:$0xff] %vm502, %v1027
    %1202 = vst.msk [vmem:[%s1155 + $0x259] sm:$0xff] %vm502, %v1028
    %1203 = vst.msk [vmem:[%s1155 + $0x261] sm:$0xff] %vm502, %v1029
    %1204 = vst.msk [vmem:[%s1155 + $0x271] sm:$0xff] %vm502, %v1030
    %1205 = vst.msk [vmem:[%s1155 + $0x279] sm:$0xff] %vm502, %v1031
    %1206 = vst.msk [vmem:[%s1155 + $0x289] sm:$0xff] %vm502, %v1032
    %1207 = vst.msk [vmem:[%s1155 + $0x291] sm:$0xff] %vm502, %v1033
    %1208 = vst.msk [vmem:[%s1155 + $0x2a1] sm:$0xff] %vm502, %v1034
    %1209 = vst.msk [vmem:[%s1155 + $0x2a9] sm:$0xff] %vm502, %v1035
    %1210 = vst.msk [vmem:[%s1155 + $0x2b9] sm:$0xff] %vm502, %v1036
    %1211 = vst.msk [vmem:[%s1155 + $0x2c1] sm:$0xff] %vm502, %v1037
    %1212 = vst.msk [vmem:[%s1155 + $0x2d1] sm:$0xff] %vm502, %v1038
    %1213 = vst.msk [vmem:[%s1155 + $0x2d9] sm:$0xff] %vm502, %v1039
    %1214 = vst.msk [vmem:[%s1155 + $0x2e9] sm:$0xff] %vm502, %v1040
    %1215 = vst.msk [vmem:[%s1155 + $0x2f1] sm:$0xff] %vm502, %v1041
    %1216 = vst.msk [vmem:[%s1155 + $0x301] sm:$0xff] %vm502, %v1042
    %1217 = vst.msk [vmem:[%s1155 + $0x309] sm:$0xff] %vm502, %v1043
    %1218 = vst.msk [vmem:[%s1155 + $0x319] sm:$0xff] %vm502, %v1044
    %1219 = vst.msk [vmem:[%s1155 + $0x321] sm:$0xff] %vm502, %v1045
    %v1220 = vld [vmem:[#allocation2] sm:$0xff]
    %v1221 = vld [vmem:[#allocation2 + $0x8] sm:$0xff]
    %v1222 = vld [vmem:[#allocation2 + $0x18] sm:$0xff]
    %v1223 = vld [vmem:[#allocation2 + $0x20] sm:$0xff]
    %v1224 = vld [vmem:[#allocation2 + $0x30] sm:$0xff]
    %v1225 = vld [vmem:[#allocation2 + $0x38] sm:$0xff]
    %v1226 = vld [vmem:[#allocation2 + $0x48] sm:$0xff]
    %v1227 = vld [vmem:[#allocation2 + $0x50] sm:$0xff]
    %v1228 = vld [vmem:[#allocation2 + $0x60] sm:$0xff]
    %v1229 = vld [vmem:[#allocation2 + $0x68] sm:$0xff]
    %v1230 = vld [vmem:[#allocation2 + $0x78] sm:$0xff]
    %v1231 = vld [vmem:[#allocation2 + $0x80] sm:$0xff]
    %v1232 = vld [vmem:[#allocation2 + $0x90] sm:$0xff]
    %v1233 = vld [vmem:[#allocation2 + $0x98] sm:$0xff]
    %v1234 = vld [vmem:[#allocation2 + $0xa8] sm:$0xff]
    %v1235 = vld [vmem:[#allocation2 + $0xb0] sm:$0xff]
    %v1236 = vld [vmem:[#allocation2 + $0xc0] sm:$0xff]
    %v1237 = vld [vmem:[#allocation2 + $0xc8] sm:$0xff]
    %v1238 = vld [vmem:[#allocation2 + $0xd8] sm:$0xff]
    %v1239 = vld [vmem:[#allocation2 + $0xe0] sm:$0xff]
    %v1240 = vld [vmem:[#allocation2 + $0xf0] sm:$0xff]
    %v1241 = vld [vmem:[#allocation2 + $0xf8] sm:$0xff]
    %v1242 = vld [vmem:[#allocation2 + $0x108] sm:$0xff]
    %v1243 = vld [vmem:[#allocation2 + $0x110] sm:$0xff]
    %v1244 = vld [vmem:[#allocation2 + $0x120] sm:$0xff]
    %v1245 = vld [vmem:[#allocation2 + $0x128] sm:$0xff]
    %v1246 = vld [vmem:[#allocation2 + $0x138] sm:$0xff]
    %v1247 = vld [vmem:[#allocation2 + $0x140] sm:$0xff]
    %v1248 = vld [vmem:[#allocation2 + $0x150] sm:$0xff]
    %v1249 = vld [vmem:[#allocation2 + $0x158] sm:$0xff]
    %v1250 = vld [vmem:[#allocation2 + $0x168] sm:$0xff]
    %v1251 = vld [vmem:[#allocation2 + $0x170] sm:$0xff]
    %v1252 = vld [vmem:[#allocation2 + $0x1b0] sm:$0xff]
    %v1253 = vld [vmem:[#allocation2 + $0x1b8] sm:$0xff]
    %v1254 = vld [vmem:[#allocation2 + $0x1c8] sm:$0xff]
    %v1255 = vld [vmem:[#allocation2 + $0x1d0] sm:$0xff]
    %v1256 = vld [vmem:[#allocation2 + $0x1e0] sm:$0xff]
    %v1257 = vld [vmem:[#allocation2 + $0x1e8] sm:$0xff]
    %v1258 = vld [vmem:[#allocation2 + $0x1f8] sm:$0xff]
    %v1259 = vld [vmem:[#allocation2 + $0x200] sm:$0xff]
    %v1260 = vld [vmem:[#allocation2 + $0x210] sm:$0xff]
    %v1261 = vld [vmem:[#allocation2 + $0x218] sm:$0xff]
    %v1262 = vld [vmem:[#allocation2 + $0x228] sm:$0xff]
    %v1263 = vld [vmem:[#allocation2 + $0x230] sm:$0xff]
    %v1264 = vld [vmem:[#allocation2 + $0x240] sm:$0xff]
    %v1265 = vld [vmem:[#allocation2 + $0x248] sm:$0xff]
    %v1266 = vld [vmem:[#allocation2 + $0x258] sm:$0xff]
    %v1267 = vld [vmem:[#allocation2 + $0x260] sm:$0xff]
    %v1268 = vld [vmem:[#allocation2 + $0x270] sm:$0xff]
    %v1269 = vld [vmem:[#allocation2 + $0x278] sm:$0xff]
    %v1270 = vld [vmem:[#allocation2 + $0x288] sm:$0xff]
    %v1271 = vld [vmem:[#allocation2 + $0x290] sm:$0xff]
    %v1272 = vld [vmem:[#allocation2 + $0x2a0] sm:$0xff]
    %v1273 = vld [vmem:[#allocation2 + $0x2a8] sm:$0xff]
    %v1274 = vld [vmem:[#allocation2 + $0x2b8] sm:$0xff]
    %v1275 = vld [vmem:[#allocation2 + $0x2c0] sm:$0xff]
    %v1276 = vld [vmem:[#allocation2 + $0x2d0] sm:$0xff]
    %v1277 = vld [vmem:[#allocation2 + $0x2d8] sm:$0xff]
    %v1278 = vld [vmem:[#allocation2 + $0x2e8] sm:$0xff]
    %v1279 = vld [vmem:[#allocation2 + $0x2f0] sm:$0xff]
    %v1280 = vld [vmem:[#allocation2 + $0x300] sm:$0xff]
    %v1281 = vld [vmem:[#allocation2 + $0x308] sm:$0xff]
    %v1282 = vld [vmem:[#allocation2 + $0x318] sm:$0xff]
    %v1283 = vld [vmem:[#allocation2 + $0x320] sm:$0xff]
    %v1284 = vpack.c.bf16 %v1221, %v1220
    %v1285 = vpack.c.bf16 %v1223, %v1222
    %v1286 = vpack.c.bf16 %v1225, %v1224
    %v1287 = vpack.c.bf16 %v1227, %v1226
    %v1288 = vpack.c.bf16 %v1229, %v1228
    %v1289 = vpack.c.bf16 %v1231, %v1230
    %v1290 = vpack.c.bf16 %v1233, %v1232
    %v1291 = vpack.c.bf16 %v1235, %v1234
    %v1292 = vpack.c.bf16 %v1237, %v1236
    %v1293 = vpack.c.bf16 %v1239, %v1238
    %v1294 = vpack.c.bf16 %v1241, %v1240
    %v1295 = vpack.c.bf16 %v1243, %v1242
    %v1296 = vpack.c.bf16 %v1245, %v1244
    %v1297 = vpack.c.bf16 %v1247, %v1246
    %v1298 = vpack.c.bf16 %v1249, %v1248
    %v1299 = vpack.c.bf16 %v1251, %v1250
    %v1300 = vpack.c.bf16 %v1253, %v1252
    %v1301 = vpack.c.bf16 %v1255, %v1254
    %v1302 = vpack.c.bf16 %v1257, %v1256
    %v1303 = vpack.c.bf16 %v1259, %v1258
    %v1304 = vpack.c.bf16 %v1261, %v1260
    %v1305 = vpack.c.bf16 %v1263, %v1262
    %v1306 = vpack.c.bf16 %v1265, %v1264
    %v1307 = vpack.c.bf16 %v1267, %v1266
    %v1308 = vpack.c.bf16 %v1269, %v1268
    %v1309 = vpack.c.bf16 %v1271, %v1270
    %v1310 = vpack.c.bf16 %v1273, %v1272
    %v1311 = vpack.c.bf16 %v1275, %v1274
    %v1312 = vpack.c.bf16 %v1277, %v1276
    %v1313 = vpack.c.bf16 %v1279, %v1278
    %v1314 = vpack.c.bf16 %v1281, %v1280
    %v1315 = vpack.c.bf16 %v1283, %v1282
    %1316 = vst.msk [vmem:[#allocation3] sm:$0xff] %vm502, %v1284
    %1317 = vst.msk [vmem:[#allocation3 + $0x18] sm:$0xff] %vm502, %v1285
    %1318 = vst.msk [vmem:[#allocation3 + $0x30] sm:$0xff] %vm502, %v1286
    %1319 = vst.msk [vmem:[#allocation3 + $0x48] sm:$0xff] %vm502, %v1287
    %1320 = vst.msk [vmem:[#allocation3 + $0x60] sm:$0xff] %vm502, %v1288
    %1321 = vst.msk [vmem:[#allocation3 + $0x78] sm:$0xff] %vm502, %v1289
    %1322 = vst.msk [vmem:[#allocation3 + $0x90] sm:$0xff] %vm502, %v1290
    %1323 = vst.msk [vmem:[#allocation3 + $0xa8] sm:$0xff] %vm502, %v1291
    %1324 = vst.msk [vmem:[#allocation3 + $0xc0] sm:$0xff] %vm502, %v1292
    %1325 = vst.msk [vmem:[#allocation3 + $0xd8] sm:$0xff] %vm502, %v1293
    %1326 = vst.msk [vmem:[#allocation3 + $0xf0] sm:$0xff] %vm502, %v1294
    %1327 = vst.msk [vmem:[#allocation3 + $0x108] sm:$0xff] %vm502, %v1295
    %1328 = vst.msk [vmem:[#allocation3 + $0x120] sm:$0xff] %vm502, %v1296
    %1329 = vst.msk [vmem:[#allocation3 + $0x138] sm:$0xff] %vm502, %v1297
    %1330 = vst.msk [vmem:[#allocation3 + $0x150] sm:$0xff] %vm502, %v1298
    %1331 = vst.msk [vmem:[#allocation3 + $0x168] sm:$0xff] %vm502, %v1299
    %1332 = vst.msk [vmem:[#allocation3 + $0x180] sm:$0xff] %vm502, %v1300
    %1333 = vst.msk [vmem:[#allocation3 + $0x198] sm:$0xff] %vm502, %v1301
    %1334 = vst.msk [vmem:[#allocation3 + $0x1b0] sm:$0xff] %vm502, %v1302
    %1335 = vst.msk [vmem:[#allocation3 + $0x1c8] sm:$0xff] %vm502, %v1303
    %1336 = vst.msk [vmem:[#allocation3 + $0x1e0] sm:$0xff] %vm502, %v1304
    %1337 = vst.msk [vmem:[#allocation3 + $0x1f8] sm:$0xff] %vm502, %v1305
    %1338 = vst.msk [vmem:[#allocation3 + $0x210] sm:$0xff] %vm502, %v1306
    %1339 = vst.msk [vmem:[#allocation3 + $0x228] sm:$0xff] %vm502, %v1307
    %1340 = vst.msk [vmem:[#allocation3 + $0x240] sm:$0xff] %vm502, %v1308
    %1341 = vst.msk [vmem:[#allocation3 + $0x258] sm:$0xff] %vm502, %v1309
    %1342 = vst.msk [vmem:[#allocation3 + $0x270] sm:$0xff] %vm502, %v1310
    %1343 = vst.msk [vmem:[#allocation3 + $0x288] sm:$0xff] %vm502, %v1311
    %1344 = vst.msk [vmem:[#allocation3 + $0x2a0] sm:$0xff] %vm502, %v1312
    %1345 = vst.msk [vmem:[#allocation3 + $0x2b8] sm:$0xff] %vm502, %v1313
    %1346 = vst.msk [vmem:[#allocation3 + $0x2d0] sm:$0xff] %vm502, %v1314
    %1347 = vst.msk [vmem:[#allocation3 + $0x2e8] sm:$0xff] %vm502, %v1315
    %v1348 = vld [vmem:[#allocation2 + $0x1] sm:$0xff]
    %v1349 = vld [vmem:[#allocation2 + $0x9] sm:$0xff]
    %v1350 = vld [vmem:[#allocation2 + $0x19] sm:$0xff]
    %v1351 = vld [vmem:[#allocation2 + $0x21] sm:$0xff]
    %v1352 = vld [vmem:[#allocation2 + $0x31] sm:$0xff]
    %v1353 = vld [vmem:[#allocation2 + $0x39] sm:$0xff]
    %v1354 = vld [vmem:[#allocation2 + $0x49] sm:$0xff]
    %v1355 = vld [vmem:[#allocation2 + $0x51] sm:$0xff]
    %v1356 = vld [vmem:[#allocation2 + $0x61] sm:$0xff]
    %v1357 = vld [vmem:[#allocation2 + $0x69] sm:$0xff]
    %v1358 = vld [vmem:[#allocation2 + $0x79] sm:$0xff]
    %v1359 = vld [vmem:[#allocation2 + $0x81] sm:$0xff]
    %v1360 = vld [vmem:[#allocation2 + $0x91] sm:$0xff]
    %v1361 = vld [vmem:[#allocation2 + $0x99] sm:$0xff]
    %v1362 = vld [vmem:[#allocation2 + $0xa9] sm:$0xff]
    %v1363 = vld [vmem:[#allocation2 + $0xb1] sm:$0xff]
    %v1364 = vld [vmem:[#allocation2 + $0xc1] sm:$0xff]
    %v1365 = vld [vmem:[#allocation2 + $0xc9] sm:$0xff]
    %v1366 = vld [vmem:[#allocation2 + $0xd9] sm:$0xff]
    %v1367 = vld [vmem:[#allocation2 + $0xe1] sm:$0xff]
    %v1368 = vld [vmem:[#allocation2 + $0xf1] sm:$0xff]
    %v1369 = vld [vmem:[#allocation2 + $0xf9] sm:$0xff]
    %v1370 = vld [vmem:[#allocation2 + $0x109] sm:$0xff]
    %v1371 = vld [vmem:[#allocation2 + $0x111] sm:$0xff]
    %v1372 = vld [vmem:[#allocation2 + $0x121] sm:$0xff]
    %v1373 = vld [vmem:[#allocation2 + $0x129] sm:$0xff]
    %v1374 = vld [vmem:[#allocation2 + $0x139] sm:$0xff]
    %v1375 = vld [vmem:[#allocation2 + $0x141] sm:$0xff]
    %v1376 = vld [vmem:[#allocation2 + $0x151] sm:$0xff]
    %v1377 = vld [vmem:[#allocation2 + $0x159] sm:$0xff]
    %v1378 = vld [vmem:[#allocation2 + $0x169] sm:$0xff]
    %v1379 = vld [vmem:[#allocation2 + $0x171] sm:$0xff]
    %v1380 = vld [vmem:[#allocation2 + $0x1b1] sm:$0xff]
    %v1381 = vld [vmem:[#allocation2 + $0x1b9] sm:$0xff]
    %v1382 = vld [vmem:[#allocation2 + $0x1c9] sm:$0xff]
    %v1383 = vld [vmem:[#allocation2 + $0x1d1] sm:$0xff]
    %v1384 = vld [vmem:[#allocation2 + $0x1e1] sm:$0xff]
    %v1385 = vld [vmem:[#allocation2 + $0x1e9] sm:$0xff]
    %v1386 = vld [vmem:[#allocation2 + $0x1f9] sm:$0xff]
    %v1387 = vld [vmem:[#allocation2 + $0x201] sm:$0xff]
    %v1388 = vld [vmem:[#allocation2 + $0x211] sm:$0xff]
    %v1389 = vld [vmem:[#allocation2 + $0x219] sm:$0xff]
    %v1390 = vld [vmem:[#allocation2 + $0x229] sm:$0xff]
    %v1391 = vld [vmem:[#allocation2 + $0x231] sm:$0xff]
    %v1392 = vld [vmem:[#allocation2 + $0x241] sm:$0xff]
    %v1393 = vld [vmem:[#allocation2 + $0x249] sm:$0xff]
    %v1394 = vld [vmem:[#allocation2 + $0x259] sm:$0xff]
    %v1395 = vld [vmem:[#allocation2 + $0x261] sm:$0xff]
    %v1396 = vld [vmem:[#allocation2 + $0x271] sm:$0xff]
    %v1397 = vld [vmem:[#allocation2 + $0x279] sm:$0xff]
    %v1398 = vld [vmem:[#allocation2 + $0x289] sm:$0xff]
    %v1399 = vld [vmem:[#allocation2 + $0x291] sm:$0xff]
    %v1400 = vld [vmem:[#allocation2 + $0x2a1] sm:$0xff]
    %v1401 = vld [vmem:[#allocation2 + $0x2a9] sm:$0xff]
    %v1402 = vld [vmem:[#allocation2 + $0x2b9] sm:$0xff]
    %v1403 = vld [vmem:[#allocation2 + $0x2c1] sm:$0xff]
    %v1404 = vld [vmem:[#allocation2 + $0x2d1] sm:$0xff]
    %v1405 = vld [vmem:[#allocation2 + $0x2d9] sm:$0xff]
    %v1406 = vld [vmem:[#allocation2 + $0x2e9] sm:$0xff]
    %v1407 = vld [vmem:[#allocation2 + $0x2f1] sm:$0xff]
    %v1408 = vld [vmem:[#allocation2 + $0x301] sm:$0xff]
    %v1409 = vld [vmem:[#allocation2 + $0x309] sm:$0xff]
    %v1410 = vld [vmem:[#allocation2 + $0x319] sm:$0xff]
    %v1411 = vld [vmem:[#allocation2 + $0x321] sm:$0xff]
    %v1412 = vpack.c.bf16 %v1349, %v1348
    %v1413 = vpack.c.bf16 %v1351, %v1350
    %v1414 = vpack.c.bf16 %v1353, %v1352
    %v1415 = vpack.c.bf16 %v1355, %v1354
    %v1416 = vpack.c.bf16 %v1357, %v1356
    %v1417 = vpack.c.bf16 %v1359, %v1358
    %v1418 = vpack.c.bf16 %v1361, %v1360
    %v1419 = vpack.c.bf16 %v1363, %v1362
    %v1420 = vpack.c.bf16 %v1365, %v1364
    %v1421 = vpack.c.bf16 %v1367, %v1366
    %v1422 = vpack.c.bf16 %v1369, %v1368
    %v1423 = vpack.c.bf16 %v1371, %v1370
    %v1424 = vpack.c.bf16 %v1373, %v1372
    %v1425 = vpack.c.bf16 %v1375, %v1374
    %v1426 = vpack.c.bf16 %v1377, %v1376
    %v1427 = vpack.c.bf16 %v1379, %v1378
    %v1428 = vpack.c.bf16 %v1381, %v1380
    %v1429 = vpack.c.bf16 %v1383, %v1382
    %v1430 = vpack.c.bf16 %v1385, %v1384
    %v1431 = vpack.c.bf16 %v1387, %v1386
    %v1432 = vpack.c.bf16 %v1389, %v1388
    %v1433 = vpack.c.bf16 %v1391, %v1390
    %v1434 = vpack.c.bf16 %v1393, %v1392
    %v1435 = vpack.c.bf16 %v1395, %v1394
    %v1436 = vpack.c.bf16 %v1397, %v1396
    %v1437 = vpack.c.bf16 %v1399, %v1398
    %v1438 = vpack.c.bf16 %v1401, %v1400
    %v1439 = vpack.c.bf16 %v1403, %v1402
    %v1440 = vpack.c.bf16 %v1405, %v1404
    %v1441 = vpack.c.bf16 %v1407, %v1406
    %v1442 = vpack.c.bf16 %v1409, %v1408
    %v1443 = vpack.c.bf16 %v1411, %v1410
    %1476 = vrot.lane.b32.xlu0 %v1412, 32
    %v1477 = vpop.permute.xlu0 %1476
    %1478 = vrot.lane.b32.xlu0 %v1413, 32
    %v1479 = vpop.permute.xlu0 %1478
    %1480 = vrot.lane.b32.xlu0 %v1414, 32
    %v1481 = vpop.permute.xlu0 %1480
    %1482 = vrot.lane.b32.xlu0 %v1415, 32
    %v1483 = vpop.permute.xlu0 %1482
    %1484 = vrot.lane.b32.xlu0 %v1416, 32
    %v1485 = vpop.permute.xlu0 %1484
    %1486 = vrot.lane.b32.xlu0 %v1417, 32
    %v1487 = vpop.permute.xlu0 %1486
    %1488 = vrot.lane.b32.xlu0 %v1418, 32
    %v1489 = vpop.permute.xlu0 %1488
    %1490 = vrot.lane.b32.xlu0 %v1419, 32
    %v1491 = vpop.permute.xlu0 %1490
    %1492 = vrot.lane.b32.xlu0 %v1420, 32
    %v1493 = vpop.permute.xlu0 %1492
    %1494 = vrot.lane.b32.xlu0 %v1421, 32
    %v1495 = vpop.permute.xlu0 %1494
    %1496 = vrot.lane.b32.xlu0 %v1422, 32
    %v1497 = vpop.permute.xlu0 %1496
    %1498 = vrot.lane.b32.xlu0 %v1423, 32
    %v1499 = vpop.permute.xlu0 %1498
    %1500 = vrot.lane.b32.xlu0 %v1424, 32
    %v1501 = vpop.permute.xlu0 %1500
    %1502 = vrot.lane.b32.xlu0 %v1425, 32
    %v1503 = vpop.permute.xlu0 %1502
    %1504 = vrot.lane.b32.xlu0 %v1426, 32
    %v1505 = vpop.permute.xlu0 %1504
    %1506 = vrot.lane.b32.xlu0 %v1427, 32
    %v1507 = vpop.permute.xlu0 %1506
    %1508 = vrot.lane.b32.xlu0 %v1428, 32
    %v1509 = vpop.permute.xlu0 %1508
    %1510 = vrot.lane.b32.xlu0 %v1429, 32
    %v1511 = vpop.permute.xlu0 %1510
    %1512 = vrot.lane.b32.xlu0 %v1430, 32
    %v1513 = vpop.permute.xlu0 %1512
    %1514 = vrot.lane.b32.xlu0 %v1431, 32
    %v1515 = vpop.permute.xlu0 %1514
    %1516 = vrot.lane.b32.xlu0 %v1432, 32
    %v1517 = vpop.permute.xlu0 %1516
    %1518 = vrot.lane.b32.xlu0 %v1433, 32
    %v1519 = vpop.permute.xlu0 %1518
    %1520 = vrot.lane.b32.xlu0 %v1434, 32
    %v1521 = vpop.permute.xlu0 %1520
    %1522 = vrot.lane.b32.xlu0 %v1435, 32
    %v1523 = vpop.permute.xlu0 %1522
    %1524 = vrot.lane.b32.xlu0 %v1436, 32
    %v1525 = vpop.permute.xlu0 %1524
    %1526 = vrot.lane.b32.xlu0 %v1437, 32
    %v1527 = vpop.permute.xlu0 %1526
    %1528 = vrot.lane.b32.xlu0 %v1438, 32
    %v1529 = vpop.permute.xlu0 %1528
    %1530 = vrot.lane.b32.xlu0 %v1439, 32
    %v1531 = vpop.permute.xlu0 %1530
    %1532 = vrot.lane.b32.xlu0 %v1440, 32
    %v1533 = vpop.permute.xlu0 %1532
    %1534 = vrot.lane.b32.xlu0 %v1441, 32
    %v1535 = vpop.permute.xlu0 %1534
    %1536 = vrot.lane.b32.xlu0 %v1442, 32
    %v1537 = vpop.permute.xlu0 %1536
    %1538 = vrot.lane.b32.xlu0 %v1443, 32
    %v1539 = vpop.permute.xlu0 %1538
    %vm1572 = vcmask 523520
    %1573 = vst.msk [vmem:[#allocation3] sm:$0xff] %vm1572, %v1477
    %1574 = vst.msk [vmem:[#allocation3 + $0x18] sm:$0xff] %vm1572, %v1479
    %1575 = vst.msk [vmem:[#allocation3 + $0x30] sm:$0xff] %vm1572, %v1481
    %1576 = vst.msk [vmem:[#allocation3 + $0x48] sm:$0xff] %vm1572, %v1483
    %1577 = vst.msk [vmem:[#allocation3 + $0x60] sm:$0xff] %vm1572, %v1485
    %1578 = vst.msk [vmem:[#allocation3 + $0x78] sm:$0xff] %vm1572, %v1487
    %1579 = vst.msk [vmem:[#allocation3 + $0x90] sm:$0xff] %vm1572, %v1489
    %1580 = vst.msk [vmem:[#allocation3 + $0xa8] sm:$0xff] %vm1572, %v1491
    %1581 = vst.msk [vmem:[#allocation3 + $0xc0] sm:$0xff] %vm1572, %v1493
    %1582 = vst.msk [vmem:[#allocation3 + $0xd8] sm:$0xff] %vm1572, %v1495
    %1583 = vst.msk [vmem:[#allocation3 + $0xf0] sm:$0xff] %vm1572, %v1497
    %1584 = vst.msk [vmem:[#allocation3 + $0x108] sm:$0xff] %vm1572, %v1499
    %1585 = vst.msk [vmem:[#allocation3 + $0x120] sm:$0xff] %vm1572, %v1501
    %1586 = vst.msk [vmem:[#allocation3 + $0x138] sm:$0xff] %vm1572, %v1503
    %1587 = vst.msk [vmem:[#allocation3 + $0x150] sm:$0xff] %vm1572, %v1505
    %1588 = vst.msk [vmem:[#allocation3 + $0x168] sm:$0xff] %vm1572, %v1507
    %1589 = vst.msk [vmem:[#allocation3 + $0x180] sm:$0xff] %vm1572, %v1509
    %1590 = vst.msk [vmem:[#allocation3 + $0x198] sm:$0xff] %vm1572, %v1511
    %1591 = vst.msk [vmem:[#allocation3 + $0x1b0] sm:$0xff] %vm1572, %v1513
    %1592 = vst.msk [vmem:[#allocation3 + $0x1c8] sm:$0xff] %vm1572, %v1515
    %1593 = vst.msk [vmem:[#allocation3 + $0x1e0] sm:$0xff] %vm1572, %v1517
    %1594 = vst.msk [vmem:[#allocation3 + $0x1f8] sm:$0xff] %vm1572, %v1519
    %1595 = vst.msk [vmem:[#allocation3 + $0x210] sm:$0xff] %vm1572, %v1521
    %1596 = vst.msk [vmem:[#allocation3 + $0x228] sm:$0xff] %vm1572, %v1523
    %1597 = vst.msk [vmem:[#allocation3 + $0x240] sm:$0xff] %vm1572, %v1525
    %1598 = vst.msk [vmem:[#allocation3 + $0x258] sm:$0xff] %vm1572, %v1527
    %1599 = vst.msk [vmem:[#allocation3 + $0x270] sm:$0xff] %vm1572, %v1529
    %1600 = vst.msk [vmem:[#allocation3 + $0x288] sm:$0xff] %vm1572, %v1531
    %1601 = vst.msk [vmem:[#allocation3 + $0x2a0] sm:$0xff] %vm1572, %v1533
    %1602 = vst.msk [vmem:[#allocation3 + $0x2b8] sm:$0xff] %vm1572, %v1535
    %1603 = vst.msk [vmem:[#allocation3 + $0x2d0] sm:$0xff] %vm1572, %v1537
    %1604 = vst.msk [vmem:[#allocation3 + $0x2e8] sm:$0xff] %vm1572, %v1539
    %v1605 = vld [vmem:[#allocation2 + $0x2] sm:$0xff]
    %v1606 = vld [vmem:[#allocation2 + $0xa] sm:$0xff]
    %v1607 = vld [vmem:[#allocation2 + $0x1a] sm:$0xff]
    %v1608 = vld [vmem:[#allocation2 + $0x22] sm:$0xff]
    %v1609 = vld [vmem:[#allocation2 + $0x32] sm:$0xff]
    %v1610 = vld [vmem:[#allocation2 + $0x3a] sm:$0xff]
    %v1611 = vld [vmem:[#allocation2 + $0x4a] sm:$0xff]
    %v1612 = vld [vmem:[#allocation2 + $0x52] sm:$0xff]
    %v1613 = vld [vmem:[#allocation2 + $0x62] sm:$0xff]
    %v1614 = vld [vmem:[#allocation2 + $0x6a] sm:$0xff]
    %v1615 = vld [vmem:[#allocation2 + $0x7a] sm:$0xff]
    %v1616 = vld [vmem:[#allocation2 + $0x82] sm:$0xff]
    %v1617 = vld [vmem:[#allocation2 + $0x92] sm:$0xff]
    %v1618 = vld [vmem:[#allocation2 + $0x9a] sm:$0xff]
    %v1619 = vld [vmem:[#allocation2 + $0xaa] sm:$0xff]
    %v1620 = vld [vmem:[#allocation2 + $0xb2] sm:$0xff]
    %v1621 = vld [vmem:[#allocation2 + $0xc2] sm:$0xff]
    %v1622 = vld [vmem:[#allocation2 + $0xca] sm:$0xff]
    %v1623 = vld [vmem:[#allocation2 + $0xda] sm:$0xff]
    %v1624 = vld [vmem:[#allocation2 + $0xe2] sm:$0xff]
    %v1625 = vld [vmem:[#allocation2 + $0xf2] sm:$0xff]
    %v1626 = vld [vmem:[#allocation2 + $0xfa] sm:$0xff]
    %v1627 = vld [vmem:[#allocation2 + $0x10a] sm:$0xff]
    %v1628 = vld [vmem:[#allocation2 + $0x112] sm:$0xff]
    %v1629 = vld [vmem:[#allocation2 + $0x122] sm:$0xff]
    %v1630 = vld [vmem:[#allocation2 + $0x12a] sm:$0xff]
    %v1631 = vld [vmem:[#allocation2 + $0x13a] sm:$0xff]
    %v1632 = vld [vmem:[#allocation2 + $0x142] sm:$0xff]
    %v1633 = vld [vmem:[#allocation2 + $0x152] sm:$0xff]
    %v1634 = vld [vmem:[#allocation2 + $0x15a] sm:$0xff]
    %v1635 = vld [vmem:[#allocation2 + $0x16a] sm:$0xff]
    %v1636 = vld [vmem:[#allocation2 + $0x172] sm:$0xff]
    %v1637 = vld [vmem:[#allocation2 + $0x1b2] sm:$0xff]
    %v1638 = vld [vmem:[#allocation2 + $0x1ba] sm:$0xff]
    %v1639 = vld [vmem:[#allocation2 + $0x1ca] sm:$0xff]
    %v1640 = vld [vmem:[#allocation2 + $0x1d2] sm:$0xff]
    %v1641 = vld [vmem:[#allocation2 + $0x1e2] sm:$0xff]
    %v1642 = vld [vmem:[#allocation2 + $0x1ea] sm:$0xff]
    %v1643 = vld [vmem:[#allocation2 + $0x1fa] sm:$0xff]
    %v1644 = vld [vmem:[#allocation2 + $0x202] sm:$0xff]
    %v1645 = vld [vmem:[#allocation2 + $0x212] sm:$0xff]
    %v1646 = vld [vmem:[#allocation2 + $0x21a] sm:$0xff]
    %v1647 = vld [vmem:[#allocation2 + $0x22a] sm:$0xff]
    %v1648 = vld [vmem:[#allocation2 + $0x232] sm:$0xff]
    %v1649 = vld [vmem:[#allocation2 + $0x242] sm:$0xff]
    %v1650 = vld [vmem:[#allocation2 + $0x24a] sm:$0xff]
    %v1651 = vld [vmem:[#allocation2 + $0x25a] sm:$0xff]
    %v1652 = vld [vmem:[#allocation2 + $0x262] sm:$0xff]
    %v1653 = vld [vmem:[#allocation2 + $0x272] sm:$0xff]
    %v1654 = vld [vmem:[#allocation2 + $0x27a] sm:$0xff]
    %v1655 = vld [vmem:[#allocation2 + $0x28a] sm:$0xff]
    %v1656 = vld [vmem:[#allocation2 + $0x292] sm:$0xff]
    %v1657 = vld [vmem:[#allocation2 + $0x2a2] sm:$0xff]
    %v1658 = vld [vmem:[#allocation2 + $0x2aa] sm:$0xff]
    %v1659 = vld [vmem:[#allocation2 + $0x2ba] sm:$0xff]
    %v1660 = vld [vmem:[#allocation2 + $0x2c2] sm:$0xff]
    %v1661 = vld [vmem:[#allocation2 + $0x2d2] sm:$0xff]
    %v1662 = vld [vmem:[#allocation2 + $0x2da] sm:$0xff]
    %v1663 = vld [vmem:[#allocation2 + $0x2ea] sm:$0xff]
    %v1664 = vld [vmem:[#allocation2 + $0x2f2] sm:$0xff]
    %v1665 = vld [vmem:[#allocation2 + $0x302] sm:$0xff]
    %v1666 = vld [vmem:[#allocation2 + $0x30a] sm:$0xff]
    %v1667 = vld [vmem:[#allocation2 + $0x31a] sm:$0xff]
    %v1668 = vld [vmem:[#allocation2 + $0x322] sm:$0xff]
    %v1669 = vpack.c.bf16 %v1606, %v1605
    %v1670 = vpack.c.bf16 %v1608, %v1607
    %v1671 = vpack.c.bf16 %v1610, %v1609
    %v1672 = vpack.c.bf16 %v1612, %v1611
    %v1673 = vpack.c.bf16 %v1614, %v1613
    %v1674 = vpack.c.bf16 %v1616, %v1615
    %v1675 = vpack.c.bf16 %v1618, %v1617
    %v1676 = vpack.c.bf16 %v1620, %v1619
    %v1677 = vpack.c.bf16 %v1622, %v1621
    %v1678 = vpack.c.bf16 %v1624, %v1623
    %v1679 = vpack.c.bf16 %v1626, %v1625
    %v1680 = vpack.c.bf16 %v1628, %v1627
    %v1681 = vpack.c.bf16 %v1630, %v1629
    %v1682 = vpack.c.bf16 %v1632, %v1631
    %v1683 = vpack.c.bf16 %v1634, %v1633
    %v1684 = vpack.c.bf16 %v1636, %v1635
    %v1685 = vpack.c.bf16 %v1638, %v1637
    %v1686 = vpack.c.bf16 %v1640, %v1639
    %v1687 = vpack.c.bf16 %v1642, %v1641
    %v1688 = vpack.c.bf16 %v1644, %v1643
    %v1689 = vpack.c.bf16 %v1646, %v1645
    %v1690 = vpack.c.bf16 %v1648, %v1647
    %v1691 = vpack.c.bf16 %v1650, %v1649
    %v1692 = vpack.c.bf16 %v1652, %v1651
    %v1693 = vpack.c.bf16 %v1654, %v1653
    %v1694 = vpack.c.bf16 %v1656, %v1655
    %v1695 = vpack.c.bf16 %v1658, %v1657
    %v1696 = vpack.c.bf16 %v1660, %v1659
    %v1697 = vpack.c.bf16 %v1662, %v1661
    %v1698 = vpack.c.bf16 %v1664, %v1663
    %v1699 = vpack.c.bf16 %v1666, %v1665
    %v1700 = vpack.c.bf16 %v1668, %v1667
    %1733 = vrot.lane.b32.xlu0 %v1669, 64
    %v1734 = vpop.permute.xlu0 %1733
    %1735 = vrot.lane.b32.xlu0 %v1670, 64
    %v1736 = vpop.permute.xlu0 %1735
    %1737 = vrot.lane.b32.xlu0 %v1671, 64
    %v1738 = vpop.permute.xlu0 %1737
    %1739 = vrot.lane.b32.xlu0 %v1672, 64
    %v1740 = vpop.permute.xlu0 %1739
    %1741 = vrot.lane.b32.xlu0 %v1673, 64
    %v1742 = vpop.permute.xlu0 %1741
    %1743 = vrot.lane.b32.xlu0 %v1674, 64
    %v1744 = vpop.permute.xlu0 %1743
    %1745 = vrot.lane.b32.xlu0 %v1675, 64
    %v1746 = vpop.permute.xlu0 %1745
    %1747 = vrot.lane.b32.xlu0 %v1676, 64
    %v1748 = vpop.permute.xlu0 %1747
    %1749 = vrot.lane.b32.xlu0 %v1677, 64
    %v1750 = vpop.permute.xlu0 %1749
    %1751 = vrot.lane.b32.xlu0 %v1678, 64
    %v1752 = vpop.permute.xlu0 %1751
    %1753 = vrot.lane.b32.xlu0 %v1679, 64
    %v1754 = vpop.permute.xlu0 %1753
    %1755 = vrot.lane.b32.xlu0 %v1680, 64
    %v1756 = vpop.permute.xlu0 %1755
    %1757 = vrot.lane.b32.xlu0 %v1681, 64
    %v1758 = vpop.permute.xlu0 %1757
    %1759 = vrot.lane.b32.xlu0 %v1682, 64
    %v1760 = vpop.permute.xlu0 %1759
    %1761 = vrot.lane.b32.xlu0 %v1683, 64
    %v1762 = vpop.permute.xlu0 %1761
    %1763 = vrot.lane.b32.xlu0 %v1684, 64
    %v1764 = vpop.permute.xlu0 %1763
    %1765 = vrot.lane.b32.xlu0 %v1685, 64
    %v1766 = vpop.permute.xlu0 %1765
    %1767 = vrot.lane.b32.xlu0 %v1686, 64
    %v1768 = vpop.permute.xlu0 %1767
    %1769 = vrot.lane.b32.xlu0 %v1687, 64
    %v1770 = vpop.permute.xlu0 %1769
    %1771 = vrot.lane.b32.xlu0 %v1688, 64
    %v1772 = vpop.permute.xlu0 %1771
    %1773 = vrot.lane.b32.xlu0 %v1689, 64
    %v1774 = vpop.permute.xlu0 %1773
    %1775 = vrot.lane.b32.xlu0 %v1690, 64
    %v1776 = vpop.permute.xlu0 %1775
    %1777 = vrot.lane.b32.xlu0 %v1691, 64
    %v1778 = vpop.permute.xlu0 %1777
    %1779 = vrot.lane.b32.xlu0 %v1692, 64
    %v1780 = vpop.permute.xlu0 %1779
    %1781 = vrot.lane.b32.xlu0 %v1693, 64
    %v1782 = vpop.permute.xlu0 %1781
    %1783 = vrot.lane.b32.xlu0 %v1694, 64
    %v1784 = vpop.permute.xlu0 %1783
    %1785 = vrot.lane.b32.xlu0 %v1695, 64
    %v1786 = vpop.permute.xlu0 %1785
    %1787 = vrot.lane.b32.xlu0 %v1696, 64
    %v1788 = vpop.permute.xlu0 %1787
    %1789 = vrot.lane.b32.xlu0 %v1697, 64
    %v1790 = vpop.permute.xlu0 %1789
    %1791 = vrot.lane.b32.xlu0 %v1698, 64
    %v1792 = vpop.permute.xlu0 %1791
    %1793 = vrot.lane.b32.xlu0 %v1699, 64
    %v1794 = vpop.permute.xlu0 %1793
    %1795 = vrot.lane.b32.xlu0 %v1700, 64
    %v1796 = vpop.permute.xlu0 %1795
    %vm1829 = vcmask 785920
    %1830 = vst.msk [vmem:[#allocation3] sm:$0xff] %vm1829, %v1734
    %1831 = vst.msk [vmem:[#allocation3 + $0x18] sm:$0xff] %vm1829, %v1736
    %1832 = vst.msk [vmem:[#allocation3 + $0x30] sm:$0xff] %vm1829, %v1738
    %1833 = vst.msk [vmem:[#allocation3 + $0x48] sm:$0xff] %vm1829, %v1740
    %1834 = vst.msk [vmem:[#allocation3 + $0x60] sm:$0xff] %vm1829, %v1742
    %1835 = vst.msk [vmem:[#allocation3 + $0x78] sm:$0xff] %vm1829, %v1744
    %1836 = vst.msk [vmem:[#allocation3 + $0x90] sm:$0xff] %vm1829, %v1746
    %1837 = vst.msk [vmem:[#allocation3 + $0xa8] sm:$0xff] %vm1829, %v1748
    %1838 = vst.msk [vmem:[#allocation3 + $0xc0] sm:$0xff] %vm1829, %v1750
    %1839 = vst.msk [vmem:[#allocation3 + $0xd8] sm:$0xff] %vm1829, %v1752
    %1840 = vst.msk [vmem:[#allocation3 + $0xf0] sm:$0xff] %vm1829, %v1754
    %1841 = vst.msk [vmem:[#allocation3 + $0x108] sm:$0xff] %vm1829, %v1756
    %1842 = vst.msk [vmem:[#allocation3 + $0x120] sm:$0xff] %vm1829, %v1758
    %1843 = vst.msk [vmem:[#allocation3 + $0x138] sm:$0xff] %vm1829, %v1760
    %1844 = vst.msk [vmem:[#allocation3 + $0x150] sm:$0xff] %vm1829, %v1762
    %1845 = vst.msk [vmem:[#allocation3 + $0x168] sm:$0xff] %vm1829, %v1764
    %1846 = vst.msk [vmem:[#allocation3 + $0x180] sm:$0xff] %vm1829, %v1766
    %1847 = vst.msk [vmem:[#allocation3 + $0x198] sm:$0xff] %vm1829, %v1768
    %1848 = vst.msk [vmem:[#allocation3 + $0x1b0] sm:$0xff] %vm1829, %v1770
    %1849 = vst.msk [vmem:[#allocation3 + $0x1c8] sm:$0xff] %vm1829, %v1772
    %1850 = vst.msk [vmem:[#allocation3 + $0x1e0] sm:$0xff] %vm1829, %v1774
    %1851 = vst.msk [vmem:[#allocation3 + $0x1f8] sm:$0xff] %vm1829, %v1776
    %1852 = vst.msk [vmem:[#allocation3 + $0x210] sm:$0xff] %vm1829, %v1778
    %1853 = vst.msk [vmem:[#allocation3 + $0x228] sm:$0xff] %vm1829, %v1780
    %1854 = vst.msk [vmem:[#allocation3 + $0x240] sm:$0xff] %vm1829, %v1782
    %1855 = vst.msk [vmem:[#allocation3 + $0x258] sm:$0xff] %vm1829, %v1784
    %1856 = vst.msk [vmem:[#allocation3 + $0x270] sm:$0xff] %vm1829, %v1786
    %1857 = vst.msk [vmem:[#allocation3 + $0x288] sm:$0xff] %vm1829, %v1788
    %1858 = vst.msk [vmem:[#allocation3 + $0x2a0] sm:$0xff] %vm1829, %v1790
    %1859 = vst.msk [vmem:[#allocation3 + $0x2b8] sm:$0xff] %vm1829, %v1792
    %1860 = vst.msk [vmem:[#allocation3 + $0x2d0] sm:$0xff] %vm1829, %v1794
    %1861 = vst.msk [vmem:[#allocation3 + $0x2e8] sm:$0xff] %vm1829, %v1796
    %v1862 = vld [vmem:[%s1155] sm:$0xff]
    %v1863 = vld [vmem:[%s1155 + $0x8] sm:$0xff]
    %v1864 = vld [vmem:[%s1155 + $0x18] sm:$0xff]
    %v1865 = vld [vmem:[%s1155 + $0x20] sm:$0xff]
    %v1866 = vld [vmem:[%s1155 + $0x30] sm:$0xff]
    %v1867 = vld [vmem:[%s1155 + $0x38] sm:$0xff]
    %v1868 = vld [vmem:[%s1155 + $0x48] sm:$0xff]
    %v1869 = vld [vmem:[%s1155 + $0x50] sm:$0xff]
    %v1870 = vld [vmem:[%s1155 + $0x60] sm:$0xff]
    %v1871 = vld [vmem:[%s1155 + $0x68] sm:$0xff]
    %v1872 = vld [vmem:[%s1155 + $0x78] sm:$0xff]
    %v1873 = vld [vmem:[%s1155 + $0x80] sm:$0xff]
    %v1874 = vld [vmem:[%s1155 + $0x90] sm:$0xff]
    %v1875 = vld [vmem:[%s1155 + $0x98] sm:$0xff]
    %v1876 = vld [vmem:[%s1155 + $0xa8] sm:$0xff]
    %v1877 = vld [vmem:[%s1155 + $0xb0] sm:$0xff]
    %v1878 = vld [vmem:[%s1155 + $0xc0] sm:$0xff]
    %v1879 = vld [vmem:[%s1155 + $0xc8] sm:$0xff]
    %v1880 = vld [vmem:[%s1155 + $0xd8] sm:$0xff]
    %v1881 = vld [vmem:[%s1155 + $0xe0] sm:$0xff]
    %v1882 = vld [vmem:[%s1155 + $0xf0] sm:$0xff]
    %v1883 = vld [vmem:[%s1155 + $0xf8] sm:$0xff]
    %v1884 = vld [vmem:[%s1155 + $0x108] sm:$0xff]
    %v1885 = vld [vmem:[%s1155 + $0x110] sm:$0xff]
    %v1886 = vld [vmem:[%s1155 + $0x120] sm:$0xff]
    %v1887 = vld [vmem:[%s1155 + $0x128] sm:$0xff]
    %v1888 = vld [vmem:[%s1155 + $0x138] sm:$0xff]
    %v1889 = vld [vmem:[%s1155 + $0x140] sm:$0xff]
    %v1890 = vld [vmem:[%s1155 + $0x150] sm:$0xff]
    %v1891 = vld [vmem:[%s1155 + $0x158] sm:$0xff]
    %v1892 = vld [vmem:[%s1155 + $0x168] sm:$0xff]
    %v1893 = vld [vmem:[%s1155 + $0x170] sm:$0xff]
    %v1894 = vld [vmem:[%s1155 + $0x1b0] sm:$0xff]
    %v1895 = vld [vmem:[%s1155 + $0x1b8] sm:$0xff]
    %v1896 = vld [vmem:[%s1155 + $0x1c8] sm:$0xff]
    %v1897 = vld [vmem:[%s1155 + $0x1d0] sm:$0xff]
    %v1898 = vld [vmem:[%s1155 + $0x1e0] sm:$0xff]
    %v1899 = vld [vmem:[%s1155 + $0x1e8] sm:$0xff]
    %v1900 = vld [vmem:[%s1155 + $0x1f8] sm:$0xff]
    %v1901 = vld [vmem:[%s1155 + $0x200] sm:$0xff]
    %v1902 = vld [vmem:[%s1155 + $0x210] sm:$0xff]
    %v1903 = vld [vmem:[%s1155 + $0x218] sm:$0xff]
    %v1904 = vld [vmem:[%s1155 + $0x228] sm:$0xff]
    %v1905 = vld [vmem:[%s1155 + $0x230] sm:$0xff]
    %v1906 = vld [vmem:[%s1155 + $0x240] sm:$0xff]
    %v1907 = vld [vmem:[%s1155 + $0x248] sm:$0xff]
    %v1908 = vld [vmem:[%s1155 + $0x258] sm:$0xff]
    %v1909 = vld [vmem:[%s1155 + $0x260] sm:$0xff]
    %v1910 = vld [vmem:[%s1155 + $0x270] sm:$0xff]
    %v1911 = vld [vmem:[%s1155 + $0x278] sm:$0xff]
    %v1912 = vld [vmem:[%s1155 + $0x288] sm:$0xff]
    %v1913 = vld [vmem:[%s1155 + $0x290] sm:$0xff]
    %v1914 = vld [vmem:[%s1155 + $0x2a0] sm:$0xff]
    %v1915 = vld [vmem:[%s1155 + $0x2a8] sm:$0xff]
    %v1916 = vld [vmem:[%s1155 + $0x2b8] sm:$0xff]
    %v1917 = vld [vmem:[%s1155 + $0x2c0] sm:$0xff]
    %v1918 = vld [vmem:[%s1155 + $0x2d0] sm:$0xff]
    %v1919 = vld [vmem:[%s1155 + $0x2d8] sm:$0xff]
    %v1920 = vld [vmem:[%s1155 + $0x2e8] sm:$0xff]
    %v1921 = vld [vmem:[%s1155 + $0x2f0] sm:$0xff]
    %v1922 = vld [vmem:[%s1155 + $0x300] sm:$0xff]
    %v1923 = vld [vmem:[%s1155 + $0x308] sm:$0xff]
    %v1924 = vld [vmem:[%s1155 + $0x318] sm:$0xff]
    %v1925 = vld [vmem:[%s1155 + $0x320] sm:$0xff]
    %v1926 = vpack.c.bf16 %v1863, %v1862
    %v1927 = vpack.c.bf16 %v1865, %v1864
    %v1928 = vpack.c.bf16 %v1867, %v1866
    %v1929 = vpack.c.bf16 %v1869, %v1868
    %v1930 = vpack.c.bf16 %v1871, %v1870
    %v1931 = vpack.c.bf16 %v1873, %v1872
    %v1932 = vpack.c.bf16 %v1875, %v1874
    %v1933 = vpack.c.bf16 %v1877, %v1876
    %v1934 = vpack.c.bf16 %v1879, %v1878
    %v1935 = vpack.c.bf16 %v1881, %v1880
    %v1936 = vpack.c.bf16 %v1883, %v1882
    %v1937 = vpack.c.bf16 %v1885, %v1884
    %v1938 = vpack.c.bf16 %v1887, %v1886
    %v1939 = vpack.c.bf16 %v1889, %v1888
    %v1940 = vpack.c.bf16 %v1891, %v1890
    %v1941 = vpack.c.bf16 %v1893, %v1892
    %v1942 = vpack.c.bf16 %v1895, %v1894
    %v1943 = vpack.c.bf16 %v1897, %v1896
    %v1944 = vpack.c.bf16 %v1899, %v1898
    %v1945 = vpack.c.bf16 %v1901, %v1900
    %v1946 = vpack.c.bf16 %v1903, %v1902
    %v1947 = vpack.c.bf16 %v1905, %v1904
    %v1948 = vpack.c.bf16 %v1907, %v1906
    %v1949 = vpack.c.bf16 %v1909, %v1908
    %v1950 = vpack.c.bf16 %v1911, %v1910
    %v1951 = vpack.c.bf16 %v1913, %v1912
    %v1952 = vpack.c.bf16 %v1915, %v1914
    %v1953 = vpack.c.bf16 %v1917, %v1916
    %v1954 = vpack.c.bf16 %v1919, %v1918
    %v1955 = vpack.c.bf16 %v1921, %v1920
    %v1956 = vpack.c.bf16 %v1923, %v1922
    %v1957 = vpack.c.bf16 %v1925, %v1924
    %1990 = vrot.lane.b32.xlu0 %v1926, 96
    %v1991 = vpop.permute.xlu0 %1990
    %1992 = vrot.lane.b32.xlu0 %v1927, 96
    %v1993 = vpop.permute.xlu0 %1992
    %1994 = vrot.lane.b32.xlu0 %v1928, 96
    %v1995 = vpop.permute.xlu0 %1994
    %1996 = vrot.lane.b32.xlu0 %v1929, 96
    %v1997 = vpop.permute.xlu0 %1996
    %1998 = vrot.lane.b32.xlu0 %v1930, 96
    %v1999 = vpop.permute.xlu0 %1998
    %2000 = vrot.lane.b32.xlu0 %v1931, 96
    %v2001 = vpop.permute.xlu0 %2000
    %2002 = vrot.lane.b32.xlu0 %v1932, 96
    %v2003 = vpop.permute.xlu0 %2002
    %2004 = vrot.lane.b32.xlu0 %v1933, 96
    %v2005 = vpop.permute.xlu0 %2004
    %2006 = vrot.lane.b32.xlu0 %v1934, 96
    %v2007 = vpop.permute.xlu0 %2006
    %2008 = vrot.lane.b32.xlu0 %v1935, 96
    %v2009 = vpop.permute.xlu0 %2008
    %2010 = vrot.lane.b32.xlu0 %v1936, 96
    %v2011 = vpop.permute.xlu0 %2010
    %2012 = vrot.lane.b32.xlu0 %v1937, 96
    %v2013 = vpop.permute.xlu0 %2012
    %2014 = vrot.lane.b32.xlu0 %v1938, 96
    %v2015 = vpop.permute.xlu0 %2014
    %2016 = vrot.lane.b32.xlu0 %v1939, 96
    %v2017 = vpop.permute.xlu0 %2016
    %2018 = vrot.lane.b32.xlu0 %v1940, 96
    %v2019 = vpop.permute.xlu0 %2018
    %2020 = vrot.lane.b32.xlu0 %v1941, 96
    %v2021 = vpop.permute.xlu0 %2020
    %2022 = vrot.lane.b32.xlu0 %v1942, 96
    %v2023 = vpop.permute.xlu0 %2022
    %2024 = vrot.lane.b32.xlu0 %v1943, 96
    %v2025 = vpop.permute.xlu0 %2024
    %2026 = vrot.lane.b32.xlu0 %v1944, 96
    %v2027 = vpop.permute.xlu0 %2026
    %2028 = vrot.lane.b32.xlu0 %v1945, 96
    %v2029 = vpop.permute.xlu0 %2028
    %2030 = vrot.lane.b32.xlu0 %v1946, 96
    %v2031 = vpop.permute.xlu0 %2030
    %2032 = vrot.lane.b32.xlu0 %v1947, 96
    %v2033 = vpop.permute.xlu0 %2032
    %2034 = vrot.lane.b32.xlu0 %v1948, 96
    %v2035 = vpop.permute.xlu0 %2034
    %2036 = vrot.lane.b32.xlu0 %v1949, 96
    %v2037 = vpop.permute.xlu0 %2036
    %2038 = vrot.lane.b32.xlu0 %v1950, 96
    %v2039 = vpop.permute.xlu0 %2038
    %2040 = vrot.lane.b32.xlu0 %v1951, 96
    %v2041 = vpop.permute.xlu0 %2040
    %2042 = vrot.lane.b32.xlu0 %v1952, 96
    %v2043 = vpop.permute.xlu0 %2042
    %2044 = vrot.lane.b32.xlu0 %v1953, 96
    %v2045 = vpop.permute.xlu0 %2044
    %2046 = vrot.lane.b32.xlu0 %v1954, 96
    %v2047 = vpop.permute.xlu0 %2046
    %2048 = vrot.lane.b32.xlu0 %v1955, 96
    %v2049 = vpop.permute.xlu0 %2048
    %2050 = vrot.lane.b32.xlu0 %v1956, 96
    %v2051 = vpop.permute.xlu0 %2050
    %2052 = vrot.lane.b32.xlu0 %v1957, 96
    %v2053 = vpop.permute.xlu0 %2052
    %vm2086 = vcmask 1048320
    %2087 = vst.msk [vmem:[#allocation3] sm:$0xff] %vm2086, %v1991
    %2088 = vst.msk [vmem:[#allocation3 + $0x18] sm:$0xff] %vm2086, %v1993
    %2089 = vst.msk [vmem:[#allocation3 + $0x30] sm:$0xff] %vm2086, %v1995
    %2090 = vst.msk [vmem:[#allocation3 + $0x48] sm:$0xff] %vm2086, %v1997
    %2091 = vst.msk [vmem:[#allocation3 + $0x60] sm:$0xff] %vm2086, %v1999
    %2092 = vst.msk [vmem:[#allocation3 + $0x78] sm:$0xff] %vm2086, %v2001
    %2093 = vst.msk [vmem:[#allocation3 + $0x90] sm:$0xff] %vm2086, %v2003
    %2094 = vst.msk [vmem:[#allocation3 + $0xa8] sm:$0xff] %vm2086, %v2005
    %2095 = vst.msk [vmem:[#allocation3 + $0xc0] sm:$0xff] %vm2086, %v2007
    %2096 = vst.msk [vmem:[#allocation3 + $0xd8] sm:$0xff] %vm2086, %v2009
    %2097 = vst.msk [vmem:[#allocation3 + $0xf0] sm:$0xff] %vm2086, %v2011
    %2098 = vst.msk [vmem:[#allocation3 + $0x108] sm:$0xff] %vm2086, %v2013
    %2099 = vst.msk [vmem:[#allocation3 + $0x120] sm:$0xff] %vm2086, %v2015
    %2100 = vst.msk [vmem:[#allocation3 + $0x138] sm:$0xff] %vm2086, %v2017
    %2101 = vst.msk [vmem:[#allocation3 + $0x150] sm:$0xff] %vm2086, %v2019
    %2102 = vst.msk [vmem:[#allocation3 + $0x168] sm:$0xff] %vm2086, %v2021
    %2103 = vst.msk [vmem:[#allocation3 + $0x180] sm:$0xff] %vm2086, %v2023
    %2104 = vst.msk [vmem:[#allocation3 + $0x198] sm:$0xff] %vm2086, %v2025
    %2105 = vst.msk [vmem:[#allocation3 + $0x1b0] sm:$0xff] %vm2086, %v2027
    %2106 = vst.msk [vmem:[#allocation3 + $0x1c8] sm:$0xff] %vm2086, %v2029
    %2107 = vst.msk [vmem:[#allocation3 + $0x1e0] sm:$0xff] %vm2086, %v2031
    %2108 = vst.msk [vmem:[#allocation3 + $0x1f8] sm:$0xff] %vm2086, %v2033
    %2109 = vst.msk [vmem:[#allocation3 + $0x210] sm:$0xff] %vm2086, %v2035
    %2110 = vst.msk [vmem:[#allocation3 + $0x228] sm:$0xff] %vm2086, %v2037
    %2111 = vst.msk [vmem:[#allocation3 + $0x240] sm:$0xff] %vm2086, %v2039
    %2112 = vst.msk [vmem:[#allocation3 + $0x258] sm:$0xff] %vm2086, %v2041
    %2113 = vst.msk [vmem:[#allocation3 + $0x270] sm:$0xff] %vm2086, %v2043
    %2114 = vst.msk [vmem:[#allocation3 + $0x288] sm:$0xff] %vm2086, %v2045
    %2115 = vst.msk [vmem:[#allocation3 + $0x2a0] sm:$0xff] %vm2086, %v2047
    %2116 = vst.msk [vmem:[#allocation3 + $0x2b8] sm:$0xff] %vm2086, %v2049
    %2117 = vst.msk [vmem:[#allocation3 + $0x2d0] sm:$0xff] %vm2086, %v2051
    %2118 = vst.msk [vmem:[#allocation3 + $0x2e8] sm:$0xff] %vm2086, %v2053
    %v2119 = vld [vmem:[%s1155 + $0x1] sm:$0xff]
    %v2120 = vld [vmem:[%s1155 + $0x9] sm:$0xff]
    %v2121 = vld [vmem:[%s1155 + $0x19] sm:$0xff]
    %v2122 = vld [vmem:[%s1155 + $0x21] sm:$0xff]
    %v2123 = vld [vmem:[%s1155 + $0x31] sm:$0xff]
    %v2124 = vld [vmem:[%s1155 + $0x39] sm:$0xff]
    %v2125 = vld [vmem:[%s1155 + $0x49] sm:$0xff]
    %v2126 = vld [vmem:[%s1155 + $0x51] sm:$0xff]
    %v2127 = vld [vmem:[%s1155 + $0x61] sm:$0xff]
    %v2128 = vld [vmem:[%s1155 + $0x69] sm:$0xff]
    %v2129 = vld [vmem:[%s1155 + $0x79] sm:$0xff]
    %v2130 = vld [vmem:[%s1155 + $0x81] sm:$0xff]
    %v2131 = vld [vmem:[%s1155 + $0x91] sm:$0xff]
    %v2132 = vld [vmem:[%s1155 + $0x99] sm:$0xff]
    %v2133 = vld [vmem:[%s1155 + $0xa9] sm:$0xff]
    %v2134 = vld [vmem:[%s1155 + $0xb1] sm:$0xff]
    %v2135 = vld [vmem:[%s1155 + $0xc1] sm:$0xff]
    %v2136 = vld [vmem:[%s1155 + $0xc9] sm:$0xff]
    %v2137 = vld [vmem:[%s1155 + $0xd9] sm:$0xff]
    %v2138 = vld [vmem:[%s1155 + $0xe1] sm:$0xff]
    %v2139 = vld [vmem:[%s1155 + $0xf1] sm:$0xff]
    %v2140 = vld [vmem:[%s1155 + $0xf9] sm:$0xff]
    %v2141 = vld [vmem:[%s1155 + $0x109] sm:$0xff]
    %v2142 = vld [vmem:[%s1155 + $0x111] sm:$0xff]
    %v2143 = vld [vmem:[%s1155 + $0x121] sm:$0xff]
    %v2144 = vld [vmem:[%s1155 + $0x129] sm:$0xff]
    %v2145 = vld [vmem:[%s1155 + $0x139] sm:$0xff]
    %v2146 = vld [vmem:[%s1155 + $0x141] sm:$0xff]
    %v2147 = vld [vmem:[%s1155 + $0x151] sm:$0xff]
    %v2148 = vld [vmem:[%s1155 + $0x159] sm:$0xff]
    %v2149 = vld [vmem:[%s1155 + $0x169] sm:$0xff]
    %v2150 = vld [vmem:[%s1155 + $0x171] sm:$0xff]
    %v2151 = vld [vmem:[%s1155 + $0x1b1] sm:$0xff]
    %v2152 = vld [vmem:[%s1155 + $0x1b9] sm:$0xff]
    %v2153 = vld [vmem:[%s1155 + $0x1c9] sm:$0xff]
    %v2154 = vld [vmem:[%s1155 + $0x1d1] sm:$0xff]
    %v2155 = vld [vmem:[%s1155 + $0x1e1] sm:$0xff]
    %v2156 = vld [vmem:[%s1155 + $0x1e9] sm:$0xff]
    %v2157 = vld [vmem:[%s1155 + $0x1f9] sm:$0xff]
    %v2158 = vld [vmem:[%s1155 + $0x201] sm:$0xff]
    %v2159 = vld [vmem:[%s1155 + $0x211] sm:$0xff]
    %v2160 = vld [vmem:[%s1155 + $0x219] sm:$0xff]
    %v2161 = vld [vmem:[%s1155 + $0x229] sm:$0xff]
    %v2162 = vld [vmem:[%s1155 + $0x231] sm:$0xff]
    %v2163 = vld [vmem:[%s1155 + $0x241] sm:$0xff]
    %v2164 = vld [vmem:[%s1155 + $0x249] sm:$0xff]
    %v2165 = vld [vmem:[%s1155 + $0x259] sm:$0xff]
    %v2166 = vld [vmem:[%s1155 + $0x261] sm:$0xff]
    %v2167 = vld [vmem:[%s1155 + $0x271] sm:$0xff]
    %v2168 = vld [vmem:[%s1155 + $0x279] sm:$0xff]
    %v2169 = vld [vmem:[%s1155 + $0x289] sm:$0xff]
    %v2170 = vld [vmem:[%s1155 + $0x291] sm:$0xff]
    %v2171 = vld [vmem:[%s1155 + $0x2a1] sm:$0xff]
    %v2172 = vld [vmem:[%s1155 + $0x2a9] sm:$0xff]
    %v2173 = vld [vmem:[%s1155 + $0x2b9] sm:$0xff]
    %v2174 = vld [vmem:[%s1155 + $0x2c1] sm:$0xff]
    %v2175 = vld [vmem:[%s1155 + $0x2d1] sm:$0xff]
    %v2176 = vld [vmem:[%s1155 + $0x2d9] sm:$0xff]
    %v2177 = vld [vmem:[%s1155 + $0x2e9] sm:$0xff]
    %v2178 = vld [vmem:[%s1155 + $0x2f1] sm:$0xff]
    %v2179 = vld [vmem:[%s1155 + $0x301] sm:$0xff]
    %v2180 = vld [vmem:[%s1155 + $0x309] sm:$0xff]
    %v2181 = vld [vmem:[%s1155 + $0x319] sm:$0xff]
    %v2182 = vld [vmem:[%s1155 + $0x321] sm:$0xff]
    %v2183 = vpack.c.bf16 %v2120, %v2119
    %v2184 = vpack.c.bf16 %v2122, %v2121
    %v2185 = vpack.c.bf16 %v2124, %v2123
    %v2186 = vpack.c.bf16 %v2126, %v2125
    %v2187 = vpack.c.bf16 %v2128, %v2127
    %v2188 = vpack.c.bf16 %v2130, %v2129
    %v2189 = vpack.c.bf16 %v2132, %v2131
    %v2190 = vpack.c.bf16 %v2134, %v2133
    %v2191 = vpack.c.bf16 %v2136, %v2135
    %v2192 = vpack.c.bf16 %v2138, %v2137
    %v2193 = vpack.c.bf16 %v2140, %v2139
    %v2194 = vpack.c.bf16 %v2142, %v2141
    %v2195 = vpack.c.bf16 %v2144, %v2143
    %v2196 = vpack.c.bf16 %v2146, %v2145
    %v2197 = vpack.c.bf16 %v2148, %v2147
    %v2198 = vpack.c.bf16 %v2150, %v2149
    %v2199 = vpack.c.bf16 %v2152, %v2151
    %v2200 = vpack.c.bf16 %v2154, %v2153
    %v2201 = vpack.c.bf16 %v2156, %v2155
    %v2202 = vpack.c.bf16 %v2158, %v2157
    %v2203 = vpack.c.bf16 %v2160, %v2159
    %v2204 = vpack.c.bf16 %v2162, %v2161
    %v2205 = vpack.c.bf16 %v2164, %v2163
    %v2206 = vpack.c.bf16 %v2166, %v2165
    %v2207 = vpack.c.bf16 %v2168, %v2167
    %v2208 = vpack.c.bf16 %v2170, %v2169
    %v2209 = vpack.c.bf16 %v2172, %v2171
    %v2210 = vpack.c.bf16 %v2174, %v2173
    %v2211 = vpack.c.bf16 %v2176, %v2175
    %v2212 = vpack.c.bf16 %v2178, %v2177
    %v2213 = vpack.c.bf16 %v2180, %v2179
    %v2214 = vpack.c.bf16 %v2182, %v2181
    %2215 = vst.msk [vmem:[#allocation3 + $0x8] sm:$0xff] %vm502, %v2183
    %2216 = vst.msk [vmem:[#allocation3 + $0x20] sm:$0xff] %vm502, %v2184
    %2217 = vst.msk [vmem:[#allocation3 + $0x38] sm:$0xff] %vm502, %v2185
    %2218 = vst.msk [vmem:[#allocation3 + $0x50] sm:$0xff] %vm502, %v2186
    %2219 = vst.msk [vmem:[#allocation3 + $0x68] sm:$0xff] %vm502, %v2187
    %2220 = vst.msk [vmem:[#allocation3 + $0x80] sm:$0xff] %vm502, %v2188
    %2221 = vst.msk [vmem:[#allocation3 + $0x98] sm:$0xff] %vm502, %v2189
    %2222 = vst.msk [vmem:[#allocation3 + $0xb0] sm:$0xff] %vm502, %v2190
    %2223 = vst.msk [vmem:[#allocation3 + $0xc8] sm:$0xff] %vm502, %v2191
    %2224 = vst.msk [vmem:[#allocation3 + $0xe0] sm:$0xff] %vm502, %v2192
    %2225 = vst.msk [vmem:[#allocation3 + $0xf8] sm:$0xff] %vm502, %v2193
    %2226 = vst.msk [vmem:[#allocation3 + $0x110] sm:$0xff] %vm502, %v2194
    %2227 = vst.msk [vmem:[#allocation3 + $0x128] sm:$0xff] %vm502, %v2195
    %2228 = vst.msk [vmem:[#allocation3 + $0x140] sm:$0xff] %vm502, %v2196
    %2229 = vst.msk [vmem:[#allocation3 + $0x158] sm:$0xff] %vm502, %v2197
    %2230 = vst.msk [vmem:[#allocation3 + $0x170] sm:$0xff] %vm502, %v2198
    %2231 = vst.msk [vmem:[#allocation3 + $0x188] sm:$0xff] %vm502, %v2199
    %2232 = vst.msk [vmem:[#allocation3 + $0x1a0] sm:$0xff] %vm502, %v2200
    %2233 = vst.msk [vmem:[#allocation3 + $0x1b8] sm:$0xff] %vm502, %v2201
    %2234 = vst.msk [vmem:[#allocation3 + $0x1d0] sm:$0xff] %vm502, %v2202
    %2235 = vst.msk [vmem:[#allocation3 + $0x1e8] sm:$0xff] %vm502, %v2203
    %2236 = vst.msk [vmem:[#allocation3 + $0x200] sm:$0xff] %vm502, %v2204
    %2237 = vst.msk [vmem:[#allocation3 + $0x218] sm:$0xff] %vm502, %v2205
    %2238 = vst.msk [vmem:[#allocation3 + $0x230] sm:$0xff] %vm502, %v2206
    %2239 = vst.msk [vmem:[#allocation3 + $0x248] sm:$0xff] %vm502, %v2207
    %2240 = vst.msk [vmem:[#allocation3 + $0x260] sm:$0xff] %vm502, %v2208
    %2241 = vst.msk [vmem:[#allocation3 + $0x278] sm:$0xff] %vm502, %v2209
    %2242 = vst.msk [vmem:[#allocation3 + $0x290] sm:$0xff] %vm502, %v2210
    %2243 = vst.msk [vmem:[#allocation3 + $0x2a8] sm:$0xff] %vm502, %v2211
    %2244 = vst.msk [vmem:[#allocation3 + $0x2c0] sm:$0xff] %vm502, %v2212
    %2245 = vst.msk [vmem:[#allocation3 + $0x2d8] sm:$0xff] %vm502, %v2213
    %2246 = vst.msk [vmem:[#allocation3 + $0x2f0] sm:$0xff] %vm502, %v2214
    %v2247 = vld [vmem:[%s1155 + $0x2] sm:$0xff]
    %v2248 = vld [vmem:[%s1155 + $0xa] sm:$0xff]
    %v2249 = vld [vmem:[%s1155 + $0x1a] sm:$0xff]
    %v2250 = vld [vmem:[%s1155 + $0x22] sm:$0xff]
    %v2251 = vld [vmem:[%s1155 + $0x32] sm:$0xff]
    %v2252 = vld [vmem:[%s1155 + $0x3a] sm:$0xff]
    %v2253 = vld [vmem:[%s1155 + $0x4a] sm:$0xff]
    %v2254 = vld [vmem:[%s1155 + $0x52] sm:$0xff]
    %v2255 = vld [vmem:[%s1155 + $0x62] sm:$0xff]
    %v2256 = vld [vmem:[%s1155 + $0x6a] sm:$0xff]
    %v2257 = vld [vmem:[%s1155 + $0x7a] sm:$0xff]
    %v2258 = vld [vmem:[%s1155 + $0x82] sm:$0xff]
    %v2259 = vld [vmem:[%s1155 + $0x92] sm:$0xff]
    %v2260 = vld [vmem:[%s1155 + $0x9a] sm:$0xff]
    %v2261 = vld [vmem:[%s1155 + $0xaa] sm:$0xff]
    %v2262 = vld [vmem:[%s1155 + $0xb2] sm:$0xff]
    %v2263 = vld [vmem:[%s1155 + $0xc2] sm:$0xff]
    %v2264 = vld [vmem:[%s1155 + $0xca] sm:$0xff]
    %v2265 = vld [vmem:[%s1155 + $0xda] sm:$0xff]
    %v2266 = vld [vmem:[%s1155 + $0xe2] sm:$0xff]
    %v2267 = vld [vmem:[%s1155 + $0xf2] sm:$0xff]
    %v2268 = vld [vmem:[%s1155 + $0xfa] sm:$0xff]
    %v2269 = vld [vmem:[%s1155 + $0x10a] sm:$0xff]
    %v2270 = vld [vmem:[%s1155 + $0x112] sm:$0xff]
    %v2271 = vld [vmem:[%s1155 + $0x122] sm:$0xff]
    %v2272 = vld [vmem:[%s1155 + $0x12a] sm:$0xff]
    %v2273 = vld [vmem:[%s1155 + $0x13a] sm:$0xff]
    %v2274 = vld [vmem:[%s1155 + $0x142] sm:$0xff]
    %v2275 = vld [vmem:[%s1155 + $0x152] sm:$0xff]
    %v2276 = vld [vmem:[%s1155 + $0x15a] sm:$0xff]
    %v2277 = vld [vmem:[%s1155 + $0x16a] sm:$0xff]
    %v2278 = vld [vmem:[%s1155 + $0x172] sm:$0xff]
    %v2279 = vld [vmem:[%s1155 + $0x1b2] sm:$0xff]
    %v2280 = vld [vmem:[%s1155 + $0x1ba] sm:$0xff]
    %v2281 = vld [vmem:[%s1155 + $0x1ca] sm:$0xff]
    %v2282 = vld [vmem:[%s1155 + $0x1d2] sm:$0xff]
    %v2283 = vld [vmem:[%s1155 + $0x1e2] sm:$0xff]
    %v2284 = vld [vmem:[%s1155 + $0x1ea] sm:$0xff]
    %v2285 = vld [vmem:[%s1155 + $0x1fa] sm:$0xff]
    %v2286 = vld [vmem:[%s1155 + $0x202] sm:$0xff]
    %v2287 = vld [vmem:[%s1155 + $0x212] sm:$0xff]
    %v2288 = vld [vmem:[%s1155 + $0x21a] sm:$0xff]
    %v2289 = vld [vmem:[%s1155 + $0x22a] sm:$0xff]
    %v2290 = vld [vmem:[%s1155 + $0x232] sm:$0xff]
    %v2291 = vld [vmem:[%s1155 + $0x242] sm:$0xff]
    %v2292 = vld [vmem:[%s1155 + $0x24a] sm:$0xff]
    %v2293 = vld [vmem:[%s1155 + $0x25a] sm:$0xff]
    %v2294 = vld [vmem:[%s1155 + $0x262] sm:$0xff]
    %v2295 = vld [vmem:[%s1155 + $0x272] sm:$0xff]
    %v2296 = vld [vmem:[%s1155 + $0x27a] sm:$0xff]
    %v2297 = vld [vmem:[%s1155 + $0x28a] sm:$0xff]
    %v2298 = vld [vmem:[%s1155 + $0x292] sm:$0xff]
    %v2299 = vld [vmem:[%s1155 + $0x2a2] sm:$0xff]
    %v2300 = vld [vmem:[%s1155 + $0x2aa] sm:$0xff]
    %v2301 = vld [vmem:[%s1155 + $0x2ba] sm:$0xff]
    %v2302 = vld [vmem:[%s1155 + $0x2c2] sm:$0xff]
    %v2303 = vld [vmem:[%s1155 + $0x2d2] sm:$0xff]
    %v2304 = vld [vmem:[%s1155 + $0x2da] sm:$0xff]
    %v2305 = vld [vmem:[%s1155 + $0x2ea] sm:$0xff]
    %v2306 = vld [vmem:[%s1155 + $0x2f2] sm:$0xff]
    %v2307 = vld [vmem:[%s1155 + $0x302] sm:$0xff]
    %v2308 = vld [vmem:[%s1155 + $0x30a] sm:$0xff]
    %v2309 = vld [vmem:[%s1155 + $0x31a] sm:$0xff]
    %v2310 = vld [vmem:[%s1155 + $0x322] sm:$0xff]
    %v2311 = vpack.c.bf16 %v2248, %v2247
    %v2312 = vpack.c.bf16 %v2250, %v2249
    %v2313 = vpack.c.bf16 %v2252, %v2251
    %v2314 = vpack.c.bf16 %v2254, %v2253
    %v2315 = vpack.c.bf16 %v2256, %v2255
    %v2316 = vpack.c.bf16 %v2258, %v2257
    %v2317 = vpack.c.bf16 %v2260, %v2259
    %v2318 = vpack.c.bf16 %v2262, %v2261
    %v2319 = vpack.c.bf16 %v2264, %v2263
    %v2320 = vpack.c.bf16 %v2266, %v2265
    %v2321 = vpack.c.bf16 %v2268, %v2267
    %v2322 = vpack.c.bf16 %v2270, %v2269
    %v2323 = vpack.c.bf16 %v2272, %v2271
    %v2324 = vpack.c.bf16 %v2274, %v2273
    %v2325 = vpack.c.bf16 %v2276, %v2275
    %v2326 = vpack.c.bf16 %v2278, %v2277
    %v2327 = vpack.c.bf16 %v2280, %v2279
    %v2328 = vpack.c.bf16 %v2282, %v2281
    %v2329 = vpack.c.bf16 %v2284, %v2283
    %v2330 = vpack.c.bf16 %v2286, %v2285
    %v2331 = vpack.c.bf16 %v2288, %v2287
    %v2332 = vpack.c.bf16 %v2290, %v2289
    %v2333 = vpack.c.bf16 %v2292, %v2291
    %v2334 = vpack.c.bf16 %v2294, %v2293
    %v2335 = vpack.c.bf16 %v2296, %v2295
    %v2336 = vpack.c.bf16 %v2298, %v2297
    %v2337 = vpack.c.bf16 %v2300, %v2299
    %v2338 = vpack.c.bf16 %v2302, %v2301
    %v2339 = vpack.c.bf16 %v2304, %v2303
    %v2340 = vpack.c.bf16 %v2306, %v2305
    %v2341 = vpack.c.bf16 %v2308, %v2307
    %v2342 = vpack.c.bf16 %v2310, %v2309
    %2375 = vrot.lane.b32.xlu0 %v2311, 32
    %v2376 = vpop.permute.xlu0 %2375
    %2377 = vrot.lane.b32.xlu0 %v2312, 32
    %v2378 = vpop.permute.xlu0 %2377
    %2379 = vrot.lane.b32.xlu0 %v2313, 32
    %v2380 = vpop.permute.xlu0 %2379
    %2381 = vrot.lane.b32.xlu0 %v2314, 32
    %v2382 = vpop.permute.xlu0 %2381
    %2383 = vrot.lane.b32.xlu0 %v2315, 32
    %v2384 = vpop.permute.xlu0 %2383
    %2385 = vrot.lane.b32.xlu0 %v2316, 32
    %v2386 = vpop.permute.xlu0 %2385
    %2387 = vrot.lane.b32.xlu0 %v2317, 32
    %v2388 = vpop.permute.xlu0 %2387
    %2389 = vrot.lane.b32.xlu0 %v2318, 32
    %v2390 = vpop.permute.xlu0 %2389
    %2391 = vrot.lane.b32.xlu0 %v2319, 32
    %v2392 = vpop.permute.xlu0 %2391
    %2393 = vrot.lane.b32.xlu0 %v2320, 32
    %v2394 = vpop.permute.xlu0 %2393
    %2395 = vrot.lane.b32.xlu0 %v2321, 32
    %v2396 = vpop.permute.xlu0 %2395
    %2397 = vrot.lane.b32.xlu0 %v2322, 32
    %v2398 = vpop.permute.xlu0 %2397
    %2399 = vrot.lane.b32.xlu0 %v2323, 32
    %v2400 = vpop.permute.xlu0 %2399
    %2401 = vrot.lane.b32.xlu0 %v2324, 32
    %v2402 = vpop.permute.xlu0 %2401
    %2403 = vrot.lane.b32.xlu0 %v2325, 32
    %v2404 = vpop.permute.xlu0 %2403
    %2405 = vrot.lane.b32.xlu0 %v2326, 32
    %v2406 = vpop.permute.xlu0 %2405
    %2407 = vrot.lane.b32.xlu0 %v2327, 32
    %v2408 = vpop.permute.xlu0 %2407
    %2409 = vrot.lane.b32.xlu0 %v2328, 32
    %v2410 = vpop.permute.xlu0 %2409
    %2411 = vrot.lane.b32.xlu0 %v2329, 32
    %v2412 = vpop.permute.xlu0 %2411
    %2413 = vrot.lane.b32.xlu0 %v2330, 32
    %v2414 = vpop.permute.xlu0 %2413
    %2415 = vrot.lane.b32.xlu0 %v2331, 32
    %v2416 = vpop.permute.xlu0 %2415
    %2417 = vrot.lane.b32.xlu0 %v2332, 32
    %v2418 = vpop.permute.xlu0 %2417
    %2419 = vrot.lane.b32.xlu0 %v2333, 32
    %v2420 = vpop.permute.xlu0 %2419
    %2421 = vrot.lane.b32.xlu0 %v2334, 32
    %v2422 = vpop.permute.xlu0 %2421
    %2423 = vrot.lane.b32.xlu0 %v2335, 32
    %v2424 = vpop.permute.xlu0 %2423
    %2425 = vrot.lane.b32.xlu0 %v2336, 32
    %v2426 = vpop.permute.xlu0 %2425
    %2427 = vrot.lane.b32.xlu0 %v2337, 32
    %v2428 = vpop.permute.xlu0 %2427
    %2429 = vrot.lane.b32.xlu0 %v2338, 32
    %v2430 = vpop.permute.xlu0 %2429
    %2431 = vrot.lane.b32.xlu0 %v2339, 32
    %v2432 = vpop.permute.xlu0 %2431
    %2433 = vrot.lane.b32.xlu0 %v2340, 32
    %v2434 = vpop.permute.xlu0 %2433
    %2435 = vrot.lane.b32.xlu0 %v2341, 32
    %v2436 = vpop.permute.xlu0 %2435
    %2437 = vrot.lane.b32.xlu0 %v2342, 32
    %v2438 = vpop.permute.xlu0 %2437
    %2471 = vst.msk [vmem:[#allocation3 + $0x8] sm:$0xff] %vm1572, %v2376
    %2472 = vst.msk [vmem:[#allocation3 + $0x20] sm:$0xff] %vm1572, %v2378
    %2473 = vst.msk [vmem:[#allocation3 + $0x38] sm:$0xff] %vm1572, %v2380
    %2474 = vst.msk [vmem:[#allocation3 + $0x50] sm:$0xff] %vm1572, %v2382
    %2475 = vst.msk [vmem:[#allocation3 + $0x68] sm:$0xff] %vm1572, %v2384
    %2476 = vst.msk [vmem:[#allocation3 + $0x80] sm:$0xff] %vm1572, %v2386
    %2477 = vst.msk [vmem:[#allocation3 + $0x98] sm:$0xff] %vm1572, %v2388
    %2478 = vst.msk [vmem:[#allocation3 + $0xb0] sm:$0xff] %vm1572, %v2390
    %2479 = vst.msk [vmem:[#allocation3 + $0xc8] sm:$0xff] %vm1572, %v2392
    %2480 = vst.msk [vmem:[#allocation3 + $0xe0] sm:$0xff] %vm1572, %v2394
    %2481 = vst.msk [vmem:[#allocation3 + $0xf8] sm:$0xff] %vm1572, %v2396
    %2482 = vst.msk [vmem:[#allocation3 + $0x110] sm:$0xff] %vm1572, %v2398
    %2483 = vst.msk [vmem:[#allocation3 + $0x128] sm:$0xff] %vm1572, %v2400
    %2484 = vst.msk [vmem:[#allocation3 + $0x140] sm:$0xff] %vm1572, %v2402
    %2485 = vst.msk [vmem:[#allocation3 + $0x158] sm:$0xff] %vm1572, %v2404
    %2486 = vst.msk [vmem:[#allocation3 + $0x170] sm:$0xff] %vm1572, %v2406
    %2487 = vst.msk [vmem:[#allocation3 + $0x188] sm:$0xff] %vm1572, %v2408
    %2488 = vst.msk [vmem:[#allocation3 + $0x1a0] sm:$0xff] %vm1572, %v2410
    %2489 = vst.msk [vmem:[#allocation3 + $0x1b8] sm:$0xff] %vm1572, %v2412
    %2490 = vst.msk [vmem:[#allocation3 + $0x1d0] sm:$0xff] %vm1572, %v2414
    %2491 = vst.msk [vmem:[#allocation3 + $0x1e8] sm:$0xff] %vm1572, %v2416
    %2492 = vst.msk [vmem:[#allocation3 + $0x200] sm:$0xff] %vm1572, %v2418
    %2493 = vst.msk [vmem:[#allocation3 + $0x218] sm:$0xff] %vm1572, %v2420
    %2494 = vst.msk [vmem:[#allocation3 + $0x230] sm:$0xff] %vm1572, %v2422
    %2495 = vst.msk [vmem:[#allocation3 + $0x248] sm:$0xff] %vm1572, %v2424
    %2496 = vst.msk [vmem:[#allocation3 + $0x260] sm:$0xff] %vm1572, %v2426
    %2497 = vst.msk [vmem:[#allocation3 + $0x278] sm:$0xff] %vm1572, %v2428
    %2498 = vst.msk [vmem:[#allocation3 + $0x290] sm:$0xff] %vm1572, %v2430
    %2499 = vst.msk [vmem:[#allocation3 + $0x2a8] sm:$0xff] %vm1572, %v2432
    %2500 = vst.msk [vmem:[#allocation3 + $0x2c0] sm:$0xff] %vm1572, %v2434
    %2501 = vst.msk [vmem:[#allocation3 + $0x2d8] sm:$0xff] %vm1572, %v2436
    %2502 = vst.msk [vmem:[#allocation3 + $0x2f0] sm:$0xff] %vm1572, %v2438
    %s2503 = scalar_lea.vmem [#allocation2], 48
    %v2504 = vld [vmem:[%s2503] sm:$0xff]
    %v2505 = vld [vmem:[%s2503 + $0x8] sm:$0xff]
    %v2506 = vld [vmem:[%s2503 + $0x18] sm:$0xff]
    %v2507 = vld [vmem:[%s2503 + $0x20] sm:$0xff]
    %v2508 = vld [vmem:[%s2503 + $0x30] sm:$0xff]
    %v2509 = vld [vmem:[%s2503 + $0x38] sm:$0xff]
    %v2510 = vld [vmem:[%s2503 + $0x48] sm:$0xff]
    %v2511 = vld [vmem:[%s2503 + $0x50] sm:$0xff]
    %v2512 = vld [vmem:[%s2503 + $0x60] sm:$0xff]
    %v2513 = vld [vmem:[%s2503 + $0x68] sm:$0xff]
    %v2514 = vld [vmem:[%s2503 + $0x78] sm:$0xff]
    %v2515 = vld [vmem:[%s2503 + $0x80] sm:$0xff]
    %v2516 = vld [vmem:[%s2503 + $0x90] sm:$0xff]
    %v2517 = vld [vmem:[%s2503 + $0x98] sm:$0xff]
    %v2518 = vld [vmem:[%s2503 + $0xa8] sm:$0xff]
    %v2519 = vld [vmem:[%s2503 + $0xb0] sm:$0xff]
    %v2520 = vld [vmem:[%s2503 + $0xc0] sm:$0xff]
    %v2521 = vld [vmem:[%s2503 + $0xc8] sm:$0xff]
    %v2522 = vld [vmem:[%s2503 + $0xd8] sm:$0xff]
    %v2523 = vld [vmem:[%s2503 + $0xe0] sm:$0xff]
    %v2524 = vld [vmem:[%s2503 + $0xf0] sm:$0xff]
    %v2525 = vld [vmem:[%s2503 + $0xf8] sm:$0xff]
    %v2526 = vld [vmem:[%s2503 + $0x108] sm:$0xff]
    %v2527 = vld [vmem:[%s2503 + $0x110] sm:$0xff]
    %v2528 = vld [vmem:[%s2503 + $0x120] sm:$0xff]
    %v2529 = vld [vmem:[%s2503 + $0x128] sm:$0xff]
    %v2530 = vld [vmem:[%s2503 + $0x138] sm:$0xff]
    %v2531 = vld [vmem:[%s2503 + $0x140] sm:$0xff]
    %v2532 = vld [vmem:[%s2503 + $0x150] sm:$0xff]
    %v2533 = vld [vmem:[%s2503 + $0x158] sm:$0xff]
    %v2534 = vld [vmem:[%s2503 + $0x168] sm:$0xff]
    %v2535 = vld [vmem:[%s2503 + $0x170] sm:$0xff]
    %v2536 = vld [vmem:[%s2503 + $0x1b0] sm:$0xff]
    %v2537 = vld [vmem:[%s2503 + $0x1b8] sm:$0xff]
    %v2538 = vld [vmem:[%s2503 + $0x1c8] sm:$0xff]
    %v2539 = vld [vmem:[%s2503 + $0x1d0] sm:$0xff]
    %v2540 = vld [vmem:[%s2503 + $0x1e0] sm:$0xff]
    %v2541 = vld [vmem:[%s2503 + $0x1e8] sm:$0xff]
    %v2542 = vld [vmem:[%s2503 + $0x1f8] sm:$0xff]
    %v2543 = vld [vmem:[%s2503 + $0x200] sm:$0xff]
    %v2544 = vld [vmem:[%s2503 + $0x210] sm:$0xff]
    %v2545 = vld [vmem:[%s2503 + $0x218] sm:$0xff]
    %v2546 = vld [vmem:[%s2503 + $0x228] sm:$0xff]
    %v2547 = vld [vmem:[%s2503 + $0x230] sm:$0xff]
    %v2548 = vld [vmem:[%s2503 + $0x240] sm:$0xff]
    %v2549 = vld [vmem:[%s2503 + $0x248] sm:$0xff]
    %v2550 = vld [vmem:[%s2503 + $0x258] sm:$0xff]
    %v2551 = vld [vmem:[%s2503 + $0x260] sm:$0xff]
    %v2552 = vld [vmem:[%s2503 + $0x270] sm:$0xff]
    %v2553 = vld [vmem:[%s2503 + $0x278] sm:$0xff]
    %v2554 = vld [vmem:[%s2503 + $0x288] sm:$0xff]
    %v2555 = vld [vmem:[%s2503 + $0x290] sm:$0xff]
    %v2556 = vld [vmem:[%s2503 + $0x2a0] sm:$0xff]
    %v2557 = vld [vmem:[%s2503 + $0x2a8] sm:$0xff]
    %v2558 = vld [vmem:[%s2503 + $0x2b8] sm:$0xff]
    %v2559 = vld [vmem:[%s2503 + $0x2c0] sm:$0xff]
    %v2560 = vld [vmem:[%s2503 + $0x2d0] sm:$0xff]
    %v2561 = vld [vmem:[%s2503 + $0x2d8] sm:$0xff]
    %v2562 = vld [vmem:[%s2503 + $0x2e8] sm:$0xff]
    %v2563 = vld [vmem:[%s2503 + $0x2f0] sm:$0xff]
    %v2564 = vld [vmem:[%s2503 + $0x300] sm:$0xff]
    %v2565 = vld [vmem:[%s2503 + $0x308] sm:$0xff]
    %v2566 = vld [vmem:[%s2503 + $0x318] sm:$0xff]
    %v2567 = vld [vmem:[%s2503 + $0x320] sm:$0xff]
    %v2568 = vpack.c.bf16 %v2505, %v2504
    %v2569 = vpack.c.bf16 %v2507, %v2506
    %v2570 = vpack.c.bf16 %v2509, %v2508
    %v2571 = vpack.c.bf16 %v2511, %v2510
    %v2572 = vpack.c.bf16 %v2513, %v2512
    %v2573 = vpack.c.bf16 %v2515, %v2514
    %v2574 = vpack.c.bf16 %v2517, %v2516
    %v2575 = vpack.c.bf16 %v2519, %v2518
    %v2576 = vpack.c.bf16 %v2521, %v2520
    %v2577 = vpack.c.bf16 %v2523, %v2522
    %v2578 = vpack.c.bf16 %v2525, %v2524
    %v2579 = vpack.c.bf16 %v2527, %v2526
    %v2580 = vpack.c.bf16 %v2529, %v2528
    %v2581 = vpack.c.bf16 %v2531, %v2530
    %v2582 = vpack.c.bf16 %v2533, %v2532
    %v2583 = vpack.c.bf16 %v2535, %v2534
    %v2584 = vpack.c.bf16 %v2537, %v2536
    %v2585 = vpack.c.bf16 %v2539, %v2538
    %v2586 = vpack.c.bf16 %v2541, %v2540
    %v2587 = vpack.c.bf16 %v2543, %v2542
    %v2588 = vpack.c.bf16 %v2545, %v2544
    %v2589 = vpack.c.bf16 %v2547, %v2546
    %v2590 = vpack.c.bf16 %v2549, %v2548
    %v2591 = vpack.c.bf16 %v2551, %v2550
    %v2592 = vpack.c.bf16 %v2553, %v2552
    %v2593 = vpack.c.bf16 %v2555, %v2554
    %v2594 = vpack.c.bf16 %v2557, %v2556
    %v2595 = vpack.c.bf16 %v2559, %v2558
    %v2596 = vpack.c.bf16 %v2561, %v2560
    %v2597 = vpack.c.bf16 %v2563, %v2562
    %v2598 = vpack.c.bf16 %v2565, %v2564
    %v2599 = vpack.c.bf16 %v2567, %v2566
    %2632 = vrot.lane.b32.xlu0 %v2568, 64
    %v2633 = vpop.permute.xlu0 %2632
    %2634 = vrot.lane.b32.xlu0 %v2569, 64
    %v2635 = vpop.permute.xlu0 %2634
    %2636 = vrot.lane.b32.xlu0 %v2570, 64
    %v2637 = vpop.permute.xlu0 %2636
    %2638 = vrot.lane.b32.xlu0 %v2571, 64
    %v2639 = vpop.permute.xlu0 %2638
    %2640 = vrot.lane.b32.xlu0 %v2572, 64
    %v2641 = vpop.permute.xlu0 %2640
    %2642 = vrot.lane.b32.xlu0 %v2573, 64
    %v2643 = vpop.permute.xlu0 %2642
    %2644 = vrot.lane.b32.xlu0 %v2574, 64
    %v2645 = vpop.permute.xlu0 %2644
    %2646 = vrot.lane.b32.xlu0 %v2575, 64
    %v2647 = vpop.permute.xlu0 %2646
    %2648 = vrot.lane.b32.xlu0 %v2576, 64
    %v2649 = vpop.permute.xlu0 %2648
    %2650 = vrot.lane.b32.xlu0 %v2577, 64
    %v2651 = vpop.permute.xlu0 %2650
    %2652 = vrot.lane.b32.xlu0 %v2578, 64
    %v2653 = vpop.permute.xlu0 %2652
    %2654 = vrot.lane.b32.xlu0 %v2579, 64
    %v2655 = vpop.permute.xlu0 %2654
    %2656 = vrot.lane.b32.xlu0 %v2580, 64
    %v2657 = vpop.permute.xlu0 %2656
    %2658 = vrot.lane.b32.xlu0 %v2581, 64
    %v2659 = vpop.permute.xlu0 %2658
    %2660 = vrot.lane.b32.xlu0 %v2582, 64
    %v2661 = vpop.permute.xlu0 %2660
    %2662 = vrot.lane.b32.xlu0 %v2583, 64
    %v2663 = vpop.permute.xlu0 %2662
    %2664 = vrot.lane.b32.xlu0 %v2584, 64
    %v2665 = vpop.permute.xlu0 %2664
    %2666 = vrot.lane.b32.xlu0 %v2585, 64
    %v2667 = vpop.permute.xlu0 %2666
    %2668 = vrot.lane.b32.xlu0 %v2586, 64
    %v2669 = vpop.permute.xlu0 %2668
    %2670 = vrot.lane.b32.xlu0 %v2587, 64
    %v2671 = vpop.permute.xlu0 %2670
    %2672 = vrot.lane.b32.xlu0 %v2588, 64
    %v2673 = vpop.permute.xlu0 %2672
    %2674 = vrot.lane.b32.xlu0 %v2589, 64
    %v2675 = vpop.permute.xlu0 %2674
    %2676 = vrot.lane.b32.xlu0 %v2590, 64
    %v2677 = vpop.permute.xlu0 %2676
    %2678 = vrot.lane.b32.xlu0 %v2591, 64
    %v2679 = vpop.permute.xlu0 %2678
    %2680 = vrot.lane.b32.xlu0 %v2592, 64
    %v2681 = vpop.permute.xlu0 %2680
    %2682 = vrot.lane.b32.xlu0 %v2593, 64
    %v2683 = vpop.permute.xlu0 %2682
    %2684 = vrot.lane.b32.xlu0 %v2594, 64
    %v2685 = vpop.permute.xlu0 %2684
    %2686 = vrot.lane.b32.xlu0 %v2595, 64
    %v2687 = vpop.permute.xlu0 %2686
    %2688 = vrot.lane.b32.xlu0 %v2596, 64
    %v2689 = vpop.permute.xlu0 %2688
    %2690 = vrot.lane.b32.xlu0 %v2597, 64
    %v2691 = vpop.permute.xlu0 %2690
    %2692 = vrot.lane.b32.xlu0 %v2598, 64
    %v2693 = vpop.permute.xlu0 %2692
    %2694 = vrot.lane.b32.xlu0 %v2599, 64
    %v2695 = vpop.permute.xlu0 %2694
    %2728 = vst.msk [vmem:[#allocation3 + $0x8] sm:$0xff] %vm1829, %v2633
    %2729 = vst.msk [vmem:[#allocation3 + $0x20] sm:$0xff] %vm1829, %v2635
    %2730 = vst.msk [vmem:[#allocation3 + $0x38] sm:$0xff] %vm1829, %v2637
    %2731 = vst.msk [vmem:[#allocation3 + $0x50] sm:$0xff] %vm1829, %v2639
    %2732 = vst.msk [vmem:[#allocation3 + $0x68] sm:$0xff] %vm1829, %v2641
    %2733 = vst.msk [vmem:[#allocation3 + $0x80] sm:$0xff] %vm1829, %v2643
    %2734 = vst.msk [vmem:[#allocation3 + $0x98] sm:$0xff] %vm1829, %v2645
    %2735 = vst.msk [vmem:[#allocation3 + $0xb0] sm:$0xff] %vm1829, %v2647
    %2736 = vst.msk [vmem:[#allocation3 + $0xc8] sm:$0xff] %vm1829, %v2649
    %2737 = vst.msk [vmem:[#allocation3 + $0xe0] sm:$0xff] %vm1829, %v2651
    %2738 = vst.msk [vmem:[#allocation3 + $0xf8] sm:$0xff] %vm1829, %v2653
    %2739 = vst.msk [vmem:[#allocation3 + $0x110] sm:$0xff] %vm1829, %v2655
    %2740 = vst.msk [vmem:[#allocation3 + $0x128] sm:$0xff] %vm1829, %v2657
    %2741 = vst.msk [vmem:[#allocation3 + $0x140] sm:$0xff] %vm1829, %v2659
    %2742 = vst.msk [vmem:[#allocation3 + $0x158] sm:$0xff] %vm1829, %v2661
    %2743 = vst.msk [vmem:[#allocation3 + $0x170] sm:$0xff] %vm1829, %v2663
    %2744 = vst.msk [vmem:[#allocation3 + $0x188] sm:$0xff] %vm1829, %v2665
    %2745 = vst.msk [vmem:[#allocation3 + $0x1a0] sm:$0xff] %vm1829, %v2667
    %2746 = vst.msk [vmem:[#allocation3 + $0x1b8] sm:$0xff] %vm1829, %v2669
    %2747 = vst.msk [vmem:[#allocation3 + $0x1d0] sm:$0xff] %vm1829, %v2671
    %2748 = vst.msk [vmem:[#allocation3 + $0x1e8] sm:$0xff] %vm1829, %v2673
    %2749 = vst.msk [vmem:[#allocation3 + $0x200] sm:$0xff] %vm1829, %v2675
    %2750 = vst.msk [vmem:[#allocation3 + $0x218] sm:$0xff] %vm1829, %v2677
    %2751 = vst.msk [vmem:[#allocation3 + $0x230] sm:$0xff] %vm1829, %v2679
    %2752 = vst.msk [vmem:[#allocation3 + $0x248] sm:$0xff] %vm1829, %v2681
    %2753 = vst.msk [vmem:[#allocation3 + $0x260] sm:$0xff] %vm1829, %v2683
    %2754 = vst.msk [vmem:[#allocation3 + $0x278] sm:$0xff] %vm1829, %v2685
    %2755 = vst.msk [vmem:[#allocation3 + $0x290] sm:$0xff] %vm1829, %v2687
    %2756 = vst.msk [vmem:[#allocation3 + $0x2a8] sm:$0xff] %vm1829, %v2689
    %2757 = vst.msk [vmem:[#allocation3 + $0x2c0] sm:$0xff] %vm1829, %v2691
    %2758 = vst.msk [vmem:[#allocation3 + $0x2d8] sm:$0xff] %vm1829, %v2693
    %2759 = vst.msk [vmem:[#allocation3 + $0x2f0] sm:$0xff] %vm1829, %v2695
    %v2760 = vld [vmem:[%s2503 + $0x1] sm:$0xff]
    %v2761 = vld [vmem:[%s2503 + $0x9] sm:$0xff]
    %v2762 = vld [vmem:[%s2503 + $0x19] sm:$0xff]
    %v2763 = vld [vmem:[%s2503 + $0x21] sm:$0xff]
    %v2764 = vld [vmem:[%s2503 + $0x31] sm:$0xff]
    %v2765 = vld [vmem:[%s2503 + $0x39] sm:$0xff]
    %v2766 = vld [vmem:[%s2503 + $0x49] sm:$0xff]
    %v2767 = vld [vmem:[%s2503 + $0x51] sm:$0xff]
    %v2768 = vld [vmem:[%s2503 + $0x61] sm:$0xff]
    %v2769 = vld [vmem:[%s2503 + $0x69] sm:$0xff]
    %v2770 = vld [vmem:[%s2503 + $0x79] sm:$0xff]
    %v2771 = vld [vmem:[%s2503 + $0x81] sm:$0xff]
    %v2772 = vld [vmem:[%s2503 + $0x91] sm:$0xff]
    %v2773 = vld [vmem:[%s2503 + $0x99] sm:$0xff]
    %v2774 = vld [vmem:[%s2503 + $0xa9] sm:$0xff]
    %v2775 = vld [vmem:[%s2503 + $0xb1] sm:$0xff]
    %v2776 = vld [vmem:[%s2503 + $0xc1] sm:$0xff]
    %v2777 = vld [vmem:[%s2503 + $0xc9] sm:$0xff]
    %v2778 = vld [vmem:[%s2503 + $0xd9] sm:$0xff]
    %v2779 = vld [vmem:[%s2503 + $0xe1] sm:$0xff]
    %v2780 = vld [vmem:[%s2503 + $0xf1] sm:$0xff]
    %v2781 = vld [vmem:[%s2503 + $0xf9] sm:$0xff]
    %v2782 = vld [vmem:[%s2503 + $0x109] sm:$0xff]
    %v2783 = vld [vmem:[%s2503 + $0x111] sm:$0xff]
    %v2784 = vld [vmem:[%s2503 + $0x121] sm:$0xff]
    %v2785 = vld [vmem:[%s2503 + $0x129] sm:$0xff]
    %v2786 = vld [vmem:[%s2503 + $0x139] sm:$0xff]
    %v2787 = vld [vmem:[%s2503 + $0x141] sm:$0xff]
    %v2788 = vld [vmem:[%s2503 + $0x151] sm:$0xff]
    %v2789 = vld [vmem:[%s2503 + $0x159] sm:$0xff]
    %v2790 = vld [vmem:[%s2503 + $0x169] sm:$0xff]
    %v2791 = vld [vmem:[%s2503 + $0x171] sm:$0xff]
    %v2792 = vld [vmem:[%s2503 + $0x1b1] sm:$0xff]
    %v2793 = vld [vmem:[%s2503 + $0x1b9] sm:$0xff]
    %v2794 = vld [vmem:[%s2503 + $0x1c9] sm:$0xff]
    %v2795 = vld [vmem:[%s2503 + $0x1d1] sm:$0xff]
    %v2796 = vld [vmem:[%s2503 + $0x1e1] sm:$0xff]
    %v2797 = vld [vmem:[%s2503 + $0x1e9] sm:$0xff]
    %v2798 = vld [vmem:[%s2503 + $0x1f9] sm:$0xff]
    %v2799 = vld [vmem:[%s2503 + $0x201] sm:$0xff]
    %v2800 = vld [vmem:[%s2503 + $0x211] sm:$0xff]
    %v2801 = vld [vmem:[%s2503 + $0x219] sm:$0xff]
    %v2802 = vld [vmem:[%s2503 + $0x229] sm:$0xff]
    %v2803 = vld [vmem:[%s2503 + $0x231] sm:$0xff]
    %v2804 = vld [vmem:[%s2503 + $0x241] sm:$0xff]
    %v2805 = vld [vmem:[%s2503 + $0x249] sm:$0xff]
    %v2806 = vld [vmem:[%s2503 + $0x259] sm:$0xff]
    %v2807 = vld [vmem:[%s2503 + $0x261] sm:$0xff]
    %v2808 = vld [vmem:[%s2503 + $0x271] sm:$0xff]
    %v2809 = vld [vmem:[%s2503 + $0x279] sm:$0xff]
    %v2810 = vld [vmem:[%s2503 + $0x289] sm:$0xff]
    %v2811 = vld [vmem:[%s2503 + $0x291] sm:$0xff]
    %v2812 = vld [vmem:[%s2503 + $0x2a1] sm:$0xff]
    %v2813 = vld [vmem:[%s2503 + $0x2a9] sm:$0xff]
    %v2814 = vld [vmem:[%s2503 + $0x2b9] sm:$0xff]
    %v2815 = vld [vmem:[%s2503 + $0x2c1] sm:$0xff]
    %v2816 = vld [vmem:[%s2503 + $0x2d1] sm:$0xff]
    %v2817 = vld [vmem:[%s2503 + $0x2d9] sm:$0xff]
    %v2818 = vld [vmem:[%s2503 + $0x2e9] sm:$0xff]
    %v2819 = vld [vmem:[%s2503 + $0x2f1] sm:$0xff]
    %v2820 = vld [vmem:[%s2503 + $0x301] sm:$0xff]
    %v2821 = vld [vmem:[%s2503 + $0x309] sm:$0xff]
    %v2822 = vld [vmem:[%s2503 + $0x319] sm:$0xff]
    %v2823 = vld [vmem:[%s2503 + $0x321] sm:$0xff]
    %v2824 = vpack.c.bf16 %v2761, %v2760
    %v2825 = vpack.c.bf16 %v2763, %v2762
    %v2826 = vpack.c.bf16 %v2765, %v2764
    %v2827 = vpack.c.bf16 %v2767, %v2766
    %v2828 = vpack.c.bf16 %v2769, %v2768
    %v2829 = vpack.c.bf16 %v2771, %v2770
    %v2830 = vpack.c.bf16 %v2773, %v2772
    %v2831 = vpack.c.bf16 %v2775, %v2774
    %v2832 = vpack.c.bf16 %v2777, %v2776
    %v2833 = vpack.c.bf16 %v2779, %v2778
    %v2834 = vpack.c.bf16 %v2781, %v2780
    %v2835 = vpack.c.bf16 %v2783, %v2782
    %v2836 = vpack.c.bf16 %v2785, %v2784
    %v2837 = vpack.c.bf16 %v2787, %v2786
    %v2838 = vpack.c.bf16 %v2789, %v2788
    %v2839 = vpack.c.bf16 %v2791, %v2790
    %v2840 = vpack.c.bf16 %v2793, %v2792
    %v2841 = vpack.c.bf16 %v2795, %v2794
    %v2842 = vpack.c.bf16 %v2797, %v2796
    %v2843 = vpack.c.bf16 %v2799, %v2798
    %v2844 = vpack.c.bf16 %v2801, %v2800
    %v2845 = vpack.c.bf16 %v2803, %v2802
    %v2846 = vpack.c.bf16 %v2805, %v2804
    %v2847 = vpack.c.bf16 %v2807, %v2806
    %v2848 = vpack.c.bf16 %v2809, %v2808
    %v2849 = vpack.c.bf16 %v2811, %v2810
    %v2850 = vpack.c.bf16 %v2813, %v2812
    %v2851 = vpack.c.bf16 %v2815, %v2814
    %v2852 = vpack.c.bf16 %v2817, %v2816
    %v2853 = vpack.c.bf16 %v2819, %v2818
    %v2854 = vpack.c.bf16 %v2821, %v2820
    %v2855 = vpack.c.bf16 %v2823, %v2822
    %2888 = vrot.lane.b32.xlu0 %v2824, 96
    %v2889 = vpop.permute.xlu0 %2888
    %2890 = vrot.lane.b32.xlu0 %v2825, 96
    %v2891 = vpop.permute.xlu0 %2890
    %2892 = vrot.lane.b32.xlu0 %v2826, 96
    %v2893 = vpop.permute.xlu0 %2892
    %2894 = vrot.lane.b32.xlu0 %v2827, 96
    %v2895 = vpop.permute.xlu0 %2894
    %2896 = vrot.lane.b32.xlu0 %v2828, 96
    %v2897 = vpop.permute.xlu0 %2896
    %2898 = vrot.lane.b32.xlu0 %v2829, 96
    %v2899 = vpop.permute.xlu0 %2898
    %2900 = vrot.lane.b32.xlu0 %v2830, 96
    %v2901 = vpop.permute.xlu0 %2900
    %2902 = vrot.lane.b32.xlu0 %v2831, 96
    %v2903 = vpop.permute.xlu0 %2902
    %2904 = vrot.lane.b32.xlu0 %v2832, 96
    %v2905 = vpop.permute.xlu0 %2904
    %2906 = vrot.lane.b32.xlu0 %v2833, 96
    %v2907 = vpop.permute.xlu0 %2906
    %2908 = vrot.lane.b32.xlu0 %v2834, 96
    %v2909 = vpop.permute.xlu0 %2908
    %2910 = vrot.lane.b32.xlu0 %v2835, 96
    %v2911 = vpop.permute.xlu0 %2910
    %2912 = vrot.lane.b32.xlu0 %v2836, 96
    %v2913 = vpop.permute.xlu0 %2912
    %2914 = vrot.lane.b32.xlu0 %v2837, 96
    %v2915 = vpop.permute.xlu0 %2914
    %2916 = vrot.lane.b32.xlu0 %v2838, 96
    %v2917 = vpop.permute.xlu0 %2916
    %2918 = vrot.lane.b32.xlu0 %v2839, 96
    %v2919 = vpop.permute.xlu0 %2918
    %2920 = vrot.lane.b32.xlu0 %v2840, 96
    %v2921 = vpop.permute.xlu0 %2920
    %2922 = vrot.lane.b32.xlu0 %v2841, 96
    %v2923 = vpop.permute.xlu0 %2922
    %2924 = vrot.lane.b32.xlu0 %v2842, 96
    %v2925 = vpop.permute.xlu0 %2924
    %2926 = vrot.lane.b32.xlu0 %v2843, 96
    %v2927 = vpop.permute.xlu0 %2926
    %2928 = vrot.lane.b32.xlu0 %v2844, 96
    %v2929 = vpop.permute.xlu0 %2928
    %2930 = vrot.lane.b32.xlu0 %v2845, 96
    %v2931 = vpop.permute.xlu0 %2930
    %2932 = vrot.lane.b32.xlu0 %v2846, 96
    %v2933 = vpop.permute.xlu0 %2932
    %2934 = vrot.lane.b32.xlu0 %v2847, 96
    %v2935 = vpop.permute.xlu0 %2934
    %2936 = vrot.lane.b32.xlu0 %v2848, 96
    %v2937 = vpop.permute.xlu0 %2936
    %2938 = vrot.lane.b32.xlu0 %v2849, 96
    %v2939 = vpop.permute.xlu0 %2938
    %2940 = vrot.lane.b32.xlu0 %v2850, 96
    %v2941 = vpop.permute.xlu0 %2940
    %2942 = vrot.lane.b32.xlu0 %v2851, 96
    %v2943 = vpop.permute.xlu0 %2942
    %2944 = vrot.lane.b32.xlu0 %v2852, 96
    %v2945 = vpop.permute.xlu0 %2944
    %2946 = vrot.lane.b32.xlu0 %v2853, 96
    %v2947 = vpop.permute.xlu0 %2946
    %2948 = vrot.lane.b32.xlu0 %v2854, 96
    %v2949 = vpop.permute.xlu0 %2948
    %2950 = vrot.lane.b32.xlu0 %v2855, 96
    %v2951 = vpop.permute.xlu0 %2950
    %2984 = vst.msk [vmem:[#allocation3 + $0x8] sm:$0xff] %vm2086, %v2889
    %2985 = vst.msk [vmem:[#allocation3 + $0x20] sm:$0xff] %vm2086, %v2891
    %2986 = vst.msk [vmem:[#allocation3 + $0x38] sm:$0xff] %vm2086, %v2893
    %2987 = vst.msk [vmem:[#allocation3 + $0x50] sm:$0xff] %vm2086, %v2895
    %2988 = vst.msk [vmem:[#allocation3 + $0x68] sm:$0xff] %vm2086, %v2897
    %2989 = vst.msk [vmem:[#allocation3 + $0x80] sm:$0xff] %vm2086, %v2899
    %2990 = vst.msk [vmem:[#allocation3 + $0x98] sm:$0xff] %vm2086, %v2901
    %2991 = vst.msk [vmem:[#allocation3 + $0xb0] sm:$0xff] %vm2086, %v2903
    %2992 = vst.msk [vmem:[#allocation3 + $0xc8] sm:$0xff] %vm2086, %v2905
    %2993 = vst.msk [vmem:[#allocation3 + $0xe0] sm:$0xff] %vm2086, %v2907
    %2994 = vst.msk [vmem:[#allocation3 + $0xf8] sm:$0xff] %vm2086, %v2909
    %2995 = vst.msk [vmem:[#allocation3 + $0x110] sm:$0xff] %vm2086, %v2911
    %2996 = vst.msk [vmem:[#allocation3 + $0x128] sm:$0xff] %vm2086, %v2913
    %2997 = vst.msk [vmem:[#allocation3 + $0x140] sm:$0xff] %vm2086, %v2915
    %2998 = vst.msk [vmem:[#allocation3 + $0x158] sm:$0xff] %vm2086, %v2917
    %2999 = vst.msk [vmem:[#allocation3 + $0x170] sm:$0xff] %vm2086, %v2919
    %3000 = vst.msk [vmem:[#allocation3 + $0x188] sm:$0xff] %vm2086, %v2921
    %3001 = vst.msk [vmem:[#allocation3 + $0x1a0] sm:$0xff] %vm2086, %v2923
    %3002 = vst.msk [vmem:[#allocation3 + $0x1b8] sm:$0xff] %vm2086, %v2925
    %3003 = vst.msk [vmem:[#allocation3 + $0x1d0] sm:$0xff] %vm2086, %v2927
    %3004 = vst.msk [vmem:[#allocation3 + $0x1e8] sm:$0xff] %vm2086, %v2929
    %3005 = vst.msk [vmem:[#allocation3 + $0x200] sm:$0xff] %vm2086, %v2931
    %3006 = vst.msk [vmem:[#allocation3 + $0x218] sm:$0xff] %vm2086, %v2933
    %3007 = vst.msk [vmem:[#allocation3 + $0x230] sm:$0xff] %vm2086, %v2935
    %3008 = vst.msk [vmem:[#allocation3 + $0x248] sm:$0xff] %vm2086, %v2937
    %3009 = vst.msk [vmem:[#allocation3 + $0x260] sm:$0xff] %vm2086, %v2939
    %3010 = vst.msk [vmem:[#allocation3 + $0x278] sm:$0xff] %vm2086, %v2941
    %3011 = vst.msk [vmem:[#allocation3 + $0x290] sm:$0xff] %vm2086, %v2943
    %3012 = vst.msk [vmem:[#allocation3 + $0x2a8] sm:$0xff] %vm2086, %v2945
    %3013 = vst.msk [vmem:[#allocation3 + $0x2c0] sm:$0xff] %vm2086, %v2947
    %3014 = vst.msk [vmem:[#allocation3 + $0x2d8] sm:$0xff] %vm2086, %v2949
    %3015 = vst.msk [vmem:[#allocation3 + $0x2f0] sm:$0xff] %vm2086, %v2951
    %v3016 = vld [vmem:[%s2503 + $0x2] sm:$0xff]
    %v3017 = vld [vmem:[%s2503 + $0xa] sm:$0xff]
    %v3018 = vld [vmem:[%s2503 + $0x1a] sm:$0xff]
    %v3019 = vld [vmem:[%s2503 + $0x22] sm:$0xff]
    %v3020 = vld [vmem:[%s2503 + $0x32] sm:$0xff]
    %v3021 = vld [vmem:[%s2503 + $0x3a] sm:$0xff]
    %v3022 = vld [vmem:[%s2503 + $0x4a] sm:$0xff]
    %v3023 = vld [vmem:[%s2503 + $0x52] sm:$0xff]
    %v3024 = vld [vmem:[%s2503 + $0x62] sm:$0xff]
    %v3025 = vld [vmem:[%s2503 + $0x6a] sm:$0xff]
    %v3026 = vld [vmem:[%s2503 + $0x7a] sm:$0xff]
    %v3027 = vld [vmem:[%s2503 + $0x82] sm:$0xff]
    %v3028 = vld [vmem:[%s2503 + $0x92] sm:$0xff]
    %v3029 = vld [vmem:[%s2503 + $0x9a] sm:$0xff]
    %v3030 = vld [vmem:[%s2503 + $0xaa] sm:$0xff]
    %v3031 = vld [vmem:[%s2503 + $0xb2] sm:$0xff]
    %v3032 = vld [vmem:[%s2503 + $0xc2] sm:$0xff]
    %v3033 = vld [vmem:[%s2503 + $0xca] sm:$0xff]
    %v3034 = vld [vmem:[%s2503 + $0xda] sm:$0xff]
    %v3035 = vld [vmem:[%s2503 + $0xe2] sm:$0xff]
    %v3036 = vld [vmem:[%s2503 + $0xf2] sm:$0xff]
    %v3037 = vld [vmem:[%s2503 + $0xfa] sm:$0xff]
    %v3038 = vld [vmem:[%s2503 + $0x10a] sm:$0xff]
    %v3039 = vld [vmem:[%s2503 + $0x112] sm:$0xff]
    %v3040 = vld [vmem:[%s2503 + $0x122] sm:$0xff]
    %v3041 = vld [vmem:[%s2503 + $0x12a] sm:$0xff]
    %v3042 = vld [vmem:[%s2503 + $0x13a] sm:$0xff]
    %v3043 = vld [vmem:[%s2503 + $0x142] sm:$0xff]
    %v3044 = vld [vmem:[%s2503 + $0x152] sm:$0xff]
    %v3045 = vld [vmem:[%s2503 + $0x15a] sm:$0xff]
    %v3046 = vld [vmem:[%s2503 + $0x16a] sm:$0xff]
    %v3047 = vld [vmem:[%s2503 + $0x172] sm:$0xff]
    %v3048 = vld [vmem:[%s2503 + $0x1b2] sm:$0xff]
    %v3049 = vld [vmem:[%s2503 + $0x1ba] sm:$0xff]
    %v3050 = vld [vmem:[%s2503 + $0x1ca] sm:$0xff]
    %v3051 = vld [vmem:[%s2503 + $0x1d2] sm:$0xff]
    %v3052 = vld [vmem:[%s2503 + $0x1e2] sm:$0xff]
    %v3053 = vld [vmem:[%s2503 + $0x1ea] sm:$0xff]
    %v3054 = vld [vmem:[%s2503 + $0x1fa] sm:$0xff]
    %v3055 = vld [vmem:[%s2503 + $0x202] sm:$0xff]
    %v3056 = vld [vmem:[%s2503 + $0x212] sm:$0xff]
    %v3057 = vld [vmem:[%s2503 + $0x21a] sm:$0xff]
    %v3058 = vld [vmem:[%s2503 + $0x22a] sm:$0xff]
    %v3059 = vld [vmem:[%s2503 + $0x232] sm:$0xff]
    %v3060 = vld [vmem:[%s2503 + $0x242] sm:$0xff]
    %v3061 = vld [vmem:[%s2503 + $0x24a] sm:$0xff]
    %v3062 = vld [vmem:[%s2503 + $0x25a] sm:$0xff]
    %v3063 = vld [vmem:[%s2503 + $0x262] sm:$0xff]
    %v3064 = vld [vmem:[%s2503 + $0x272] sm:$0xff]
    %v3065 = vld [vmem:[%s2503 + $0x27a] sm:$0xff]
    %v3066 = vld [vmem:[%s2503 + $0x28a] sm:$0xff]
    %v3067 = vld [vmem:[%s2503 + $0x292] sm:$0xff]
    %v3068 = vld [vmem:[%s2503 + $0x2a2] sm:$0xff]
    %v3069 = vld [vmem:[%s2503 + $0x2aa] sm:$0xff]
    %v3070 = vld [vmem:[%s2503 + $0x2ba] sm:$0xff]
    %v3071 = vld [vmem:[%s2503 + $0x2c2] sm:$0xff]
    %v3072 = vld [vmem:[%s2503 + $0x2d2] sm:$0xff]
    %v3073 = vld [vmem:[%s2503 + $0x2da] sm:$0xff]
    %v3074 = vld [vmem:[%s2503 + $0x2ea] sm:$0xff]
    %v3075 = vld [vmem:[%s2503 + $0x2f2] sm:$0xff]
    %v3076 = vld [vmem:[%s2503 + $0x302] sm:$0xff]
    %v3077 = vld [vmem:[%s2503 + $0x30a] sm:$0xff]
    %v3078 = vld [vmem:[%s2503 + $0x31a] sm:$0xff]
    %v3079 = vld [vmem:[%s2503 + $0x322] sm:$0xff]
    %v3080 = vpack.c.bf16 %v3017, %v3016
    %v3081 = vpack.c.bf16 %v3019, %v3018
    %v3082 = vpack.c.bf16 %v3021, %v3020
    %v3083 = vpack.c.bf16 %v3023, %v3022
    %v3084 = vpack.c.bf16 %v3025, %v3024
    %v3085 = vpack.c.bf16 %v3027, %v3026
    %v3086 = vpack.c.bf16 %v3029, %v3028
    %v3087 = vpack.c.bf16 %v3031, %v3030
    %v3088 = vpack.c.bf16 %v3033, %v3032
    %v3089 = vpack.c.bf16 %v3035, %v3034
    %v3090 = vpack.c.bf16 %v3037, %v3036
    %v3091 = vpack.c.bf16 %v3039, %v3038
    %v3092 = vpack.c.bf16 %v3041, %v3040
    %v3093 = vpack.c.bf16 %v3043, %v3042
    %v3094 = vpack.c.bf16 %v3045, %v3044
    %v3095 = vpack.c.bf16 %v3047, %v3046
    %v3096 = vpack.c.bf16 %v3049, %v3048
    %v3097 = vpack.c.bf16 %v3051, %v3050
    %v3098 = vpack.c.bf16 %v3053, %v3052
    %v3099 = vpack.c.bf16 %v3055, %v3054
    %v3100 = vpack.c.bf16 %v3057, %v3056
    %v3101 = vpack.c.bf16 %v3059, %v3058
    %v3102 = vpack.c.bf16 %v3061, %v3060
    %v3103 = vpack.c.bf16 %v3063, %v3062
    %v3104 = vpack.c.bf16 %v3065, %v3064
    %v3105 = vpack.c.bf16 %v3067, %v3066
    %v3106 = vpack.c.bf16 %v3069, %v3068
    %v3107 = vpack.c.bf16 %v3071, %v3070
    %v3108 = vpack.c.bf16 %v3073, %v3072
    %v3109 = vpack.c.bf16 %v3075, %v3074
    %v3110 = vpack.c.bf16 %v3077, %v3076
    %v3111 = vpack.c.bf16 %v3079, %v3078
    %3112 = vst.msk [vmem:[#allocation3 + $0x10] sm:$0xff] %vm502, %v3080
    %3113 = vst.msk [vmem:[#allocation3 + $0x28] sm:$0xff] %vm502, %v3081
    %3114 = vst.msk [vmem:[#allocation3 + $0x40] sm:$0xff] %vm502, %v3082
    %3115 = vst.msk [vmem:[#allocation3 + $0x58] sm:$0xff] %vm502, %v3083
    %3116 = vst.msk [vmem:[#allocation3 + $0x70] sm:$0xff] %vm502, %v3084
    %3117 = vst.msk [vmem:[#allocation3 + $0x88] sm:$0xff] %vm502, %v3085
    %3118 = vst.msk [vmem:[#allocation3 + $0xa0] sm:$0xff] %vm502, %v3086
    %3119 = vst.msk [vmem:[#allocation3 + $0xb8] sm:$0xff] %vm502, %v3087
    %3120 = vst.msk [vmem:[#allocation3 + $0xd0] sm:$0xff] %vm502, %v3088
    %3121 = vst.msk [vmem:[#allocation3 + $0xe8] sm:$0xff] %vm502, %v3089
    %3122 = vst.msk [vmem:[#allocation3 + $0x100] sm:$0xff] %vm502, %v3090
    %3123 = vst.msk [vmem:[#allocation3 + $0x118] sm:$0xff] %vm502, %v3091
    %3124 = vst.msk [vmem:[#allocation3 + $0x130] sm:$0xff] %vm502, %v3092
    %3125 = vst.msk [vmem:[#allocation3 + $0x148] sm:$0xff] %vm502, %v3093
    %3126 = vst.msk [vmem:[#allocation3 + $0x160] sm:$0xff] %vm502, %v3094
    %3127 = vst.msk [vmem:[#allocation3 + $0x178] sm:$0xff] %vm502, %v3095
    %3128 = vst.msk [vmem:[#allocation3 + $0x190] sm:$0xff] %vm502, %v3096
    %3129 = vst.msk [vmem:[#allocation3 + $0x1a8] sm:$0xff] %vm502, %v3097
    %3130 = vst.msk [vmem:[#allocation3 + $0x1c0] sm:$0xff] %vm502, %v3098
    %3131 = vst.msk [vmem:[#allocation3 + $0x1d8] sm:$0xff] %vm502, %v3099
    %3132 = vst.msk [vmem:[#allocation3 + $0x1f0] sm:$0xff] %vm502, %v3100
    %3133 = vst.msk [vmem:[#allocation3 + $0x208] sm:$0xff] %vm502, %v3101
    %3134 = vst.msk [vmem:[#allocation3 + $0x220] sm:$0xff] %vm502, %v3102
    %3135 = vst.msk [vmem:[#allocation3 + $0x238] sm:$0xff] %vm502, %v3103
    %3136 = vst.msk [vmem:[#allocation3 + $0x250] sm:$0xff] %vm502, %v3104
    %3137 = vst.msk [vmem:[#allocation3 + $0x268] sm:$0xff] %vm502, %v3105
    %3138 = vst.msk [vmem:[#allocation3 + $0x280] sm:$0xff] %vm502, %v3106
    %3139 = vst.msk [vmem:[#allocation3 + $0x298] sm:$0xff] %vm502, %v3107
    %3140 = vst.msk [vmem:[#allocation3 + $0x2b0] sm:$0xff] %vm502, %v3108
    %3141 = vst.msk [vmem:[#allocation3 + $0x2c8] sm:$0xff] %vm502, %v3109
    %3142 = vst.msk [vmem:[#allocation3 + $0x2e0] sm:$0xff] %vm502, %v3110
    %3143 = vst.msk [vmem:[#allocation3 + $0x2f8] sm:$0xff] %vm502, %v3111
    %v3144 = vld [vmem:[#allocation3] sm:$0xff]
    %v3145 = vld [vmem:[#allocation3 + $0x8] sm:$0xff]
    %v3146 = vld [vmem:[#allocation3 + $0x10] sm:$0xff]
    %v3147 = vld [vmem:[#allocation3 + $0x18] sm:$0xff]
    %v3148 = vld [vmem:[#allocation3 + $0x20] sm:$0xff]
    %v3149 = vld [vmem:[#allocation3 + $0x28] sm:$0xff]
    %v3150 = vld [vmem:[#allocation3 + $0x30] sm:$0xff]
    %v3151 = vld [vmem:[#allocation3 + $0x38] sm:$0xff]
    %v3152 = vld [vmem:[#allocation3 + $0x40] sm:$0xff]
    %v3153 = vld [vmem:[#allocation3 + $0x48] sm:$0xff]
    %v3154 = vld [vmem:[#allocation3 + $0x50] sm:$0xff]
    %v3155 = vld [vmem:[#allocation3 + $0x58] sm:$0xff]
    %v3156 = vld [vmem:[#allocation3 + $0x60] sm:$0xff]
    %v3157 = vld [vmem:[#allocation3 + $0x68] sm:$0xff]
    %v3158 = vld [vmem:[#allocation3 + $0x70] sm:$0xff]
    %v3159 = vld [vmem:[#allocation3 + $0x78] sm:$0xff]
    %v3160 = vld [vmem:[#allocation3 + $0x80] sm:$0xff]
    %v3161 = vld [vmem:[#allocation3 + $0x88] sm:$0xff]
    %v3162 = vld [vmem:[#allocation3 + $0x90] sm:$0xff]
    %v3163 = vld [vmem:[#allocation3 + $0x98] sm:$0xff]
    %v3164 = vld [vmem:[#allocation3 + $0xa0] sm:$0xff]
    %v3165 = vld [vmem:[#allocation3 + $0xa8] sm:$0xff]
    %v3166 = vld [vmem:[#allocation3 + $0xb0] sm:$0xff]
    %v3167 = vld [vmem:[#allocation3 + $0xb8] sm:$0xff]
    %v3168 = vld [vmem:[#allocation3 + $0xc0] sm:$0xff]
    %v3169 = vld [vmem:[#allocation3 + $0xc8] sm:$0xff]
    %v3170 = vld [vmem:[#allocation3 + $0xd0] sm:$0xff]
    %v3171 = vld [vmem:[#allocation3 + $0xd8] sm:$0xff]
    %v3172 = vld [vmem:[#allocation3 + $0xe0] sm:$0xff]
    %v3173 = vld [vmem:[#allocation3 + $0xe8] sm:$0xff]
    %v3174 = vld [vmem:[#allocation3 + $0xf0] sm:$0xff]
    %v3175 = vld [vmem:[#allocation3 + $0xf8] sm:$0xff]
    %v3176 = vld [vmem:[#allocation3 + $0x100] sm:$0xff]
    %v3177 = vld [vmem:[#allocation3 + $0x108] sm:$0xff]
    %v3178 = vld [vmem:[#allocation3 + $0x110] sm:$0xff]
    %v3179 = vld [vmem:[#allocation3 + $0x118] sm:$0xff]
    %v3180 = vld [vmem:[#allocation3 + $0x120] sm:$0xff]
    %v3181 = vld [vmem:[#allocation3 + $0x128] sm:$0xff]
    %v3182 = vld [vmem:[#allocation3 + $0x130] sm:$0xff]
    %v3183 = vld [vmem:[#allocation3 + $0x138] sm:$0xff]
    %v3184 = vld [vmem:[#allocation3 + $0x140] sm:$0xff]
    %v3185 = vld [vmem:[#allocation3 + $0x148] sm:$0xff]
    %v3186 = vld [vmem:[#allocation3 + $0x150] sm:$0xff]
    %v3187 = vld [vmem:[#allocation3 + $0x158] sm:$0xff]
    %v3188 = vld [vmem:[#allocation3 + $0x160] sm:$0xff]
    %v3189 = vld [vmem:[#allocation3 + $0x168] sm:$0xff]
    %v3190 = vld [vmem:[#allocation3 + $0x170] sm:$0xff]
    %v3191 = vld [vmem:[#allocation3 + $0x178] sm:$0xff]
    %v3192 = vld [vmem:[#allocation3 + $0x180] sm:$0xff]
    %v3193 = vld [vmem:[#allocation3 + $0x188] sm:$0xff]
    %v3194 = vld [vmem:[#allocation3 + $0x190] sm:$0xff]
    %v3195 = vld [vmem:[#allocation3 + $0x198] sm:$0xff]
    %v3196 = vld [vmem:[#allocation3 + $0x1a0] sm:$0xff]
    %v3197 = vld [vmem:[#allocation3 + $0x1a8] sm:$0xff]
    %v3198 = vld [vmem:[#allocation3 + $0x1b0] sm:$0xff]
    %v3199 = vld [vmem:[#allocation3 + $0x1b8] sm:$0xff]
    %v3200 = vld [vmem:[#allocation3 + $0x1c0] sm:$0xff]
    %v3201 = vld [vmem:[#allocation3 + $0x1c8] sm:$0xff]
    %v3202 = vld [vmem:[#allocation3 + $0x1d0] sm:$0xff]
    %v3203 = vld [vmem:[#allocation3 + $0x1d8] sm:$0xff]
    %v3204 = vld [vmem:[#allocation3 + $0x1e0] sm:$0xff]
    %v3205 = vld [vmem:[#allocation3 + $0x1e8] sm:$0xff]
    %v3206 = vld [vmem:[#allocation3 + $0x1f0] sm:$0xff]
    %v3207 = vld [vmem:[#allocation3 + $0x1f8] sm:$0xff]
    %v3208 = vld [vmem:[#allocation3 + $0x200] sm:$0xff]
    %v3209 = vld [vmem:[#allocation3 + $0x208] sm:$0xff]
    %v3210 = vld [vmem:[#allocation3 + $0x210] sm:$0xff]
    %v3211 = vld [vmem:[#allocation3 + $0x218] sm:$0xff]
    %v3212 = vld [vmem:[#allocation3 + $0x220] sm:$0xff]
    %v3213 = vld [vmem:[#allocation3 + $0x228] sm:$0xff]
    %v3214 = vld [vmem:[#allocation3 + $0x230] sm:$0xff]
    %v3215 = vld [vmem:[#allocation3 + $0x238] sm:$0xff]
    %v3216 = vld [vmem:[#allocation3 + $0x240] sm:$0xff]
    %v3217 = vld [vmem:[#allocation3 + $0x248] sm:$0xff]
    %v3218 = vld [vmem:[#allocation3 + $0x250] sm:$0xff]
    %v3219 = vld [vmem:[#allocation3 + $0x258] sm:$0xff]
    %v3220 = vld [vmem:[#allocation3 + $0x260] sm:$0xff]
    %v3221 = vld [vmem:[#allocation3 + $0x268] sm:$0xff]
    %v3222 = vld [vmem:[#allocation3 + $0x270] sm:$0xff]
    %v3223 = vld [vmem:[#allocation3 + $0x278] sm:$0xff]
    %v3224 = vld [vmem:[#allocation3 + $0x280] sm:$0xff]
    %v3225 = vld [vmem:[#allocation3 + $0x288] sm:$0xff]
    %v3226 = vld [vmem:[#allocation3 + $0x290] sm:$0xff]
    %v3227 = vld [vmem:[#allocation3 + $0x298] sm:$0xff]
    %v3228 = vld [vmem:[#allocation3 + $0x2a0] sm:$0xff]
    %v3229 = vld [vmem:[#allocation3 + $0x2a8] sm:$0xff]
    %v3230 = vld [vmem:[#allocation3 + $0x2b0] sm:$0xff]
    %v3231 = vld [vmem:[#allocation3 + $0x2b8] sm:$0xff]
    %v3232 = vld [vmem:[#allocation3 + $0x2c0] sm:$0xff]
    %v3233 = vld [vmem:[#allocation3 + $0x2c8] sm:$0xff]
    %v3234 = vld [vmem:[#allocation3 + $0x2d0] sm:$0xff]
    %v3235 = vld [vmem:[#allocation3 + $0x2d8] sm:$0xff]
    %v3236 = vld [vmem:[#allocation3 + $0x2e0] sm:$0xff]
    %v3237 = vld [vmem:[#allocation3 + $0x2e8] sm:$0xff]
    %v3238 = vld [vmem:[#allocation3 + $0x2f0] sm:$0xff]
    %v3239 = vld [vmem:[#allocation3 + $0x2f8] sm:$0xff]
    %v3240 = vld [vmem:[%s4] sm:$0xf]
    %v3241 = vld [vmem:[%s4 + $0x4] sm:$0xf]
    %v3242 = vld [vmem:[%s4 + $0x8] sm:$0xf]
    %v3243 = vld [vmem:[%s4 + $0xc] sm:$0xf]
    %v3244 = vld [vmem:[%s4 + $0x10] sm:$0xf]
    %v3245 = vld [vmem:[%s4 + $0x14] sm:$0xf]
    %v3246 = vld [vmem:[%s4 + $0x18] sm:$0xf]
    %v3247 = vld [vmem:[%s4 + $0x1c] sm:$0xf]
    %v3248 = vld [vmem:[%s4 + $0x20] sm:$0xf]
    %v3249 = vld [vmem:[%s4 + $0x24] sm:$0xf]
    %v3250 = vld [vmem:[%s4 + $0x28] sm:$0xf]
    %v3251 = vld [vmem:[%s4 + $0x2c] sm:$0xf]
    %v3252 = vld [vmem:[%s4 + $0x30] sm:$0xf]
    %v3253 = vld [vmem:[%s4 + $0x34] sm:$0xf]
    %v3254 = vld [vmem:[%s4 + $0x38] sm:$0xf]
    %v3255 = vld [vmem:[%s4 + $0x3c] sm:$0xf]
    %v3256 = vld [vmem:[%s4 + $0x40] sm:$0xf]
    %v3257 = vld [vmem:[%s4 + $0x44] sm:$0xf]
    %v3258 = vld [vmem:[%s4 + $0x48] sm:$0xf]
    %v3259 = vld [vmem:[%s4 + $0x4c] sm:$0xf]
    %v3260 = vld [vmem:[%s4 + $0x50] sm:$0xf]
    %v3261 = vld [vmem:[%s4 + $0x54] sm:$0xf]
    %v3262 = vld [vmem:[%s4 + $0x58] sm:$0xf]
    %v3263 = vld [vmem:[%s4 + $0x5c] sm:$0xf]
    %v3264 = vld [vmem:[%s4 + $0x60] sm:$0xf]
    %v3265 = vld [vmem:[%s4 + $0x64] sm:$0xf]
    %v3266 = vld [vmem:[%s4 + $0x68] sm:$0xf]
    %v3267 = vld [vmem:[%s4 + $0x6c] sm:$0xf]
    %v3268 = vld [vmem:[%s4 + $0x70] sm:$0xf]
    %v3269 = vld [vmem:[%s4 + $0x74] sm:$0xf]
    %v3270 = vld [vmem:[%s4 + $0x78] sm:$0xf]
    %v3271 = vld [vmem:[%s4 + $0x7c] sm:$0xf]
    %v3272 = vld [vmem:[%s4 + $0x80] sm:$0xf]
    %v3273 = vld [vmem:[%s4 + $0x84] sm:$0xf]
    %v3274 = vld [vmem:[%s4 + $0x88] sm:$0xf]
    %v3275 = vld [vmem:[%s4 + $0x8c] sm:$0xf]
    %v3312 = vunpack.c.l.b16 %v3240
    %v3313 = vunpack.c.l.b16 %v3241
    %v3314 = vunpack.c.l.b16 %v3242
    %v3315 = vunpack.c.l.b16 %v3243
    %v3316 = vunpack.c.l.b16 %v3244
    %v3317 = vunpack.c.l.b16 %v3245
    %v3318 = vunpack.c.l.b16 %v3246
    %v3319 = vunpack.c.l.b16 %v3247
    %v3320 = vunpack.c.l.b16 %v3248
    %v3321 = vunpack.c.l.b16 %v3249
    %v3322 = vunpack.c.l.b16 %v3250
    %v3323 = vunpack.c.l.b16 %v3251
    %v3324 = vunpack.c.l.b16 %v3252
    %v3325 = vunpack.c.l.b16 %v3253
    %v3326 = vunpack.c.l.b16 %v3254
    %v3327 = vunpack.c.l.b16 %v3255
    %v3328 = vunpack.c.l.b16 %v3256
    %v3329 = vunpack.c.l.b16 %v3257
    %v3330 = vunpack.c.l.b16 %v3258
    %v3331 = vunpack.c.l.b16 %v3259
    %v3332 = vunpack.c.l.b16 %v3260
    %v3333 = vunpack.c.l.b16 %v3261
    %v3334 = vunpack.c.l.b16 %v3262
    %v3335 = vunpack.c.l.b16 %v3263
    %v3336 = vunpack.c.l.b16 %v3264
    %v3337 = vunpack.c.l.b16 %v3265
    %v3338 = vunpack.c.l.b16 %v3266
    %v3339 = vunpack.c.l.b16 %v3267
    %v3340 = vunpack.c.l.b16 %v3268
    %v3341 = vunpack.c.l.b16 %v3269
    %v3342 = vunpack.c.l.b16 %v3270
    %v3343 = vunpack.c.l.b16 %v3271
    %v3344 = vunpack.c.l.b16 %v3272
    %v3345 = vunpack.c.l.b16 %v3273
    %v3346 = vunpack.c.l.b16 %v3274
    %v3347 = vunpack.c.l.b16 %v3275
    %v3348 = vpack.c.b16 %v3313, %v3312
    %v3349 = vpack.c.b16 %v3315, %v3314
    %v3350 = vpack.c.b16 %v3317, %v3316
    %v3351 = vpack.c.b16 %v3319, %v3318
    %v3352 = vpack.c.b16 %v3321, %v3320
    %v3353 = vpack.c.b16 %v3323, %v3322
    %v3354 = vpack.c.b16 %v3325, %v3324
    %v3355 = vpack.c.b16 %v3327, %v3326
    %v3356 = vpack.c.b16 %v3329, %v3328
    %v3357 = vpack.c.b16 %v3331, %v3330
    %v3358 = vpack.c.b16 %v3333, %v3332
    %v3359 = vpack.c.b16 %v3335, %v3334
    %v3360 = vpack.c.b16 %v3337, %v3336
    %v3361 = vpack.c.b16 %v3339, %v3338
    %v3362 = vpack.c.b16 %v3341, %v3340
    %v3363 = vpack.c.b16 %v3343, %v3342
    %v3364 = vpack.c.b16 %v3345, %v3344
    %v3365 = vpack.c.b16 %v3347, %v3346
    %v3385 = vsel %vm502, %v3146, 0
    %v3388 = vsel %vm502, %v3149, 0
    %v3391 = vsel %vm502, %v3152, 0
    %v3394 = vsel %vm502, %v3155, 0
    %v3397 = vsel %vm502, %v3158, 0
    %v3400 = vsel %vm502, %v3161, 0
    %v3403 = vsel %vm502, %v3164, 0
    %v3406 = vsel %vm502, %v3167, 0
    %v3409 = vsel %vm502, %v3170, 0
    %v3412 = vsel %vm502, %v3173, 0
    %v3415 = vsel %vm502, %v3176, 0
    %v3418 = vsel %vm502, %v3179, 0
    %v3421 = vsel %vm502, %v3182, 0
    %v3424 = vsel %vm502, %v3185, 0
    %v3427 = vsel %vm502, %v3188, 0
    %v3430 = vsel %vm502, %v3191, 0
    %v3433 = vsel %vm502, %v3194, 0
    %v3436 = vsel %vm502, %v3197, 0
    %v3439 = vsel %vm502, %v3200, 0
    %v3442 = vsel %vm502, %v3203, 0
    %v3445 = vsel %vm502, %v3206, 0
    %v3448 = vsel %vm502, %v3209, 0
    %v3451 = vsel %vm502, %v3212, 0
    %v3454 = vsel %vm502, %v3215, 0
    %v3457 = vsel %vm502, %v3218, 0
    %v3460 = vsel %vm502, %v3221, 0
    %v3463 = vsel %vm502, %v3224, 0
    %v3466 = vsel %vm502, %v3227, 0
    %v3469 = vsel %vm502, %v3230, 0
    %v3472 = vsel %vm502, %v3233, 0
    %v3475 = vsel %vm502, %v3236, 0
    %v3478 = vsel %vm502, %v3239, 0
    %3480 = vmatprep.subr.bf16.mxu0 0
    %3481 = vmatpush1.bf16.msra.mxu0 %v3348
    %3482 = vmatprep.subr.bf16.mxu0 0
    %3483 = vmatpush1.bf16.msra.mxu0 %v3349
    %3484 = vmatprep.subr.bf16.mxu0 0
    %3485 = vmatpush1.bf16.msra.mxu0 %v3350
    %3486 = vmatprep.subr.bf16.mxu0 0
    %3487 = vmatpush1.bf16.msra.mxu0 %v3351
    %3488 = vmatprep.subr.bf16.mxu0 0
    %3489 = vmatpush1.bf16.msra.mxu0 %v3352
    %3490 = vmatprep.subr.bf16.mxu0 0
    %3491 = vmatpush1.bf16.msra.mxu0 %v3353
    %3492 = vmatprep.subr.bf16.mxu0 0
    %3493 = vmatpush1.bf16.msra.mxu0 %v3354
    %3494 = vmatprep.subr.bf16.mxu0 0
    %3495 = vmatpush1.bf16.msra.mxu0 %v3355
    %3496 = vmatprep.subr.bf16.mxu0 0
    %3497 = vmatpush1.bf16.msra.mxu0 %v3356
    %3498 = vmatprep.subr.bf16.mxu0 0
    %3499 = vmatpush1.bf16.msra.mxu0 %v3357
    %3500 = vmatprep.subr.bf16.mxu0 0
    %3501 = vmatpush1.bf16.msra.mxu0 %v3358
    %3502 = vmatprep.subr.bf16.mxu0 0
    %3503 = vmatpush1.bf16.msra.mxu0 %v3359
    %3504 = vmatprep.subr.bf16.mxu0 0
    %3505 = vmatpush1.bf16.msra.mxu0 %v3360
    %3506 = vmatprep.subr.bf16.mxu0 0
    %3507 = vmatpush1.bf16.msra.mxu0 %v3361
    %3508 = vmatprep.subr.bf16.mxu0 0
    %3509 = vmatpush1.bf16.msra.mxu0 %v3362
    %3510 = vmatprep.subr.bf16.mxu0 0
    %3511 = vmatpush1.bf16.msra.mxu0 %v3363
    %3512 = vmatprep.mubr.bf16.mxu0 %v3145
    %3513 = vmatmul.mubr.bf16.gmra.mrb[0].mxu0 %v3144
    %v3514 = vpop.f32.mrb[0].mxu0
    %v3515 = vadd.f32 0.0, %v3514
    %v3516 = vpop.f32.mrb[0].mxu0
    %v3517 = vpop.f32.mrb[0].mxu0
    %v3518 = vadd.f32 0.0, %v3517
    %v3519 = vpop.f32.mrb[0].mxu0
    %3520 = vmatprep.mubr.bf16.mxu0 %v3148
    %3521 = vmatmul.mubr.bf16.gmra.mrb[0].mxu0 %v3147
    %v3522 = vpop.f32.mrb[0].mxu0
    %v3523 = vadd.f32 0.0, %v3522
    %v3524 = vpop.f32.mrb[0].mxu0
    %v3525 = vpop.f32.mrb[0].mxu0
    %v3526 = vadd.f32 0.0, %v3525
    %v3527 = vpop.f32.mrb[0].mxu0
    %3528 = vmatprep.mubr.bf16.mxu0 %v3151
    %3529 = vmatmul.mubr.bf16.gmra.mrb[0].mxu0 %v3150
    %v3530 = vpop.f32.mrb[0].mxu0
    %v3531 = vadd.f32 0.0, %v3530
    %v3532 = vpop.f32.mrb[0].mxu0
    %v3533 = vpop.f32.mrb[0].mxu0
    %v3534 = vadd.f32 0.0, %v3533
    %v3535 = vpop.f32.mrb[0].mxu0
    %3536 = vmatprep.mubr.bf16.mxu0 %v3154
    %3537 = vmatmul.mubr.bf16.gmra.mrb[0].mxu0 %v3153
    %v3538 = vpop.f32.mrb[0].mxu0
    %v3539 = vadd.f32 0.0, %v3538
    %v3540 = vpop.f32.mrb[0].mxu0
    %v3541 = vpop.f32.mrb[0].mxu0
    %v3542 = vadd.f32 0.0, %v3541
    %v3543 = vpop.f32.mrb[0].mxu0
    %3544 = vmatprep.mubr.bf16.mxu0 %v3157
    %3545 = vmatmul.mubr.bf16.gmra.mrb[0].mxu0 %v3156
    %v3546 = vpop.f32.mrb[0].mxu0
    %v3547 = vadd.f32 0.0, %v3546
    %v3548 = vpop.f32.mrb[0].mxu0
    %v3549 = vpop.f32.mrb[0].mxu0
    %v3550 = vadd.f32 0.0, %v3549
    %v3551 = vpop.f32.mrb[0].mxu0
    %3552 = vmatprep.mubr.bf16.mxu0 %v3160
    %3553 = vmatmul.mubr.bf16.gmra.mrb[0].mxu0 %v3159
    %v3554 = vpop.f32.mrb[0].mxu0
    %v3555 = vadd.f32 0.0, %v3554
    %v3556 = vpop.f32.mrb[0].mxu0
    %v3557 = vpop.f32.mrb[0].mxu0
    %v3558 = vadd.f32 0.0, %v3557
    %v3559 = vpop.f32.mrb[0].mxu0
    %3560 = vmatprep.mubr.bf16.mxu0 %v3163
    %3561 = vmatmul.mubr.bf16.gmra.mrb[0].mxu0 %v3162
    %v3562 = vpop.f32.mrb[0].mxu0
    %v3563 = vadd.f32 0.0, %v3562
    %v3564 = vpop.f32.mrb[0].mxu0
    %v3565 = vpop.f32.mrb[0].mxu0
    %v3566 = vadd.f32 0.0, %v3565
    %v3567 = vpop.f32.mrb[0].mxu0
    %3568 = vmatprep.mubr.bf16.mxu0 %v3166
    %3569 = vmatmul.mubr.bf16.gmra.mrb[0].mxu0 %v3165
    %v3570 = vpop.f32.mrb[0].mxu0
    %v3571 = vadd.f32 0.0, %v3570
    %v3572 = vpop.f32.mrb[0].mxu0
    %v3573 = vpop.f32.mrb[0].mxu0
    %v3574 = vadd.f32 0.0, %v3573
    %v3575 = vpop.f32.mrb[0].mxu0
    %3576 = vmatprep.mubr.bf16.mxu0 %v3169
    %3577 = vmatmul.mubr.bf16.gmra.mrb[0].mxu0 %v3168
    %v3578 = vpop.f32.mrb[0].mxu0
    %v3579 = vadd.f32 0.0, %v3578
    %v3580 = vpop.f32.mrb[0].mxu0
    %v3581 = vpop.f32.mrb[0].mxu0
    %v3582 = vadd.f32 0.0, %v3581
    %v3583 = vpop.f32.mrb[0].mxu0
    %3584 = vmatprep.mubr.bf16.mxu0 %v3172
    %3585 = vmatmul.mubr.bf16.gmra.mrb[0].mxu0 %v3171
    %v3586 = vpop.f32.mrb[0].mxu0
    %v3587 = vadd.f32 0.0, %v3586
    %v3588 = vpop.f32.mrb[0].mxu0
    %v3589 = vpop.f32.mrb[0].mxu0
    %v3590 = vadd.f32 0.0, %v3589
    %v3591 = vpop.f32.mrb[0].mxu0
    %3592 = vmatprep.mubr.bf16.mxu0 %v3175
    %3593 = vmatmul.mubr.bf16.gmra.mrb[0].mxu0 %v3174
    %v3594 = vpop.f32.mrb[0].mxu0
    %v3595 = vadd.f32 0.0, %v3594
    %v3596 = vpop.f32.mrb[0].mxu0
    %v3597 = vpop.f32.mrb[0].mxu0
    %v3598 = vadd.f32 0.0, %v3597
    %v3599 = vpop.f32.mrb[0].mxu0
    %3600 = vmatprep.mubr.bf16.mxu0 %v3178
    %3601 = vmatmul.mubr.bf16.gmra.mrb[0].mxu0 %v3177
    %v3602 = vpop.f32.mrb[0].mxu0
    %v3603 = vadd.f32 0.0, %v3602
    %v3604 = vpop.f32.mrb[0].mxu0
    %v3605 = vpop.f32.mrb[0].mxu0
    %v3606 = vadd.f32 0.0, %v3605
    %v3607 = vpop.f32.mrb[0].mxu0
    %3608 = vmatprep.mubr.bf16.mxu0 %v3181
    %3609 = vmatmul.mubr.bf16.gmra.mrb[0].mxu0 %v3180
    %v3610 = vpop.f32.mrb[0].mxu0
    %v3611 = vadd.f32 0.0, %v3610
    %v3612 = vpop.f32.mrb[0].mxu0
    %v3613 = vpop.f32.mrb[0].mxu0
    %v3614 = vadd.f32 0.0, %v3613
    %v3615 = vpop.f32.mrb[0].mxu0
    %3616 = vmatprep.mubr.bf16.mxu0 %v3184
    %3617 = vmatmul.mubr.bf16.gmra.mrb[0].mxu0 %v3183
    %v3618 = vpop.f32.mrb[0].mxu0
    %v3619 = vadd.f32 0.0, %v3618
    %v3620 = vpop.f32.mrb[0].mxu0
    %v3621 = vpop.f32.mrb[0].mxu0
    %v3622 = vadd.f32 0.0, %v3621
    %v3623 = vpop.f32.mrb[0].mxu0
    %3624 = vmatprep.mubr.bf16.mxu0 %v3187
    %3625 = vmatmul.mubr.bf16.gmra.mrb[0].mxu0 %v3186
    %v3626 = vpop.f32.mrb[0].mxu0
    %v3627 = vadd.f32 0.0, %v3626
    %v3628 = vpop.f32.mrb[0].mxu0
    %v3629 = vpop.f32.mrb[0].mxu0
    %v3630 = vadd.f32 0.0, %v3629
    %v3631 = vpop.f32.mrb[0].mxu0
    %3632 = vmatprep.mubr.bf16.mxu0 %v3190
    %3633 = vmatmul.mubr.bf16.gmra.mrb[0].mxu0 %v3189
    %v3634 = vpop.f32.mrb[0].mxu0
    %v3635 = vadd.f32 0.0, %v3634
    %v3636 = vpop.f32.mrb[0].mxu0
    %v3637 = vpop.f32.mrb[0].mxu0
    %v3638 = vadd.f32 0.0, %v3637
    %v3639 = vpop.f32.mrb[0].mxu0
    %3640 = vmatprep.mubr.bf16.mxu0 %v3193
    %3641 = vmatmul.mubr.bf16.gmra.mrb[0].mxu0 %v3192
    %v3642 = vpop.f32.mrb[0].mxu0
    %v3643 = vadd.f32 0.0, %v3642
    %v3644 = vpop.f32.mrb[0].mxu0
    %v3645 = vpop.f32.mrb[0].mxu0
    %v3646 = vadd.f32 0.0, %v3645
    %v3647 = vpop.f32.mrb[0].mxu0
    %3648 = vmatprep.mubr.bf16.mxu0 %v3196
    %3649 = vmatmul.mubr.bf16.gmra.mrb[0].mxu0 %v3195
    %v3650 = vpop.f32.mrb[0].mxu0
    %v3651 = vadd.f32 0.0, %v3650
    %v3652 = vpop.f32.mrb[0].mxu0
    %v3653 = vpop.f32.mrb[0].mxu0
    %v3654 = vadd.f32 0.0, %v3653
    %v3655 = vpop.f32.mrb[0].mxu0
    %3656 = vmatprep.mubr.bf16.mxu0 %v3199
    %3657 = vmatmul.mubr.bf16.gmra.mrb[0].mxu0 %v3198
    %v3658 = vpop.f32.mrb[0].mxu0
    %v3659 = vadd.f32 0.0, %v3658
    %v3660 = vpop.f32.mrb[0].mxu0
    %v3661 = vpop.f32.mrb[0].mxu0
    %v3662 = vadd.f32 0.0, %v3661
    %v3663 = vpop.f32.mrb[0].mxu0
    %3664 = vmatprep.mubr.bf16.mxu0 %v3202
    %3665 = vmatmul.mubr.bf16.gmra.mrb[0].mxu0 %v3201
    %v3666 = vpop.f32.mrb[0].mxu0
    %v3667 = vadd.f32 0.0, %v3666
    %v3668 = vpop.f32.mrb[0].mxu0
    %v3669 = vpop.f32.mrb[0].mxu0
    %v3670 = vadd.f32 0.0, %v3669
    %v3671 = vpop.f32.mrb[0].mxu0
    %3672 = vmatprep.mubr.bf16.mxu0 %v3205
    %3673 = vmatmul.mubr.bf16.gmra.mrb[0].mxu0 %v3204
    %v3674 = vpop.f32.mrb[0].mxu0
    %v3675 = vadd.f32 0.0, %v3674
    %v3676 = vpop.f32.mrb[0].mxu0
    %v3677 = vpop.f32.mrb[0].mxu0
    %v3678 = vadd.f32 0.0, %v3677
    %v3679 = vpop.f32.mrb[0].mxu0
    %3680 = vmatprep.mubr.bf16.mxu0 %v3208
    %3681 = vmatmul.mubr.bf16.gmra.mrb[0].mxu0 %v3207
    %v3682 = vpop.f32.mrb[0].mxu0
    %v3683 = vadd.f32 0.0, %v3682
    %v3684 = vpop.f32.mrb[0].mxu0
    %v3685 = vpop.f32.mrb[0].mxu0
    %v3686 = vadd.f32 0.0, %v3685
    %v3687 = vpop.f32.mrb[0].mxu0
    %3688 = vmatprep.mubr.bf16.mxu0 %v3211
    %3689 = vmatmul.mubr.bf16.gmra.mrb[0].mxu0 %v3210
    %v3690 = vpop.f32.mrb[0].mxu0
    %v3691 = vadd.f32 0.0, %v3690
    %v3692 = vpop.f32.mrb[0].mxu0
    %v3693 = vpop.f32.mrb[0].mxu0
    %v3694 = vadd.f32 0.0, %v3693
    %v3695 = vpop.f32.mrb[0].mxu0
    %3696 = vmatprep.mubr.bf16.mxu0 %v3214
    %3697 = vmatmul.mubr.bf16.gmra.mrb[0].mxu0 %v3213
    %v3698 = vpop.f32.mrb[0].mxu0
    %v3699 = vadd.f32 0.0, %v3698
    %v3700 = vpop.f32.mrb[0].mxu0
    %v3701 = vpop.f32.mrb[0].mxu0
    %v3702 = vadd.f32 0.0, %v3701
    %v3703 = vpop.f32.mrb[0].mxu0
    %3704 = vmatprep.mubr.bf16.mxu0 %v3217
    %3705 = vmatmul.mubr.bf16.gmra.mrb[0].mxu0 %v3216
    %v3706 = vpop.f32.mrb[0].mxu0
    %v3707 = vadd.f32 0.0, %v3706
    %v3708 = vpop.f32.mrb[0].mxu0
    %v3709 = vpop.f32.mrb[0].mxu0
    %v3710 = vadd.f32 0.0, %v3709
    %v3711 = vpop.f32.mrb[0].mxu0
    %3712 = vmatprep.mubr.bf16.mxu0 %v3220
    %3713 = vmatmul.mubr.bf16.gmra.mrb[0].mxu0 %v3219
    %v3714 = vpop.f32.mrb[0].mxu0
    %v3715 = vadd.f32 0.0, %v3714
    %v3716 = vpop.f32.mrb[0].mxu0
    %v3717 = vpop.f32.mrb[0].mxu0
    %v3718 = vadd.f32 0.0, %v3717
    %v3719 = vpop.f32.mrb[0].mxu0
    %3720 = vmatprep.mubr.bf16.mxu0 %v3223
    %3721 = vmatmul.mubr.bf16.gmra.mrb[0].mxu0 %v3222
    %v3722 = vpop.f32.mrb[0].mxu0
    %v3723 = vadd.f32 0.0, %v3722
    %v3724 = vpop.f32.mrb[0].mxu0
    %v3725 = vpop.f32.mrb[0].mxu0
    %v3726 = vadd.f32 0.0, %v3725
    %v3727 = vpop.f32.mrb[0].mxu0
    %3728 = vmatprep.mubr.bf16.mxu0 %v3226
    %3729 = vmatmul.mubr.bf16.gmra.mrb[0].mxu0 %v3225
    %v3730 = vpop.f32.mrb[0].mxu0
    %v3731 = vadd.f32 0.0, %v3730
    %v3732 = vpop.f32.mrb[0].mxu0
    %v3733 = vpop.f32.mrb[0].mxu0
    %v3734 = vadd.f32 0.0, %v3733
    %v3735 = vpop.f32.mrb[0].mxu0
    %3736 = vmatprep.mubr.bf16.mxu0 %v3229
    %3737 = vmatmul.mubr.bf16.gmra.mrb[0].mxu0 %v3228
    %v3738 = vpop.f32.mrb[0].mxu0
    %v3739 = vadd.f32 0.0, %v3738
    %v3740 = vpop.f32.mrb[0].mxu0
    %v3741 = vpop.f32.mrb[0].mxu0
    %v3742 = vadd.f32 0.0, %v3741
    %v3743 = vpop.f32.mrb[0].mxu0
    %3744 = vmatprep.mubr.bf16.mxu0 %v3232
    %3745 = vmatmul.mubr.bf16.gmra.mrb[0].mxu0 %v3231
    %v3746 = vpop.f32.mrb[0].mxu0
    %v3747 = vadd.f32 0.0, %v3746
    %v3748 = vpop.f32.mrb[0].mxu0
    %v3749 = vpop.f32.mrb[0].mxu0
    %v3750 = vadd.f32 0.0, %v3749
    %v3751 = vpop.f32.mrb[0].mxu0
    %3752 = vmatprep.mubr.bf16.mxu0 %v3235
    %3753 = vmatmul.mubr.bf16.gmra.mrb[0].mxu0 %v3234
    %v3754 = vpop.f32.mrb[0].mxu0
    %v3755 = vadd.f32 0.0, %v3754
    %v3756 = vpop.f32.mrb[0].mxu0
    %v3757 = vpop.f32.mrb[0].mxu0
    %v3758 = vadd.f32 0.0, %v3757
    %v3759 = vpop.f32.mrb[0].mxu0
    %3760 = vmatprep.mubr.bf16.mxu0 %v3238
    %3761 = vmatmul.mubr.bf16.gmra.mrb[0].mxu0 %v3237
    %v3762 = vpop.f32.mrb[0].mxu0
    %v3763 = vadd.f32 0.0, %v3762
    %v3764 = vpop.f32.mrb[0].mxu0
    %v3765 = vpop.f32.mrb[0].mxu0
    %v3766 = vadd.f32 0.0, %v3765
    %v3767 = vpop.f32.mrb[0].mxu0
    %3768 = vdwg.mxu0
    %3769 = vmatprep.subr.bf16.mxu0 0
    %3770 = vmatpush1.bf16.msra.mxu0 %v3364
    %3771 = vmatprep.subr.bf16.mxu0 0
    %3772 = vmatpush1.bf16.msra.mxu0 %v3365
    %3773 = vmatprep.subr.bf16.mxu0 0
    %3774 = vmatpush1.bf16.msra.mxu0 0
    %3775 = vmatprep.subr.bf16.mxu0 0
    %3776 = vmatpush1.bf16.msra.mxu0 0
    %3777 = vmatprep.subr.bf16.mxu0 0
    %3778 = vmatpush1.bf16.msra.mxu0 0
    %3779 = vmatprep.subr.bf16.mxu0 0
    %3780 = vmatpush1.bf16.msra.mxu0 0
    %3781 = vmatprep.subr.bf16.mxu0 0
    %3782 = vmatpush1.bf16.msra.mxu0 0
    %3783 = vmatprep.subr.bf16.mxu0 0
    %3784 = vmatpush1.bf16.msra.mxu0 0
    %3785 = vmatprep.subr.bf16.mxu0 0
    %3786 = vmatpush1.bf16.msra.mxu0 0
    %3787 = vmatprep.subr.bf16.mxu0 0
    %3788 = vmatpush1.bf16.msra.mxu0 0
    %3789 = vmatprep.subr.bf16.mxu0 0
    %3790 = vmatpush1.bf16.msra.mxu0 0
    %3791 = vmatprep.subr.bf16.mxu0 0
    %3792 = vmatpush1.bf16.msra.mxu0 0
    %3793 = vmatprep.subr.bf16.mxu0 0
    %3794 = vmatpush1.bf16.msra.mxu0 0
    %3795 = vmatprep.subr.bf16.mxu0 0
    %3796 = vmatpush1.bf16.msra.mxu0 0
    %3797 = vmatprep.subr.bf16.mxu0 0
    %3798 = vmatpush1.bf16.msra.mxu0 0
    %3799 = vmatprep.subr.bf16.mxu0 0
    %3800 = vmatpush1.bf16.msra.mxu0 0
    %3801 = vmatprep.mubr.bf16.mxu0 0
    %3802 = vmatmul.mubr.bf16.gmra.mrb[0].mxu0 %v3385
    %v3803 = vpop.f32.mrb[0].mxu0
    %v3804 = vadd.f32 %v3515, %v3803
    %v3805 = vpop.f32.mrb[0].mxu0
    %v3806 = vpop.f32.mrb[0].mxu0
    %v3807 = vadd.f32 %v3518, %v3806
    %v3808 = vpop.f32.mrb[0].mxu0
    %3809 = vmatprep.mubr.bf16.mxu0 0
    %3810 = vmatmul.mubr.bf16.gmra.mrb[0].mxu0 %v3388
    %v3811 = vpop.f32.mrb[0].mxu0
    %v3812 = vadd.f32 %v3523, %v3811
    %v3813 = vpop.f32.mrb[0].mxu0
    %v3814 = vpop.f32.mrb[0].mxu0
    %v3815 = vadd.f32 %v3526, %v3814
    %v3816 = vpop.f32.mrb[0].mxu0
    %3817 = vmatprep.mubr.bf16.mxu0 0
    %3818 = vmatmul.mubr.bf16.gmra.mrb[0].mxu0 %v3391
    %v3819 = vpop.f32.mrb[0].mxu0
    %v3820 = vadd.f32 %v3531, %v3819
    %v3821 = vpop.f32.mrb[0].mxu0
    %v3822 = vpop.f32.mrb[0].mxu0
    %v3823 = vadd.f32 %v3534, %v3822
    %v3824 = vpop.f32.mrb[0].mxu0
    %3825 = vmatprep.mubr.bf16.mxu0 0
    %3826 = vmatmul.mubr.bf16.gmra.mrb[0].mxu0 %v3394
    %v3827 = vpop.f32.mrb[0].mxu0
    %v3828 = vadd.f32 %v3539, %v3827
    %v3829 = vpop.f32.mrb[0].mxu0
    %v3830 = vpop.f32.mrb[0].mxu0
    %v3831 = vadd.f32 %v3542, %v3830
    %v3832 = vpop.f32.mrb[0].mxu0
    %3833 = vmatprep.mubr.bf16.mxu0 0
    %3834 = vmatmul.mubr.bf16.gmra.mrb[0].mxu0 %v3397
    %v3835 = vpop.f32.mrb[0].mxu0
    %v3836 = vadd.f32 %v3547, %v3835
    %v3837 = vpop.f32.mrb[0].mxu0
    %v3838 = vpop.f32.mrb[0].mxu0
    %v3839 = vadd.f32 %v3550, %v3838
    %v3840 = vpop.f32.mrb[0].mxu0
    %3841 = vmatprep.mubr.bf16.mxu0 0
    %3842 = vmatmul.mubr.bf16.gmra.mrb[0].mxu0 %v3400
    %v3843 = vpop.f32.mrb[0].mxu0
    %v3844 = vadd.f32 %v3555, %v3843
    %v3845 = vpop.f32.mrb[0].mxu0
    %v3846 = vpop.f32.mrb[0].mxu0
    %v3847 = vadd.f32 %v3558, %v3846
    %v3848 = vpop.f32.mrb[0].mxu0
    %3849 = vmatprep.mubr.bf16.mxu0 0
    %3850 = vmatmul.mubr.bf16.gmra.mrb[0].mxu0 %v3403
    %v3851 = vpop.f32.mrb[0].mxu0
    %v3852 = vadd.f32 %v3563, %v3851
    %v3853 = vpop.f32.mrb[0].mxu0
    %v3854 = vpop.f32.mrb[0].mxu0
    %v3855 = vadd.f32 %v3566, %v3854
    %v3856 = vpop.f32.mrb[0].mxu0
    %3857 = vmatprep.mubr.bf16.mxu0 0
    %3858 = vmatmul.mubr.bf16.gmra.mrb[0].mxu0 %v3406
    %v3859 = vpop.f32.mrb[0].mxu0
    %v3860 = vadd.f32 %v3571, %v3859
    %v3861 = vpop.f32.mrb[0].mxu0
    %v3862 = vpop.f32.mrb[0].mxu0
    %v3863 = vadd.f32 %v3574, %v3862
    %v3864 = vpop.f32.mrb[0].mxu0
    %3865 = vmatprep.mubr.bf16.mxu0 0
    %3866 = vmatmul.mubr.bf16.gmra.mrb[0].mxu0 %v3409
    %v3867 = vpop.f32.mrb[0].mxu0
    %v3868 = vadd.f32 %v3579, %v3867
    %v3869 = vpop.f32.mrb[0].mxu0
    %v3870 = vpop.f32.mrb[0].mxu0
    %v3871 = vadd.f32 %v3582, %v3870
    %v3872 = vpop.f32.mrb[0].mxu0
    %3873 = vmatprep.mubr.bf16.mxu0 0
    %3874 = vmatmul.mubr.bf16.gmra.mrb[0].mxu0 %v3412
    %v3875 = vpop.f32.mrb[0].mxu0
    %v3876 = vadd.f32 %v3587, %v3875
    %v3877 = vpop.f32.mrb[0].mxu0
    %v3878 = vpop.f32.mrb[0].mxu0
    %v3879 = vadd.f32 %v3590, %v3878
    %v3880 = vpop.f32.mrb[0].mxu0
    %3881 = vmatprep.mubr.bf16.mxu0 0
    %3882 = vmatmul.mubr.bf16.gmra.mrb[0].mxu0 %v3415
    %v3883 = vpop.f32.mrb[0].mxu0
    %v3884 = vadd.f32 %v3595, %v3883
    %v3885 = vpop.f32.mrb[0].mxu0
    %v3886 = vpop.f32.mrb[0].mxu0
    %v3887 = vadd.f32 %v3598, %v3886
    %v3888 = vpop.f32.mrb[0].mxu0
    %3889 = vmatprep.mubr.bf16.mxu0 0
    %3890 = vmatmul.mubr.bf16.gmra.mrb[0].mxu0 %v3418
    %v3891 = vpop.f32.mrb[0].mxu0
    %v3892 = vadd.f32 %v3603, %v3891
    %v3893 = vpop.f32.mrb[0].mxu0
    %v3894 = vpop.f32.mrb[0].mxu0
    %v3895 = vadd.f32 %v3606, %v3894
    %v3896 = vpop.f32.mrb[0].mxu0
    %3897 = vmatprep.mubr.bf16.mxu0 0
    %3898 = vmatmul.mubr.bf16.gmra.mrb[0].mxu0 %v3421
    %v3899 = vpop.f32.mrb[0].mxu0
    %v3900 = vadd.f32 %v3611, %v3899
    %v3901 = vpop.f32.mrb[0].mxu0
    %v3902 = vpop.f32.mrb[0].mxu0
    %v3903 = vadd.f32 %v3614, %v3902
    %v3904 = vpop.f32.mrb[0].mxu0
    %3905 = vmatprep.mubr.bf16.mxu0 0
    %3906 = vmatmul.mubr.bf16.gmra.mrb[0].mxu0 %v3424
    %v3907 = vpop.f32.mrb[0].mxu0
    %v3908 = vadd.f32 %v3619, %v3907
    %v3909 = vpop.f32.mrb[0].mxu0
    %v3910 = vpop.f32.mrb[0].mxu0
    %v3911 = vadd.f32 %v3622, %v3910
    %v3912 = vpop.f32.mrb[0].mxu0
    %3913 = vmatprep.mubr.bf16.mxu0 0
    %3914 = vmatmul.mubr.bf16.gmra.mrb[0].mxu0 %v3427
    %v3915 = vpop.f32.mrb[0].mxu0
    %v3916 = vadd.f32 %v3627, %v3915
    %v3917 = vpop.f32.mrb[0].mxu0
    %v3918 = vpop.f32.mrb[0].mxu0
    %v3919 = vadd.f32 %v3630, %v3918
    %v3920 = vpop.f32.mrb[0].mxu0
    %3921 = vmatprep.mubr.bf16.mxu0 0
    %3922 = vmatmul.mubr.bf16.gmra.mrb[0].mxu0 %v3430
    %v3923 = vpop.f32.mrb[0].mxu0
    %v3924 = vadd.f32 %v3635, %v3923
    %v3925 = vpop.f32.mrb[0].mxu0
    %v3926 = vpop.f32.mrb[0].mxu0
    %v3927 = vadd.f32 %v3638, %v3926
    %v3928 = vpop.f32.mrb[0].mxu0
    %3929 = vmatprep.mubr.bf16.mxu0 0
    %3930 = vmatmul.mubr.bf16.gmra.mrb[0].mxu0 %v3433
    %v3931 = vpop.f32.mrb[0].mxu0
    %v3932 = vadd.f32 %v3643, %v3931
    %v3933 = vpop.f32.mrb[0].mxu0
    %v3934 = vpop.f32.mrb[0].mxu0
    %v3935 = vadd.f32 %v3646, %v3934
    %v3936 = vpop.f32.mrb[0].mxu0
    %3937 = vmatprep.mubr.bf16.mxu0 0
    %3938 = vmatmul.mubr.bf16.gmra.mrb[0].mxu0 %v3436
    %v3939 = vpop.f32.mrb[0].mxu0
    %v3940 = vadd.f32 %v3651, %v3939
    %v3941 = vpop.f32.mrb[0].mxu0
    %v3942 = vpop.f32.mrb[0].mxu0
    %v3943 = vadd.f32 %v3654, %v3942
    %v3944 = vpop.f32.mrb[0].mxu0
    %3945 = vmatprep.mubr.bf16.mxu0 0
    %3946 = vmatmul.mubr.bf16.gmra.mrb[0].mxu0 %v3439
    %v3947 = vpop.f32.mrb[0].mxu0
    %v3948 = vadd.f32 %v3659, %v3947
    %v3949 = vpop.f32.mrb[0].mxu0
    %v3950 = vpop.f32.mrb[0].mxu0
    %v3951 = vadd.f32 %v3662, %v3950
    %v3952 = vpop.f32.mrb[0].mxu0
    %3953 = vmatprep.mubr.bf16.mxu0 0
    %3954 = vmatmul.mubr.bf16.gmra.mrb[0].mxu0 %v3442
    %v3955 = vpop.f32.mrb[0].mxu0
    %v3956 = vadd.f32 %v3667, %v3955
    %v3957 = vpop.f32.mrb[0].mxu0
    %v3958 = vpop.f32.mrb[0].mxu0
    %v3959 = vadd.f32 %v3670, %v3958
    %v3960 = vpop.f32.mrb[0].mxu0
    %3961 = vmatprep.mubr.bf16.mxu0 0
    %3962 = vmatmul.mubr.bf16.gmra.mrb[0].mxu0 %v3445
    %v3963 = vpop.f32.mrb[0].mxu0
    %v3964 = vadd.f32 %v3675, %v3963
    %v3965 = vpop.f32.mrb[0].mxu0
    %v3966 = vpop.f32.mrb[0].mxu0
    %v3967 = vadd.f32 %v3678, %v3966
    %v3968 = vpop.f32.mrb[0].mxu0
    %3969 = vmatprep.mubr.bf16.mxu0 0
    %3970 = vmatmul.mubr.bf16.gmra.mrb[0].mxu0 %v3448
    %v3971 = vpop.f32.mrb[0].mxu0
    %v3972 = vadd.f32 %v3683, %v3971
    %v3973 = vpop.f32.mrb[0].mxu0
    %v3974 = vpop.f32.mrb[0].mxu0
    %v3975 = vadd.f32 %v3686, %v3974
    %v3976 = vpop.f32.mrb[0].mxu0
    %3977 = vmatprep.mubr.bf16.mxu0 0
    %3978 = vmatmul.mubr.bf16.gmra.mrb[0].mxu0 %v3451
    %v3979 = vpop.f32.mrb[0].mxu0
    %v3980 = vadd.f32 %v3691, %v3979
    %v3981 = vpop.f32.mrb[0].mxu0
    %v3982 = vpop.f32.mrb[0].mxu0
    %v3983 = vadd.f32 %v3694, %v3982
    %v3984 = vpop.f32.mrb[0].mxu0
    %3985 = vmatprep.mubr.bf16.mxu0 0
    %3986 = vmatmul.mubr.bf16.gmra.mrb[0].mxu0 %v3454
    %v3987 = vpop.f32.mrb[0].mxu0
    %v3988 = vadd.f32 %v3699, %v3987
    %v3989 = vpop.f32.mrb[0].mxu0
    %v3990 = vpop.f32.mrb[0].mxu0
    %v3991 = vadd.f32 %v3702, %v3990
    %v3992 = vpop.f32.mrb[0].mxu0
    %3993 = vmatprep.mubr.bf16.mxu0 0
    %3994 = vmatmul.mubr.bf16.gmra.mrb[0].mxu0 %v3457
    %v3995 = vpop.f32.mrb[0].mxu0
    %v3996 = vadd.f32 %v3707, %v3995
    %v3997 = vpop.f32.mrb[0].mxu0
    %v3998 = vpop.f32.mrb[0].mxu0
    %v3999 = vadd.f32 %v3710, %v3998
    %v4000 = vpop.f32.mrb[0].mxu0
    %4001 = vmatprep.mubr.bf16.mxu0 0
    %4002 = vmatmul.mubr.bf16.gmra.mrb[0].mxu0 %v3460
    %v4003 = vpop.f32.mrb[0].mxu0
    %v4004 = vadd.f32 %v3715, %v4003
    %v4005 = vpop.f32.mrb[0].mxu0
    %v4006 = vpop.f32.mrb[0].mxu0
    %v4007 = vadd.f32 %v3718, %v4006
    %v4008 = vpop.f32.mrb[0].mxu0
    %4009 = vmatprep.mubr.bf16.mxu0 0
    %4010 = vmatmul.mubr.bf16.gmra.mrb[0].mxu0 %v3463
    %v4011 = vpop.f32.mrb[0].mxu0
    %v4012 = vadd.f32 %v3723, %v4011
    %v4013 = vpop.f32.mrb[0].mxu0
    %v4014 = vpop.f32.mrb[0].mxu0
    %v4015 = vadd.f32 %v3726, %v4014
    %v4016 = vpop.f32.mrb[0].mxu0
    %4017 = vmatprep.mubr.bf16.mxu0 0
    %4018 = vmatmul.mubr.bf16.gmra.mrb[0].mxu0 %v3466
    %v4019 = vpop.f32.mrb[0].mxu0
    %v4020 = vadd.f32 %v3731, %v4019
    %v4021 = vpop.f32.mrb[0].mxu0
    %v4022 = vpop.f32.mrb[0].mxu0
    %v4023 = vadd.f32 %v3734, %v4022
    %v4024 = vpop.f32.mrb[0].mxu0
    %4025 = vmatprep.mubr.bf16.mxu0 0
    %4026 = vmatmul.mubr.bf16.gmra.mrb[0].mxu0 %v3469
    %v4027 = vpop.f32.mrb[0].mxu0
    %v4028 = vadd.f32 %v3739, %v4027
    %v4029 = vpop.f32.mrb[0].mxu0
    %v4030 = vpop.f32.mrb[0].mxu0
    %v4031 = vadd.f32 %v3742, %v4030
    %v4032 = vpop.f32.mrb[0].mxu0
    %4033 = vmatprep.mubr.bf16.mxu0 0
    %4034 = vmatmul.mubr.bf16.gmra.mrb[0].mxu0 %v3472
    %v4035 = vpop.f32.mrb[0].mxu0
    %v4036 = vadd.f32 %v3747, %v4035
    %v4037 = vpop.f32.mrb[0].mxu0
    %v4038 = vpop.f32.mrb[0].mxu0
    %v4039 = vadd.f32 %v3750, %v4038
    %v4040 = vpop.f32.mrb[0].mxu0
    %4041 = vmatprep.mubr.bf16.mxu0 0
    %4042 = vmatmul.mubr.bf16.gmra.mrb[0].mxu0 %v3475
    %v4043 = vpop.f32.mrb[0].mxu0
    %v4044 = vadd.f32 %v3755, %v4043
    %v4045 = vpop.f32.mrb[0].mxu0
    %v4046 = vpop.f32.mrb[0].mxu0
    %v4047 = vadd.f32 %v3758, %v4046
    %v4048 = vpop.f32.mrb[0].mxu0
    %4049 = vmatprep.mubr.bf16.mxu0 0
    %4050 = vmatmul.mubr.bf16.gmra.mrb[0].mxu0 %v3478
    %v4051 = vpop.f32.mrb[0].mxu0
    %v4052 = vadd.f32 %v3763, %v4051
    %v4053 = vpop.f32.mrb[0].mxu0
    %v4054 = vpop.f32.mrb[0].mxu0
    %v4055 = vadd.f32 %v3766, %v4054
    %v4056 = vpop.f32.mrb[0].mxu0
    %4057 = vdwg.mxu0
    %v4058 = vld [vmem:[%s5] sm:$0x1]
    %v4059 = vld [vmem:[%s6] sm:$0x1]
    %v4060 = vsel %vm502, %v3804, 0.0
    %v4061 = vsel %vm502, %v3807, 0.0
    %v4062 = vadd.f32 %v4060, %v4061
    %v4063 = vsel %vm502, %v3812, 0.0
    %v4064 = vadd.f32 %v4062, %v4063
    %v4065 = vsel %vm502, %v3815, 0.0
    %v4066 = vadd.f32 %v4064, %v4065
    %v4067 = vsel %vm502, %v3820, 0.0
    %v4068 = vadd.f32 %v4066, %v4067
    %v4069 = vsel %vm502, %v3823, 0.0
    %v4070 = vadd.f32 %v4068, %v4069
    %v4071 = vsel %vm502, %v3828, 0.0
    %v4072 = vadd.f32 %v4070, %v4071
    %v4073 = vsel %vm502, %v3831, 0.0
    %v4074 = vadd.f32 %v4072, %v4073
    %v4075 = vsel %vm502, %v3836, 0.0
    %v4076 = vadd.f32 %v4074, %v4075
    %v4077 = vsel %vm502, %v3839, 0.0
    %v4078 = vadd.f32 %v4076, %v4077
    %v4079 = vsel %vm502, %v3844, 0.0
    %v4080 = vadd.f32 %v4078, %v4079
    %v4081 = vsel %vm502, %v3847, 0.0
    %v4082 = vadd.f32 %v4080, %v4081
    %v4083 = vsel %vm502, %v3852, 0.0
    %v4084 = vadd.f32 %v4082, %v4083
    %v4085 = vsel %vm502, %v3855, 0.0
    %v4086 = vadd.f32 %v4084, %v4085
    %v4087 = vsel %vm502, %v3860, 0.0
    %v4088 = vadd.f32 %v4086, %v4087
    %v4089 = vsel %vm502, %v3863, 0.0
    %v4090 = vadd.f32 %v4088, %v4089
    %v4091 = vsel %vm502, %v3868, 0.0
    %v4092 = vadd.f32 %v4090, %v4091
    %v4093 = vsel %vm502, %v3871, 0.0
    %v4094 = vadd.f32 %v4092, %v4093
    %v4095 = vsel %vm502, %v3876, 0.0
    %v4096 = vadd.f32 %v4094, %v4095
    %v4097 = vsel %vm502, %v3879, 0.0
    %v4098 = vadd.f32 %v4096, %v4097
    %v4099 = vsel %vm502, %v3884, 0.0
    %v4100 = vadd.f32 %v4098, %v4099
    %v4101 = vsel %vm502, %v3887, 0.0
    %v4102 = vadd.f32 %v4100, %v4101
    %v4103 = vsel %vm502, %v3892, 0.0
    %v4104 = vadd.f32 %v4102, %v4103
    %v4105 = vsel %vm502, %v3895, 0.0
    %v4106 = vadd.f32 %v4104, %v4105
    %v4107 = vsel %vm502, %v3900, 0.0
    %v4108 = vadd.f32 %v4106, %v4107
    %v4109 = vsel %vm502, %v3903, 0.0
    %v4110 = vadd.f32 %v4108, %v4109
    %v4111 = vsel %vm502, %v3908, 0.0
    %v4112 = vadd.f32 %v4110, %v4111
    %v4113 = vsel %vm502, %v3911, 0.0
    %v4114 = vadd.f32 %v4112, %v4113
    %v4115 = vsel %vm502, %v3916, 0.0
    %v4116 = vadd.f32 %v4114, %v4115
    %v4117 = vsel %vm502, %v3919, 0.0
    %v4118 = vadd.f32 %v4116, %v4117
    %v4119 = vsel %vm502, %v3924, 0.0
    %v4120 = vadd.f32 %v4118, %v4119
    %v4121 = vsel %vm502, %v3927, 0.0
    %v4122 = vadd.f32 %v4120, %v4121
    %v4123 = vsel %vm502, %v3932, 0.0
    %v4124 = vadd.f32 %v4122, %v4123
    %v4125 = vsel %vm502, %v3935, 0.0
    %v4126 = vadd.f32 %v4124, %v4125
    %v4127 = vsel %vm502, %v3940, 0.0
    %v4128 = vadd.f32 %v4126, %v4127
    %v4129 = vsel %vm502, %v3943, 0.0
    %v4130 = vadd.f32 %v4128, %v4129
    %v4131 = vsel %vm502, %v3948, 0.0
    %v4132 = vadd.f32 %v4130, %v4131
    %v4133 = vsel %vm502, %v3951, 0.0
    %v4134 = vadd.f32 %v4132, %v4133
    %v4135 = vsel %vm502, %v3956, 0.0
    %v4136 = vadd.f32 %v4134, %v4135
    %v4137 = vsel %vm502, %v3959, 0.0
    %v4138 = vadd.f32 %v4136, %v4137
    %v4139 = vsel %vm502, %v3964, 0.0
    %v4140 = vadd.f32 %v4138, %v4139
    %v4141 = vsel %vm502, %v3967, 0.0
    %v4142 = vadd.f32 %v4140, %v4141
    %v4143 = vsel %vm502, %v3972, 0.0
    %v4144 = vadd.f32 %v4142, %v4143
    %v4145 = vsel %vm502, %v3975, 0.0
    %v4146 = vadd.f32 %v4144, %v4145
    %v4147 = vsel %vm502, %v3980, 0.0
    %v4148 = vadd.f32 %v4146, %v4147
    %v4149 = vsel %vm502, %v3983, 0.0
    %v4150 = vadd.f32 %v4148, %v4149
    %v4151 = vsel %vm502, %v3988, 0.0
    %v4152 = vadd.f32 %v4150, %v4151
    %v4153 = vsel %vm502, %v3991, 0.0
    %v4154 = vadd.f32 %v4152, %v4153
    %v4155 = vsel %vm502, %v3996, 0.0
    %v4156 = vadd.f32 %v4154, %v4155
    %v4157 = vsel %vm502, %v3999, 0.0
    %v4158 = vadd.f32 %v4156, %v4157
    %v4159 = vsel %vm502, %v4004, 0.0
    %v4160 = vadd.f32 %v4158, %v4159
    %v4161 = vsel %vm502, %v4007, 0.0
    %v4162 = vadd.f32 %v4160, %v4161
    %v4163 = vsel %vm502, %v4012, 0.0
    %v4164 = vadd.f32 %v4162, %v4163
    %v4165 = vsel %vm502, %v4015, 0.0
    %v4166 = vadd.f32 %v4164, %v4165
    %v4167 = vsel %vm502, %v4020, 0.0
    %v4168 = vadd.f32 %v4166, %v4167
    %v4169 = vsel %vm502, %v4023, 0.0
    %v4170 = vadd.f32 %v4168, %v4169
    %v4171 = vsel %vm502, %v4028, 0.0
    %v4172 = vadd.f32 %v4170, %v4171
    %v4173 = vsel %vm502, %v4031, 0.0
    %v4174 = vadd.f32 %v4172, %v4173
    %v4175 = vsel %vm502, %v4036, 0.0
    %v4176 = vadd.f32 %v4174, %v4175
    %v4177 = vsel %vm502, %v4039, 0.0
    %v4178 = vadd.f32 %v4176, %v4177
    %v4179 = vsel %vm502, %v4044, 0.0
    %v4180 = vadd.f32 %v4178, %v4179
    %v4181 = vsel %vm502, %v4047, 0.0
    %v4182 = vadd.f32 %v4180, %v4181
    %v4183 = vsel %vm502, %v4052, 0.0
    %v4184 = vadd.f32 %v4182, %v4183
    %v4185 = vsel %vm502, %v4055, 0.0
    %v4186 = vadd.f32 %v4184, %v4185
    %v4187 = vrot.slane %v4186, 4
    %v4188 = vadd.f32 %v4186, %v4187
    %v4189 = vrot.slane %v4188, 2
    %v4190 = vadd.f32 %v4188, %v4189
    %v4191 = vrot.slane %v4190, 1
    %v4192 = vadd.f32 %v4190, %v4191
    %v4193 = vmul.f32 %v4192, 0.001953125
    %v4194 = vmul.f32 %v3804, %v3804
    %v4195 = vmul.f32 %v3807, %v3807
    %v4196 = vmul.f32 %v3812, %v3812
    %v4197 = vmul.f32 %v3815, %v3815
    %v4198 = vmul.f32 %v3820, %v3820
    %v4199 = vmul.f32 %v3823, %v3823
    %v4200 = vmul.f32 %v3828, %v3828
    %v4201 = vmul.f32 %v3831, %v3831
    %v4202 = vmul.f32 %v3836, %v3836
    %v4203 = vmul.f32 %v3839, %v3839
    %v4204 = vmul.f32 %v3844, %v3844
    %v4205 = vmul.f32 %v3847, %v3847
    %v4206 = vmul.f32 %v3852, %v3852
    %v4207 = vmul.f32 %v3855, %v3855
    %v4208 = vmul.f32 %v3860, %v3860
    %v4209 = vmul.f32 %v3863, %v3863
    %v4210 = vmul.f32 %v3868, %v3868
    %v4211 = vmul.f32 %v3871, %v3871
    %v4212 = vmul.f32 %v3876, %v3876
    %v4213 = vmul.f32 %v3879, %v3879
    %v4214 = vmul.f32 %v3884, %v3884
    %v4215 = vmul.f32 %v3887, %v3887
    %v4216 = vmul.f32 %v3892, %v3892
    %v4217 = vmul.f32 %v3895, %v3895
    %v4218 = vmul.f32 %v3900, %v3900
    %v4219 = vmul.f32 %v3903, %v3903
    %v4220 = vmul.f32 %v3908, %v3908
    %v4221 = vmul.f32 %v3911, %v3911
    %v4222 = vmul.f32 %v3916, %v3916
    %v4223 = vmul.f32 %v3919, %v3919
    %v4224 = vmul.f32 %v3924, %v3924
    %v4225 = vmul.f32 %v3927, %v3927
    %v4226 = vmul.f32 %v3932, %v3932
    %v4227 = vmul.f32 %v3935, %v3935
    %v4228 = vmul.f32 %v3940, %v3940
    %v4229 = vmul.f32 %v3943, %v3943
    %v4230 = vmul.f32 %v3948, %v3948
    %v4231 = vmul.f32 %v3951, %v3951
    %v4232 = vmul.f32 %v3956, %v3956
    %v4233 = vmul.f32 %v3959, %v3959
    %v4234 = vmul.f32 %v3964, %v3964
    %v4235 = vmul.f32 %v3967, %v3967
    %v4236 = vmul.f32 %v3972, %v3972
    %v4237 = vmul.f32 %v3975, %v3975
    %v4238 = vmul.f32 %v3980, %v3980
    %v4239 = vmul.f32 %v3983, %v3983
    %v4240 = vmul.f32 %v3988, %v3988
    %v4241 = vmul.f32 %v3991, %v3991
    %v4242 = vmul.f32 %v3996, %v3996
    %v4243 = vmul.f32 %v3999, %v3999
    %v4244 = vmul.f32 %v4004, %v4004
    %v4245 = vmul.f32 %v4007, %v4007
    %v4246 = vmul.f32 %v4012, %v4012
    %v4247 = vmul.f32 %v4015, %v4015
    %v4248 = vmul.f32 %v4020, %v4020
    %v4249 = vmul.f32 %v4023, %v4023
    %v4250 = vmul.f32 %v4028, %v4028
    %v4251 = vmul.f32 %v4031, %v4031
    %v4252 = vmul.f32 %v4036, %v4036
    %v4253 = vmul.f32 %v4039, %v4039
    %v4254 = vmul.f32 %v4044, %v4044
    %v4255 = vmul.f32 %v4047, %v4047
    %v4256 = vmul.f32 %v4052, %v4052
    %v4257 = vmul.f32 %v4055, %v4055
    %v4258 = vsel %vm502, %v4194, 0.0
    %v4259 = vsel %vm502, %v4195, 0.0
    %v4260 = vadd.f32 %v4258, %v4259
    %v4261 = vsel %vm502, %v4196, 0.0
    %v4262 = vadd.f32 %v4260, %v4261
    %v4263 = vsel %vm502, %v4197, 0.0
    %v4264 = vadd.f32 %v4262, %v4263
    %v4265 = vsel %vm502, %v4198, 0.0
    %v4266 = vadd.f32 %v4264, %v4265
    %v4267 = vsel %vm502, %v4199, 0.0
    %v4268 = vadd.f32 %v4266, %v4267
    %v4269 = vsel %vm502, %v4200, 0.0
    %v4270 = vadd.f32 %v4268, %v4269
    %v4271 = vsel %vm502, %v4201, 0.0
    %v4272 = vadd.f32 %v4270, %v4271
    %v4273 = vsel %vm502, %v4202, 0.0
    %v4274 = vadd.f32 %v4272, %v4273
    %v4275 = vsel %vm502, %v4203, 0.0
    %v4276 = vadd.f32 %v4274, %v4275
    %v4277 = vsel %vm502, %v4204, 0.0
    %v4278 = vadd.f32 %v4276, %v4277
    %v4279 = vsel %vm502, %v4205, 0.0
    %v4280 = vadd.f32 %v4278, %v4279
    %v4281 = vsel %vm502, %v4206, 0.0
    %v4282 = vadd.f32 %v4280, %v4281
    %v4283 = vsel %vm502, %v4207, 0.0
    %v4284 = vadd.f32 %v4282, %v4283
    %v4285 = vsel %vm502, %v4208, 0.0
    %v4286 = vadd.f32 %v4284, %v4285
    %v4287 = vsel %vm502, %v4209, 0.0
    %v4288 = vadd.f32 %v4286, %v4287
    %v4289 = vsel %vm502, %v4210, 0.0
    %v4290 = vadd.f32 %v4288, %v4289
    %v4291 = vsel %vm502, %v4211, 0.0
    %v4292 = vadd.f32 %v4290, %v4291
    %v4293 = vsel %vm502, %v4212, 0.0
    %v4294 = vadd.f32 %v4292, %v4293
    %v4295 = vsel %vm502, %v4213, 0.0
    %v4296 = vadd.f32 %v4294, %v4295
    %v4297 = vsel %vm502, %v4214, 0.0
    %v4298 = vadd.f32 %v4296, %v4297
    %v4299 = vsel %vm502, %v4215, 0.0
    %v4300 = vadd.f32 %v4298, %v4299
    %v4301 = vsel %vm502, %v4216, 0.0
    %v4302 = vadd.f32 %v4300, %v4301
    %v4303 = vsel %vm502, %v4217, 0.0
    %v4304 = vadd.f32 %v4302, %v4303
    %v4305 = vsel %vm502, %v4218, 0.0
    %v4306 = vadd.f32 %v4304, %v4305
    %v4307 = vsel %vm502, %v4219, 0.0
    %v4308 = vadd.f32 %v4306, %v4307
    %v4309 = vsel %vm502, %v4220, 0.0
    %v4310 = vadd.f32 %v4308, %v4309
    %v4311 = vsel %vm502, %v4221, 0.0
    %v4312 = vadd.f32 %v4310, %v4311
    %v4313 = vsel %vm502, %v4222, 0.0
    %v4314 = vadd.f32 %v4312, %v4313
    %v4315 = vsel %vm502, %v4223, 0.0
    %v4316 = vadd.f32 %v4314, %v4315
    %v4317 = vsel %vm502, %v4224, 0.0
    %v4318 = vadd.f32 %v4316, %v4317
    %v4319 = vsel %vm502, %v4225, 0.0
    %v4320 = vadd.f32 %v4318, %v4319
    %v4321 = vsel %vm502, %v4226, 0.0
    %v4322 = vadd.f32 %v4320, %v4321
    %v4323 = vsel %vm502, %v4227, 0.0
    %v4324 = vadd.f32 %v4322, %v4323
    %v4325 = vsel %vm502, %v4228, 0.0
    %v4326 = vadd.f32 %v4324, %v4325
    %v4327 = vsel %vm502, %v4229, 0.0
    %v4328 = vadd.f32 %v4326, %v4327
    %v4329 = vsel %vm502, %v4230, 0.0
    %v4330 = vadd.f32 %v4328, %v4329
    %v4331 = vsel %vm502, %v4231, 0.0
    %v4332 = vadd.f32 %v4330, %v4331
    %v4333 = vsel %vm502, %v4232, 0.0
    %v4334 = vadd.f32 %v4332, %v4333
    %v4335 = vsel %vm502, %v4233, 0.0
    %v4336 = vadd.f32 %v4334, %v4335
    %v4337 = vsel %vm502, %v4234, 0.0
    %v4338 = vadd.f32 %v4336, %v4337
    %v4339 = vsel %vm502, %v4235, 0.0
    %v4340 = vadd.f32 %v4338, %v4339
    %v4341 = vsel %vm502, %v4236, 0.0
    %v4342 = vadd.f32 %v4340, %v4341
    %v4343 = vsel %vm502, %v4237, 0.0
    %v4344 = vadd.f32 %v4342, %v4343
    %v4345 = vsel %vm502, %v4238, 0.0
    %v4346 = vadd.f32 %v4344, %v4345
    %v4347 = vsel %vm502, %v4239, 0.0
    %v4348 = vadd.f32 %v4346, %v4347
    %v4349 = vsel %vm502, %v4240, 0.0
    %v4350 = vadd.f32 %v4348, %v4349
    %v4351 = vsel %vm502, %v4241, 0.0
    %v4352 = vadd.f32 %v4350, %v4351
    %v4353 = vsel %vm502, %v4242, 0.0
    %v4354 = vadd.f32 %v4352, %v4353
    %v4355 = vsel %vm502, %v4243, 0.0
    %v4356 = vadd.f32 %v4354, %v4355
    %v4357 = vsel %vm502, %v4244, 0.0
    %v4358 = vadd.f32 %v4356, %v4357
    %v4359 = vsel %vm502, %v4245, 0.0
    %v4360 = vadd.f32 %v4358, %v4359
    %v4361 = vsel %vm502, %v4246, 0.0
    %v4362 = vadd.f32 %v4360, %v4361
    %v4363 = vsel %vm502, %v4247, 0.0
    %v4364 = vadd.f32 %v4362, %v4363
    %v4365 = vsel %vm502, %v4248, 0.0
    %v4366 = vadd.f32 %v4364, %v4365
    %v4367 = vsel %vm502, %v4249, 0.0
    %v4368 = vadd.f32 %v4366, %v4367
    %v4369 = vsel %vm502, %v4250, 0.0
    %v4370 = vadd.f32 %v4368, %v4369
    %v4371 = vsel %vm502, %v4251, 0.0
    %v4372 = vadd.f32 %v4370, %v4371
    %v4373 = vsel %vm502, %v4252, 0.0
    %v4374 = vadd.f32 %v4372, %v4373
    %v4375 = vsel %vm502, %v4253, 0.0
    %v4376 = vadd.f32 %v4374, %v4375
    %v4377 = vsel %vm502, %v4254, 0.0
    %v4378 = vadd.f32 %v4376, %v4377
    %v4379 = vsel %vm502, %v4255, 0.0
    %v4380 = vadd.f32 %v4378, %v4379
    %v4381 = vsel %vm502, %v4256, 0.0
    %v4382 = vadd.f32 %v4380, %v4381
    %v4383 = vsel %vm502, %v4257, 0.0
    %v4384 = vadd.f32 %v4382, %v4383
    %v4385 = vrot.slane %v4384, 4
    %v4386 = vadd.f32 %v4384, %v4385
    %v4387 = vrot.slane %v4386, 2
    %v4388 = vadd.f32 %v4386, %v4387
    %v4389 = vrot.slane %v4388, 1
    %v4390 = vadd.f32 %v4388, %v4389
    %v4391 = vmul.f32 %v4390, 0.001953125
    %v4392 = vmul.f32 %v4193, %v4193
    %v4393 = vsub.f32 %v4391, %v4392
    %v4394 = vadd.f32 %v4393, 1e-05
    %v4395 = vrsqrt.pop %v4394
    %v4396 = vmul.f32 %v4058, %v4395
    %v4397 = vmul.f32 %v4193, %v4396
    %v4398 = vsub.f32 %v4059, %v4397
    %v4400 = vlaneseq
    %v4401 = vshrl.u32 %v4400, 7
    %v4402 = vsub.s32 0, %v4401
    %v4403 = vrot.slane %v4396, %v4402
    %v4405 = vmul.f32 %v3804, %v4403
    %v4406 = vmul.f32 %v3807, %v4403
    %v4407 = vmul.f32 %v3812, %v4403
    %v4408 = vmul.f32 %v3815, %v4403
    %v4409 = vmul.f32 %v3820, %v4403
    %v4410 = vmul.f32 %v3823, %v4403
    %v4411 = vmul.f32 %v3828, %v4403
    %v4412 = vmul.f32 %v3831, %v4403
    %v4413 = vmul.f32 %v3836, %v4403
    %v4414 = vmul.f32 %v3839, %v4403
    %v4415 = vmul.f32 %v3844, %v4403
    %v4416 = vmul.f32 %v3847, %v4403
    %v4417 = vmul.f32 %v3852, %v4403
    %v4418 = vmul.f32 %v3855, %v4403
    %v4419 = vmul.f32 %v3860, %v4403
    %v4420 = vmul.f32 %v3863, %v4403
    %v4421 = vmul.f32 %v3868, %v4403
    %v4422 = vmul.f32 %v3871, %v4403
    %v4423 = vmul.f32 %v3876, %v4403
    %v4424 = vmul.f32 %v3879, %v4403
    %v4425 = vmul.f32 %v3884, %v4403
    %v4426 = vmul.f32 %v3887, %v4403
    %v4427 = vmul.f32 %v3892, %v4403
    %v4428 = vmul.f32 %v3895, %v4403
    %v4429 = vmul.f32 %v3900, %v4403
    %v4430 = vmul.f32 %v3903, %v4403
    %v4431 = vmul.f32 %v3908, %v4403
    %v4432 = vmul.f32 %v3911, %v4403
    %v4433 = vmul.f32 %v3916, %v4403
    %v4434 = vmul.f32 %v3919, %v4403
    %v4435 = vmul.f32 %v3924, %v4403
    %v4436 = vmul.f32 %v3927, %v4403
    %v4437 = vmul.f32 %v3932, %v4403
    %v4438 = vmul.f32 %v3935, %v4403
    %v4439 = vmul.f32 %v3940, %v4403
    %v4440 = vmul.f32 %v3943, %v4403
    %v4441 = vmul.f32 %v3948, %v4403
    %v4442 = vmul.f32 %v3951, %v4403
    %v4443 = vmul.f32 %v3956, %v4403
    %v4444 = vmul.f32 %v3959, %v4403
    %v4445 = vmul.f32 %v3964, %v4403
    %v4446 = vmul.f32 %v3967, %v4403
    %v4447 = vmul.f32 %v3972, %v4403
    %v4448 = vmul.f32 %v3975, %v4403
    %v4449 = vmul.f32 %v3980, %v4403
    %v4450 = vmul.f32 %v3983, %v4403
    %v4451 = vmul.f32 %v3988, %v4403
    %v4452 = vmul.f32 %v3991, %v4403
    %v4453 = vmul.f32 %v3996, %v4403
    %v4454 = vmul.f32 %v3999, %v4403
    %v4455 = vmul.f32 %v4004, %v4403
    %v4456 = vmul.f32 %v4007, %v4403
    %v4457 = vmul.f32 %v4012, %v4403
    %v4458 = vmul.f32 %v4015, %v4403
    %v4459 = vmul.f32 %v4020, %v4403
    %v4460 = vmul.f32 %v4023, %v4403
    %v4461 = vmul.f32 %v4028, %v4403
    %v4462 = vmul.f32 %v4031, %v4403
    %v4463 = vmul.f32 %v4036, %v4403
    %v4464 = vmul.f32 %v4039, %v4403
    %v4465 = vmul.f32 %v4044, %v4403
    %v4466 = vmul.f32 %v4047, %v4403
    %v4467 = vmul.f32 %v4052, %v4403
    %v4468 = vmul.f32 %v4055, %v4403
    %v4470 = vlaneseq
    %v4471 = vshrl.u32 %v4470, 7
    %v4472 = vsub.s32 0, %v4471
    %v4473 = vrot.slane %v4398, %v4472
    %v4475 = vadd.f32 %v4405, %v4473
    %v4476 = vadd.f32 %v4406, %v4473
    %v4477 = vadd.f32 %v4407, %v4473
    %v4478 = vadd.f32 %v4408, %v4473
    %v4479 = vadd.f32 %v4409, %v4473
    %v4480 = vadd.f32 %v4410, %v4473
    %v4481 = vadd.f32 %v4411, %v4473
    %v4482 = vadd.f32 %v4412, %v4473
    %v4483 = vadd.f32 %v4413, %v4473
    %v4484 = vadd.f32 %v4414, %v4473
    %v4485 = vadd.f32 %v4415, %v4473
    %v4486 = vadd.f32 %v4416, %v4473
    %v4487 = vadd.f32 %v4417, %v4473
    %v4488 = vadd.f32 %v4418, %v4473
    %v4489 = vadd.f32 %v4419, %v4473
    %v4490 = vadd.f32 %v4420, %v4473
    %v4491 = vadd.f32 %v4421, %v4473
    %v4492 = vadd.f32 %v4422, %v4473
    %v4493 = vadd.f32 %v4423, %v4473
    %v4494 = vadd.f32 %v4424, %v4473
    %v4495 = vadd.f32 %v4425, %v4473
    %v4496 = vadd.f32 %v4426, %v4473
    %v4497 = vadd.f32 %v4427, %v4473
    %v4498 = vadd.f32 %v4428, %v4473
    %v4499 = vadd.f32 %v4429, %v4473
    %v4500 = vadd.f32 %v4430, %v4473
    %v4501 = vadd.f32 %v4431, %v4473
    %v4502 = vadd.f32 %v4432, %v4473
    %v4503 = vadd.f32 %v4433, %v4473
    %v4504 = vadd.f32 %v4434, %v4473
    %v4505 = vadd.f32 %v4435, %v4473
    %v4506 = vadd.f32 %v4436, %v4473
    %v4507 = vadd.f32 %v4437, %v4473
    %v4508 = vadd.f32 %v4438, %v4473
    %v4509 = vadd.f32 %v4439, %v4473
    %v4510 = vadd.f32 %v4440, %v4473
    %v4511 = vadd.f32 %v4441, %v4473
    %v4512 = vadd.f32 %v4442, %v4473
    %v4513 = vadd.f32 %v4443, %v4473
    %v4514 = vadd.f32 %v4444, %v4473
    %v4515 = vadd.f32 %v4445, %v4473
    %v4516 = vadd.f32 %v4446, %v4473
    %v4517 = vadd.f32 %v4447, %v4473
    %v4518 = vadd.f32 %v4448, %v4473
    %v4519 = vadd.f32 %v4449, %v4473
    %v4520 = vadd.f32 %v4450, %v4473
    %v4521 = vadd.f32 %v4451, %v4473
    %v4522 = vadd.f32 %v4452, %v4473
    %v4523 = vadd.f32 %v4453, %v4473
    %v4524 = vadd.f32 %v4454, %v4473
    %v4525 = vadd.f32 %v4455, %v4473
    %v4526 = vadd.f32 %v4456, %v4473
    %v4527 = vadd.f32 %v4457, %v4473
    %v4528 = vadd.f32 %v4458, %v4473
    %v4529 = vadd.f32 %v4459, %v4473
    %v4530 = vadd.f32 %v4460, %v4473
    %v4531 = vadd.f32 %v4461, %v4473
    %v4532 = vadd.f32 %v4462, %v4473
    %v4533 = vadd.f32 %v4463, %v4473
    %v4534 = vadd.f32 %v4464, %v4473
    %v4535 = vadd.f32 %v4465, %v4473
    %v4536 = vadd.f32 %v4466, %v4473
    %v4537 = vadd.f32 %v4467, %v4473
    %v4538 = vadd.f32 %v4468, %v4473
    %v4539 = vmax.f32 %v4475, 0.0
    %v4540 = vmax.f32 %v4476, 0.0
    %v4541 = vmax.f32 %v4477, 0.0
    %v4542 = vmax.f32 %v4478, 0.0
    %v4543 = vmax.f32 %v4479, 0.0
    %v4544 = vmax.f32 %v4480, 0.0
    %v4545 = vmax.f32 %v4481, 0.0
    %v4546 = vmax.f32 %v4482, 0.0
    %v4547 = vmax.f32 %v4483, 0.0
    %v4548 = vmax.f32 %v4484, 0.0
    %v4549 = vmax.f32 %v4485, 0.0
    %v4550 = vmax.f32 %v4486, 0.0
    %v4551 = vmax.f32 %v4487, 0.0
    %v4552 = vmax.f32 %v4488, 0.0
    %v4553 = vmax.f32 %v4489, 0.0
    %v4554 = vmax.f32 %v4490, 0.0
    %v4555 = vmax.f32 %v4491, 0.0
    %v4556 = vmax.f32 %v4492, 0.0
    %v4557 = vmax.f32 %v4493, 0.0
    %v4558 = vmax.f32 %v4494, 0.0
    %v4559 = vmax.f32 %v4495, 0.0
    %v4560 = vmax.f32 %v4496, 0.0
    %v4561 = vmax.f32 %v4497, 0.0
    %v4562 = vmax.f32 %v4498, 0.0
    %v4563 = vmax.f32 %v4499, 0.0
    %v4564 = vmax.f32 %v4500, 0.0
    %v4565 = vmax.f32 %v4501, 0.0
    %v4566 = vmax.f32 %v4502, 0.0
    %v4567 = vmax.f32 %v4503, 0.0
    %v4568 = vmax.f32 %v4504, 0.0
    %v4569 = vmax.f32 %v4505, 0.0
    %v4570 = vmax.f32 %v4506, 0.0
    %v4571 = vmax.f32 %v4507, 0.0
    %v4572 = vmax.f32 %v4508, 0.0
    %v4573 = vmax.f32 %v4509, 0.0
    %v4574 = vmax.f32 %v4510, 0.0
    %v4575 = vmax.f32 %v4511, 0.0
    %v4576 = vmax.f32 %v4512, 0.0
    %v4577 = vmax.f32 %v4513, 0.0
    %v4578 = vmax.f32 %v4514, 0.0
    %v4579 = vmax.f32 %v4515, 0.0
    %v4580 = vmax.f32 %v4516, 0.0
    %v4581 = vmax.f32 %v4517, 0.0
    %v4582 = vmax.f32 %v4518, 0.0
    %v4583 = vmax.f32 %v4519, 0.0
    %v4584 = vmax.f32 %v4520, 0.0
    %v4585 = vmax.f32 %v4521, 0.0
    %v4586 = vmax.f32 %v4522, 0.0
    %v4587 = vmax.f32 %v4523, 0.0
    %v4588 = vmax.f32 %v4524, 0.0
    %v4589 = vmax.f32 %v4525, 0.0
    %v4590 = vmax.f32 %v4526, 0.0
    %v4591 = vmax.f32 %v4527, 0.0
    %v4592 = vmax.f32 %v4528, 0.0
    %v4593 = vmax.f32 %v4529, 0.0
    %v4594 = vmax.f32 %v4530, 0.0
    %v4595 = vmax.f32 %v4531, 0.0
    %v4596 = vmax.f32 %v4532, 0.0
    %v4597 = vmax.f32 %v4533, 0.0
    %v4598 = vmax.f32 %v4534, 0.0
    %v4599 = vmax.f32 %v4535, 0.0
    %v4600 = vmax.f32 %v4536, 0.0
    %v4601 = vmax.f32 %v4537, 0.0
    %v4602 = vmax.f32 %v4538, 0.0
    %v4603 = vpack.c.bf16 %v4540, %v4539
    %v4604 = vpack.c.bf16 %v4542, %v4541
    %v4605 = vpack.c.bf16 %v4544, %v4543
    %v4606 = vpack.c.bf16 %v4546, %v4545
    %v4607 = vpack.c.bf16 %v4548, %v4547
    %v4608 = vpack.c.bf16 %v4550, %v4549
    %v4609 = vpack.c.bf16 %v4552, %v4551
    %v4610 = vpack.c.bf16 %v4554, %v4553
    %v4611 = vpack.c.bf16 %v4556, %v4555
    %v4612 = vpack.c.bf16 %v4558, %v4557
    %v4613 = vpack.c.bf16 %v4560, %v4559
    %v4614 = vpack.c.bf16 %v4562, %v4561
    %v4615 = vpack.c.bf16 %v4564, %v4563
    %v4616 = vpack.c.bf16 %v4566, %v4565
    %v4617 = vpack.c.bf16 %v4568, %v4567
    %v4618 = vpack.c.bf16 %v4570, %v4569
    %v4619 = vpack.c.bf16 %v4572, %v4571
    %v4620 = vpack.c.bf16 %v4574, %v4573
    %v4621 = vpack.c.bf16 %v4576, %v4575
    %v4622 = vpack.c.bf16 %v4578, %v4577
    %v4623 = vpack.c.bf16 %v4580, %v4579
    %v4624 = vpack.c.bf16 %v4582, %v4581
    %v4625 = vpack.c.bf16 %v4584, %v4583
    %v4626 = vpack.c.bf16 %v4586, %v4585
    %v4627 = vpack.c.bf16 %v4588, %v4587
    %v4628 = vpack.c.bf16 %v4590, %v4589
    %v4629 = vpack.c.bf16 %v4592, %v4591
    %v4630 = vpack.c.bf16 %v4594, %v4593
    %v4631 = vpack.c.bf16 %v4596, %v4595
    %v4632 = vpack.c.bf16 %v4598, %v4597
    %v4633 = vpack.c.bf16 %v4600, %v4599
    %v4634 = vpack.c.bf16 %v4602, %v4601
    %v4635 = vld [vmem:[%s7] sm:$0xf]
    %v4636 = vld [vmem:[%s7 + $0x4] sm:$0xf]
    %v4637 = vld [vmem:[%s7 + $0x8] sm:$0xf]
    %v4638 = vld [vmem:[%s7 + $0xc] sm:$0xf]
    %v4643 = vunpack.c.l.b16 %v4635
    %v4644 = vunpack.c.l.b16 %v4636
    %v4645 = vunpack.c.l.b16 %v4637
    %v4646 = vunpack.c.l.b16 %v4638
    %v4647 = vpack.c.b16 %v4644, %v4643
    %v4648 = vpack.c.b16 %v4646, %v4645
    %v4652 = vsel %vm502, %v4603, 0
    %v4655 = vsel %vm502, %v4604, 0
    %v4658 = vsel %vm502, %v4605, 0
    %v4661 = vsel %vm502, %v4606, 0
    %v4664 = vsel %vm502, %v4607, 0
    %v4667 = vsel %vm502, %v4608, 0
    %v4670 = vsel %vm502, %v4609, 0
    %v4673 = vsel %vm502, %v4610, 0
    %v4676 = vsel %vm502, %v4611, 0
    %v4679 = vsel %vm502, %v4612, 0
    %v4682 = vsel %vm502, %v4613, 0
    %v4685 = vsel %vm502, %v4614, 0
    %v4688 = vsel %vm502, %v4615, 0
    %v4691 = vsel %vm502, %v4616, 0
    %v4694 = vsel %vm502, %v4617, 0
    %v4697 = vsel %vm502, %v4618, 0
    %v4700 = vsel %vm502, %v4619, 0
    %v4703 = vsel %vm502, %v4620, 0
    %v4706 = vsel %vm502, %v4621, 0
    %v4709 = vsel %vm502, %v4622, 0
    %v4712 = vsel %vm502, %v4623, 0
    %v4715 = vsel %vm502, %v4624, 0
    %v4718 = vsel %vm502, %v4625, 0
    %v4721 = vsel %vm502, %v4626, 0
    %v4724 = vsel %vm502, %v4627, 0
    %v4727 = vsel %vm502, %v4628, 0
    %v4730 = vsel %vm502, %v4629, 0
    %v4733 = vsel %vm502, %v4630, 0
    %v4736 = vsel %vm502, %v4631, 0
    %v4739 = vsel %vm502, %v4632, 0
    %v4742 = vsel %vm502, %v4633, 0
    %v4745 = vsel %vm502, %v4634, 0
    %4747 = vmatprep.subr.bf16.mxu0 0
    %4748 = vmatpush1.bf16.msra.mxu0 %v4647
    %4749 = vmatprep.subr.bf16.mxu0 0
    %4750 = vmatpush1.bf16.msra.mxu0 %v4648
    %4751 = vmatprep.subr.bf16.mxu0 0
    %4752 = vmatpush1.bf16.msra.mxu0 0
    %4753 = vmatprep.subr.bf16.mxu0 0
    %4754 = vmatpush1.bf16.msra.mxu0 0
    %4755 = vmatprep.subr.bf16.mxu0 0
    %4756 = vmatpush1.bf16.msra.mxu0 0
    %4757 = vmatprep.subr.bf16.mxu0 0
    %4758 = vmatpush1.bf16.msra.mxu0 0
    %4759 = vmatprep.subr.bf16.mxu0 0
    %4760 = vmatpush1.bf16.msra.mxu0 0
    %4761 = vmatprep.subr.bf16.mxu0 0
    %4762 = vmatpush1.bf16.msra.mxu0 0
    %4763 = vmatprep.subr.bf16.mxu0 0
    %4764 = vmatpush1.bf16.msra.mxu0 0
    %4765 = vmatprep.subr.bf16.mxu0 0
    %4766 = vmatpush1.bf16.msra.mxu0 0
    %4767 = vmatprep.subr.bf16.mxu0 0
    %4768 = vmatpush1.bf16.msra.mxu0 0
    %4769 = vmatprep.subr.bf16.mxu0 0
    %4770 = vmatpush1.bf16.msra.mxu0 0
    %4771 = vmatprep.subr.bf16.mxu0 0
    %4772 = vmatpush1.bf16.msra.mxu0 0
    %4773 = vmatprep.subr.bf16.mxu0 0
    %4774 = vmatpush1.bf16.msra.mxu0 0
    %4775 = vmatprep.subr.bf16.mxu0 0
    %4776 = vmatpush1.bf16.msra.mxu0 0
    %4777 = vmatprep.subr.bf16.mxu0 0
    %4778 = vmatpush1.bf16.msra.mxu0 0
    %4779 = vmatprep.mubr.bf16.mxu0 0
    %4780 = vmatmul.mubr.bf16.gmra.mrb[0].mxu0 %v4652
    %v4781 = vpop.f32.mrb[0].mxu0
    %v4782 = vadd.f32 0.0, %v4781
    %v4783 = vpop.f32.mrb[0].mxu0
    %v4784 = vpop.f32.mrb[0].mxu0
    %v4785 = vadd.f32 0.0, %v4784
    %v4786 = vpop.f32.mrb[0].mxu0
    %4787 = vmatprep.mubr.bf16.mxu0 0
    %4788 = vmatmul.mubr.bf16.gmra.mrb[0].mxu0 %v4655
    %v4789 = vpop.f32.mrb[0].mxu0
    %v4790 = vadd.f32 0.0, %v4789
    %v4791 = vpop.f32.mrb[0].mxu0
    %v4792 = vpop.f32.mrb[0].mxu0
    %v4793 = vadd.f32 0.0, %v4792
    %v4794 = vpop.f32.mrb[0].mxu0
    %4795 = vmatprep.mubr.bf16.mxu0 0
    %4796 = vmatmul.mubr.bf16.gmra.mrb[0].mxu0 %v4658
    %v4797 = vpop.f32.mrb[0].mxu0
    %v4798 = vadd.f32 0.0, %v4797
    %v4799 = vpop.f32.mrb[0].mxu0
    %v4800 = vpop.f32.mrb[0].mxu0
    %v4801 = vadd.f32 0.0, %v4800
    %v4802 = vpop.f32.mrb[0].mxu0
    %4803 = vmatprep.mubr.bf16.mxu0 0
    %4804 = vmatmul.mubr.bf16.gmra.mrb[0].mxu0 %v4661
    %v4805 = vpop.f32.mrb[0].mxu0
    %v4806 = vadd.f32 0.0, %v4805
    %v4807 = vpop.f32.mrb[0].mxu0
    %v4808 = vpop.f32.mrb[0].mxu0
    %v4809 = vadd.f32 0.0, %v4808
    %v4810 = vpop.f32.mrb[0].mxu0
    %4811 = vmatprep.mubr.bf16.mxu0 0
    %4812 = vmatmul.mubr.bf16.gmra.mrb[0].mxu0 %v4664
    %v4813 = vpop.f32.mrb[0].mxu0
    %v4814 = vadd.f32 0.0, %v4813
    %v4815 = vpop.f32.mrb[0].mxu0
    %v4816 = vpop.f32.mrb[0].mxu0
    %v4817 = vadd.f32 0.0, %v4816
    %v4818 = vpop.f32.mrb[0].mxu0
    %4819 = vmatprep.mubr.bf16.mxu0 0
    %4820 = vmatmul.mubr.bf16.gmra.mrb[0].mxu0 %v4667
    %v4821 = vpop.f32.mrb[0].mxu0
    %v4822 = vadd.f32 0.0, %v4821
    %v4823 = vpop.f32.mrb[0].mxu0
    %v4824 = vpop.f32.mrb[0].mxu0
    %v4825 = vadd.f32 0.0, %v4824
    %v4826 = vpop.f32.mrb[0].mxu0
    %4827 = vmatprep.mubr.bf16.mxu0 0
    %4828 = vmatmul.mubr.bf16.gmra.mrb[0].mxu0 %v4670
    %v4829 = vpop.f32.mrb[0].mxu0
    %v4830 = vadd.f32 0.0, %v4829
    %v4831 = vpop.f32.mrb[0].mxu0
    %v4832 = vpop.f32.mrb[0].mxu0
    %v4833 = vadd.f32 0.0, %v4832
    %v4834 = vpop.f32.mrb[0].mxu0
    %4835 = vmatprep.mubr.bf16.mxu0 0
    %4836 = vmatmul.mubr.bf16.gmra.mrb[0].mxu0 %v4673
    %v4837 = vpop.f32.mrb[0].mxu0
    %v4838 = vadd.f32 0.0, %v4837
    %v4839 = vpop.f32.mrb[0].mxu0
    %v4840 = vpop.f32.mrb[0].mxu0
    %v4841 = vadd.f32 0.0, %v4840
    %v4842 = vpop.f32.mrb[0].mxu0
    %4843 = vmatprep.mubr.bf16.mxu0 0
    %4844 = vmatmul.mubr.bf16.gmra.mrb[0].mxu0 %v4676
    %v4845 = vpop.f32.mrb[0].mxu0
    %v4846 = vadd.f32 0.0, %v4845
    %v4847 = vpop.f32.mrb[0].mxu0
    %v4848 = vpop.f32.mrb[0].mxu0
    %v4849 = vadd.f32 0.0, %v4848
    %v4850 = vpop.f32.mrb[0].mxu0
    %4851 = vmatprep.mubr.bf16.mxu0 0
    %4852 = vmatmul.mubr.bf16.gmra.mrb[0].mxu0 %v4679
    %v4853 = vpop.f32.mrb[0].mxu0
    %v4854 = vadd.f32 0.0, %v4853
    %v4855 = vpop.f32.mrb[0].mxu0
    %v4856 = vpop.f32.mrb[0].mxu0
    %v4857 = vadd.f32 0.0, %v4856
    %v4858 = vpop.f32.mrb[0].mxu0
    %4859 = vmatprep.mubr.bf16.mxu0 0
    %4860 = vmatmul.mubr.bf16.gmra.mrb[0].mxu0 %v4682
    %v4861 = vpop.f32.mrb[0].mxu0
    %v4862 = vadd.f32 0.0, %v4861
    %v4863 = vpop.f32.mrb[0].mxu0
    %v4864 = vpop.f32.mrb[0].mxu0
    %v4865 = vadd.f32 0.0, %v4864
    %v4866 = vpop.f32.mrb[0].mxu0
    %4867 = vmatprep.mubr.bf16.mxu0 0
    %4868 = vmatmul.mubr.bf16.gmra.mrb[0].mxu0 %v4685
    %v4869 = vpop.f32.mrb[0].mxu0
    %v4870 = vadd.f32 0.0, %v4869
    %v4871 = vpop.f32.mrb[0].mxu0
    %v4872 = vpop.f32.mrb[0].mxu0
    %v4873 = vadd.f32 0.0, %v4872
    %v4874 = vpop.f32.mrb[0].mxu0
    %4875 = vmatprep.mubr.bf16.mxu0 0
    %4876 = vmatmul.mubr.bf16.gmra.mrb[0].mxu0 %v4688
    %v4877 = vpop.f32.mrb[0].mxu0
    %v4878 = vadd.f32 0.0, %v4877
    %v4879 = vpop.f32.mrb[0].mxu0
    %v4880 = vpop.f32.mrb[0].mxu0
    %v4881 = vadd.f32 0.0, %v4880
    %v4882 = vpop.f32.mrb[0].mxu0
    %4883 = vmatprep.mubr.bf16.mxu0 0
    %4884 = vmatmul.mubr.bf16.gmra.mrb[0].mxu0 %v4691
    %v4885 = vpop.f32.mrb[0].mxu0
    %v4886 = vadd.f32 0.0, %v4885
    %v4887 = vpop.f32.mrb[0].mxu0
    %v4888 = vpop.f32.mrb[0].mxu0
    %v4889 = vadd.f32 0.0, %v4888
    %v4890 = vpop.f32.mrb[0].mxu0
    %4891 = vmatprep.mubr.bf16.mxu0 0
    %4892 = vmatmul.mubr.bf16.gmra.mrb[0].mxu0 %v4694
    %v4893 = vpop.f32.mrb[0].mxu0
    %v4894 = vadd.f32 0.0, %v4893
    %v4895 = vpop.f32.mrb[0].mxu0
    %v4896 = vpop.f32.mrb[0].mxu0
    %v4897 = vadd.f32 0.0, %v4896
    %v4898 = vpop.f32.mrb[0].mxu0
    %4899 = vmatprep.mubr.bf16.mxu0 0
    %4900 = vmatmul.mubr.bf16.gmra.mrb[0].mxu0 %v4697
    %v4901 = vpop.f32.mrb[0].mxu0
    %v4902 = vadd.f32 0.0, %v4901
    %v4903 = vpop.f32.mrb[0].mxu0
    %v4904 = vpop.f32.mrb[0].mxu0
    %v4905 = vadd.f32 0.0, %v4904
    %v4906 = vpop.f32.mrb[0].mxu0
    %4907 = vmatprep.mubr.bf16.mxu0 0
    %4908 = vmatmul.mubr.bf16.gmra.mrb[0].mxu0 %v4700
    %v4909 = vpop.f32.mrb[0].mxu0
    %v4910 = vadd.f32 0.0, %v4909
    %v4911 = vpop.f32.mrb[0].mxu0
    %v4912 = vpop.f32.mrb[0].mxu0
    %v4913 = vadd.f32 0.0, %v4912
    %v4914 = vpop.f32.mrb[0].mxu0
    %4915 = vmatprep.mubr.bf16.mxu0 0
    %4916 = vmatmul.mubr.bf16.gmra.mrb[0].mxu0 %v4703
    %v4917 = vpop.f32.mrb[0].mxu0
    %v4918 = vadd.f32 0.0, %v4917
    %v4919 = vpop.f32.mrb[0].mxu0
    %v4920 = vpop.f32.mrb[0].mxu0
    %v4921 = vadd.f32 0.0, %v4920
    %v4922 = vpop.f32.mrb[0].mxu0
    %4923 = vmatprep.mubr.bf16.mxu0 0
    %4924 = vmatmul.mubr.bf16.gmra.mrb[0].mxu0 %v4706
    %v4925 = vpop.f32.mrb[0].mxu0
    %v4926 = vadd.f32 0.0, %v4925
    %v4927 = vpop.f32.mrb[0].mxu0
    %v4928 = vpop.f32.mrb[0].mxu0
    %v4929 = vadd.f32 0.0, %v4928
    %v4930 = vpop.f32.mrb[0].mxu0
    %4931 = vmatprep.mubr.bf16.mxu0 0
    %4932 = vmatmul.mubr.bf16.gmra.mrb[0].mxu0 %v4709
    %v4933 = vpop.f32.mrb[0].mxu0
    %v4934 = vadd.f32 0.0, %v4933
    %v4935 = vpop.f32.mrb[0].mxu0
    %v4936 = vpop.f32.mrb[0].mxu0
    %v4937 = vadd.f32 0.0, %v4936
    %v4938 = vpop.f32.mrb[0].mxu0
    %4939 = vmatprep.mubr.bf16.mxu0 0
    %4940 = vmatmul.mubr.bf16.gmra.mrb[0].mxu0 %v4712
    %v4941 = vpop.f32.mrb[0].mxu0
    %v4942 = vadd.f32 0.0, %v4941
    %v4943 = vpop.f32.mrb[0].mxu0
    %v4944 = vpop.f32.mrb[0].mxu0
    %v4945 = vadd.f32 0.0, %v4944
    %v4946 = vpop.f32.mrb[0].mxu0
    %4947 = vmatprep.mubr.bf16.mxu0 0
    %4948 = vmatmul.mubr.bf16.gmra.mrb[0].mxu0 %v4715
    %v4949 = vpop.f32.mrb[0].mxu0
    %v4950 = vadd.f32 0.0, %v4949
    %v4951 = vpop.f32.mrb[0].mxu0
    %v4952 = vpop.f32.mrb[0].mxu0
    %v4953 = vadd.f32 0.0, %v4952
    %v4954 = vpop.f32.mrb[0].mxu0
    %4955 = vmatprep.mubr.bf16.mxu0 0
    %4956 = vmatmul.mubr.bf16.gmra.mrb[0].mxu0 %v4718
    %v4957 = vpop.f32.mrb[0].mxu0
    %v4958 = vadd.f32 0.0, %v4957
    %v4959 = vpop.f32.mrb[0].mxu0
    %v4960 = vpop.f32.mrb[0].mxu0
    %v4961 = vadd.f32 0.0, %v4960
    %v4962 = vpop.f32.mrb[0].mxu0
    %4963 = vmatprep.mubr.bf16.mxu0 0
    %4964 = vmatmul.mubr.bf16.gmra.mrb[0].mxu0 %v4721
    %v4965 = vpop.f32.mrb[0].mxu0
    %v4966 = vadd.f32 0.0, %v4965
    %v4967 = vpop.f32.mrb[0].mxu0
    %v4968 = vpop.f32.mrb[0].mxu0
    %v4969 = vadd.f32 0.0, %v4968
    %v4970 = vpop.f32.mrb[0].mxu0
    %4971 = vmatprep.mubr.bf16.mxu0 0
    %4972 = vmatmul.mubr.bf16.gmra.mrb[0].mxu0 %v4724
    %v4973 = vpop.f32.mrb[0].mxu0
    %v4974 = vadd.f32 0.0, %v4973
    %v4975 = vpop.f32.mrb[0].mxu0
    %v4976 = vpop.f32.mrb[0].mxu0
    %v4977 = vadd.f32 0.0, %v4976
    %v4978 = vpop.f32.mrb[0].mxu0
    %4979 = vmatprep.mubr.bf16.mxu0 0
    %4980 = vmatmul.mubr.bf16.gmra.mrb[0].mxu0 %v4727
    %v4981 = vpop.f32.mrb[0].mxu0
    %v4982 = vadd.f32 0.0, %v4981
    %v4983 = vpop.f32.mrb[0].mxu0
    %v4984 = vpop.f32.mrb[0].mxu0
    %v4985 = vadd.f32 0.0, %v4984
    %v4986 = vpop.f32.mrb[0].mxu0
    %4987 = vmatprep.mubr.bf16.mxu0 0
    %4988 = vmatmul.mubr.bf16.gmra.mrb[0].mxu0 %v4730
    %v4989 = vpop.f32.mrb[0].mxu0
    %v4990 = vadd.f32 0.0, %v4989
    %v4991 = vpop.f32.mrb[0].mxu0
    %v4992 = vpop.f32.mrb[0].mxu0
    %v4993 = vadd.f32 0.0, %v4992
    %v4994 = vpop.f32.mrb[0].mxu0
    %4995 = vmatprep.mubr.bf16.mxu0 0
    %4996 = vmatmul.mubr.bf16.gmra.mrb[0].mxu0 %v4733
    %v4997 = vpop.f32.mrb[0].mxu0
    %v4998 = vadd.f32 0.0, %v4997
    %v4999 = vpop.f32.mrb[0].mxu0
    %v5000 = vpop.f32.mrb[0].mxu0
    %v5001 = vadd.f32 0.0, %v5000
    %v5002 = vpop.f32.mrb[0].mxu0
    %5003 = vmatprep.mubr.bf16.mxu0 0
    %5004 = vmatmul.mubr.bf16.gmra.mrb[0].mxu0 %v4736
    %v5005 = vpop.f32.mrb[0].mxu0
    %v5006 = vadd.f32 0.0, %v5005
    %v5007 = vpop.f32.mrb[0].mxu0
    %v5008 = vpop.f32.mrb[0].mxu0
    %v5009 = vadd.f32 0.0, %v5008
    %v5010 = vpop.f32.mrb[0].mxu0
    %5011 = vmatprep.mubr.bf16.mxu0 0
    %5012 = vmatmul.mubr.bf16.gmra.mrb[0].mxu0 %v4739
    %v5013 = vpop.f32.mrb[0].mxu0
    %v5014 = vadd.f32 0.0, %v5013
    %v5015 = vpop.f32.mrb[0].mxu0
    %v5016 = vpop.f32.mrb[0].mxu0
    %v5017 = vadd.f32 0.0, %v5016
    %v5018 = vpop.f32.mrb[0].mxu0
    %5019 = vmatprep.mubr.bf16.mxu0 0
    %5020 = vmatmul.mubr.bf16.gmra.mrb[0].mxu0 %v4742
    %v5021 = vpop.f32.mrb[0].mxu0
    %v5022 = vadd.f32 0.0, %v5021
    %v5023 = vpop.f32.mrb[0].mxu0
    %v5024 = vpop.f32.mrb[0].mxu0
    %v5025 = vadd.f32 0.0, %v5024
    %v5026 = vpop.f32.mrb[0].mxu0
    %5027 = vmatprep.mubr.bf16.mxu0 0
    %5028 = vmatmul.mubr.bf16.gmra.mrb[0].mxu0 %v4745
    %v5029 = vpop.f32.mrb[0].mxu0
    %v5030 = vadd.f32 0.0, %v5029
    %v5031 = vpop.f32.mrb[0].mxu0
    %v5032 = vpop.f32.mrb[0].mxu0
    %v5033 = vadd.f32 0.0, %v5032
    %v5034 = vpop.f32.mrb[0].mxu0
    %5035 = vdwg.mxu0
    %v5036 = vld [vmem:[%s8] sm:$0x1]
    %v5037 = vld [vmem:[%s9] sm:$0x1]
    %v5038 = vadd.f32 %v4782, %v4785
    %v5039 = vadd.f32 %v5038, %v4790
    %v5040 = vadd.f32 %v5039, %v4793
    %v5041 = vadd.f32 %v5040, %v4798
    %v5042 = vadd.f32 %v5041, %v4801
    %v5043 = vadd.f32 %v5042, %v4806
    %v5044 = vadd.f32 %v5043, %v4809
    %v5045 = vadd.f32 %v5044, %v4814
    %v5046 = vadd.f32 %v5045, %v4817
    %v5047 = vadd.f32 %v5046, %v4822
    %v5048 = vadd.f32 %v5047, %v4825
    %v5049 = vadd.f32 %v5048, %v4830
    %v5050 = vadd.f32 %v5049, %v4833
    %v5051 = vadd.f32 %v5050, %v4838
    %v5052 = vadd.f32 %v5051, %v4841
    %v5053 = vadd.f32 %v5052, %v4846
    %v5054 = vadd.f32 %v5053, %v4849
    %v5055 = vadd.f32 %v5054, %v4854
    %v5056 = vadd.f32 %v5055, %v4857
    %v5057 = vadd.f32 %v5056, %v4862
    %v5058 = vadd.f32 %v5057, %v4865
    %v5059 = vadd.f32 %v5058, %v4870
    %v5060 = vadd.f32 %v5059, %v4873
    %v5061 = vadd.f32 %v5060, %v4878
    %v5062 = vadd.f32 %v5061, %v4881
    %v5063 = vadd.f32 %v5062, %v4886
    %v5064 = vadd.f32 %v5063, %v4889
    %v5065 = vadd.f32 %v5064, %v4894
    %v5066 = vadd.f32 %v5065, %v4897
    %v5067 = vadd.f32 %v5066, %v4902
    %v5068 = vadd.f32 %v5067, %v4905
    %v5069 = vadd.f32 %v5068, %v4910
    %v5070 = vadd.f32 %v5069, %v4913
    %v5071 = vadd.f32 %v5070, %v4918
    %v5072 = vadd.f32 %v5071, %v4921
    %v5073 = vadd.f32 %v5072, %v4926
    %v5074 = vadd.f32 %v5073, %v4929
    %v5075 = vadd.f32 %v5074, %v4934
    %v5076 = vadd.f32 %v5075, %v4937
    %v5077 = vadd.f32 %v5076, %v4942
    %v5078 = vadd.f32 %v5077, %v4945
    %v5079 = vadd.f32 %v5078, %v4950
    %v5080 = vadd.f32 %v5079, %v4953
    %v5081 = vadd.f32 %v5080, %v4958
    %v5082 = vadd.f32 %v5081, %v4961
    %v5083 = vadd.f32 %v5082, %v4966
    %v5084 = vadd.f32 %v5083, %v4969
    %v5085 = vadd.f32 %v5084, %v4974
    %v5086 = vadd.f32 %v5085, %v4977
    %v5087 = vadd.f32 %v5086, %v4982
    %v5088 = vadd.f32 %v5087, %v4985
    %v5089 = vadd.f32 %v5088, %v4990
    %v5090 = vadd.f32 %v5089, %v4993
    %v5091 = vadd.f32 %v5090, %v4998
    %v5092 = vadd.f32 %v5091, %v5001
    %v5093 = vadd.f32 %v5092, %v5006
    %v5094 = vadd.f32 %v5093, %v5009
    %v5095 = vadd.f32 %v5094, %v5014
    %v5096 = vadd.f32 %v5095, %v5017
    %v5097 = vadd.f32 %v5096, %v5022
    %v5098 = vadd.f32 %v5097, %v5025
    %v5099 = vadd.f32 %v5098, %v5030
    %v5100 = vadd.f32 %v5099, %v5033
    %v5101 = vrot.slane %v5100, 4
    %v5102 = vadd.f32 %v5100, %v5101
    %v5103 = vrot.slane %v5102, 2
    %v5104 = vadd.f32 %v5102, %v5103
    %v5105 = vrot.slane %v5104, 1
    %v5106 = vadd.f32 %v5104, %v5105
    %v5107 = vmul.f32 %v5106, 0.001953125
    %v5108 = vmul.f32 %v4782, %v4782
    %v5109 = vmul.f32 %v4785, %v4785
    %v5110 = vmul.f32 %v4790, %v4790
    %v5111 = vmul.f32 %v4793, %v4793
    %v5112 = vmul.f32 %v4798, %v4798
    %v5113 = vmul.f32 %v4801, %v4801
    %v5114 = vmul.f32 %v4806, %v4806
    %v5115 = vmul.f32 %v4809, %v4809
    %v5116 = vmul.f32 %v4814, %v4814
    %v5117 = vmul.f32 %v4817, %v4817
    %v5118 = vmul.f32 %v4822, %v4822
    %v5119 = vmul.f32 %v4825, %v4825
    %v5120 = vmul.f32 %v4830, %v4830
    %v5121 = vmul.f32 %v4833, %v4833
    %v5122 = vmul.f32 %v4838, %v4838
    %v5123 = vmul.f32 %v4841, %v4841
    %v5124 = vmul.f32 %v4846, %v4846
    %v5125 = vmul.f32 %v4849, %v4849
    %v5126 = vmul.f32 %v4854, %v4854
    %v5127 = vmul.f32 %v4857, %v4857
    %v5128 = vmul.f32 %v4862, %v4862
    %v5129 = vmul.f32 %v4865, %v4865
    %v5130 = vmul.f32 %v4870, %v4870
    %v5131 = vmul.f32 %v4873, %v4873
    %v5132 = vmul.f32 %v4878, %v4878
    %v5133 = vmul.f32 %v4881, %v4881
    %v5134 = vmul.f32 %v4886, %v4886
    %v5135 = vmul.f32 %v4889, %v4889
    %v5136 = vmul.f32 %v4894, %v4894
    %v5137 = vmul.f32 %v4897, %v4897
    %v5138 = vmul.f32 %v4902, %v4902
    %v5139 = vmul.f32 %v4905, %v4905
    %v5140 = vmul.f32 %v4910, %v4910
    %v5141 = vmul.f32 %v4913, %v4913
    %v5142 = vmul.f32 %v4918, %v4918
    %v5143 = vmul.f32 %v4921, %v4921
    %v5144 = vmul.f32 %v4926, %v4926
    %v5145 = vmul.f32 %v4929, %v4929
    %v5146 = vmul.f32 %v4934, %v4934
    %v5147 = vmul.f32 %v4937, %v4937
    %v5148 = vmul.f32 %v4942, %v4942
    %v5149 = vmul.f32 %v4945, %v4945
    %v5150 = vmul.f32 %v4950, %v4950
    %v5151 = vmul.f32 %v4953, %v4953
    %v5152 = vmul.f32 %v4958, %v4958
    %v5153 = vmul.f32 %v4961, %v4961
    %v5154 = vmul.f32 %v4966, %v4966
    %v5155 = vmul.f32 %v4969, %v4969
    %v5156 = vmul.f32 %v4974, %v4974
    %v5157 = vmul.f32 %v4977, %v4977
    %v5158 = vmul.f32 %v4982, %v4982
    %v5159 = vmul.f32 %v4985, %v4985
    %v5160 = vmul.f32 %v4990, %v4990
    %v5161 = vmul.f32 %v4993, %v4993
    %v5162 = vmul.f32 %v4998, %v4998
    %v5163 = vmul.f32 %v5001, %v5001
    %v5164 = vmul.f32 %v5006, %v5006
    %v5165 = vmul.f32 %v5009, %v5009
    %v5166 = vmul.f32 %v5014, %v5014
    %v5167 = vmul.f32 %v5017, %v5017
    %v5168 = vmul.f32 %v5022, %v5022
    %v5169 = vmul.f32 %v5025, %v5025
    %v5170 = vmul.f32 %v5030, %v5030
    %v5171 = vmul.f32 %v5033, %v5033
    %v5172 = vadd.f32 %v5108, %v5109
    %v5173 = vadd.f32 %v5172, %v5110
    %v5174 = vadd.f32 %v5173, %v5111
    %v5175 = vadd.f32 %v5174, %v5112
    %v5176 = vadd.f32 %v5175, %v5113
    %v5177 = vadd.f32 %v5176, %v5114
    %v5178 = vadd.f32 %v5177, %v5115
    %v5179 = vadd.f32 %v5178, %v5116
    %v5180 = vadd.f32 %v5179, %v5117
    %v5181 = vadd.f32 %v5180, %v5118
    %v5182 = vadd.f32 %v5181, %v5119
    %v5183 = vadd.f32 %v5182, %v5120
    %v5184 = vadd.f32 %v5183, %v5121
    %v5185 = vadd.f32 %v5184, %v5122
    %v5186 = vadd.f32 %v5185, %v5123
    %v5187 = vadd.f32 %v5186, %v5124
    %v5188 = vadd.f32 %v5187, %v5125
    %v5189 = vadd.f32 %v5188, %v5126
    %v5190 = vadd.f32 %v5189, %v5127
    %v5191 = vadd.f32 %v5190, %v5128
    %v5192 = vadd.f32 %v5191, %v5129
    %v5193 = vadd.f32 %v5192, %v5130
    %v5194 = vadd.f32 %v5193, %v5131
    %v5195 = vadd.f32 %v5194, %v5132
    %v5196 = vadd.f32 %v5195, %v5133
    %v5197 = vadd.f32 %v5196, %v5134
    %v5198 = vadd.f32 %v5197, %v5135
    %v5199 = vadd.f32 %v5198, %v5136
    %v5200 = vadd.f32 %v5199, %v5137
    %v5201 = vadd.f32 %v5200, %v5138
    %v5202 = vadd.f32 %v5201, %v5139
    %v5203 = vadd.f32 %v5202, %v5140
    %v5204 = vadd.f32 %v5203, %v5141
    %v5205 = vadd.f32 %v5204, %v5142
    %v5206 = vadd.f32 %v5205, %v5143
    %v5207 = vadd.f32 %v5206, %v5144
    %v5208 = vadd.f32 %v5207, %v5145
    %v5209 = vadd.f32 %v5208, %v5146
    %v5210 = vadd.f32 %v5209, %v5147
    %v5211 = vadd.f32 %v5210, %v5148
    %v5212 = vadd.f32 %v5211, %v5149
    %v5213 = vadd.f32 %v5212, %v5150
    %v5214 = vadd.f32 %v5213, %v5151
    %v5215 = vadd.f32 %v5214, %v5152
    %v5216 = vadd.f32 %v5215, %v5153
    %v5217 = vadd.f32 %v5216, %v5154
    %v5218 = vadd.f32 %v5217, %v5155
    %v5219 = vadd.f32 %v5218, %v5156
    %v5220 = vadd.f32 %v5219, %v5157
    %v5221 = vadd.f32 %v5220, %v5158
    %v5222 = vadd.f32 %v5221, %v5159
    %v5223 = vadd.f32 %v5222, %v5160
    %v5224 = vadd.f32 %v5223, %v5161
    %v5225 = vadd.f32 %v5224, %v5162
    %v5226 = vadd.f32 %v5225, %v5163
    %v5227 = vadd.f32 %v5226, %v5164
    %v5228 = vadd.f32 %v5227, %v5165
    %v5229 = vadd.f32 %v5228, %v5166
    %v5230 = vadd.f32 %v5229, %v5167
    %v5231 = vadd.f32 %v5230, %v5168
    %v5232 = vadd.f32 %v5231, %v5169
    %v5233 = vadd.f32 %v5232, %v5170
    %v5234 = vadd.f32 %v5233, %v5171
    %v5235 = vrot.slane %v5234, 4
    %v5236 = vadd.f32 %v5234, %v5235
    %v5237 = vrot.slane %v5236, 2
    %v5238 = vadd.f32 %v5236, %v5237
    %v5239 = vrot.slane %v5238, 1
    %v5240 = vadd.f32 %v5238, %v5239
    %v5241 = vmul.f32 %v5240, 0.001953125
    %v5242 = vmul.f32 %v5107, %v5107
    %v5243 = vsub.f32 %v5241, %v5242
    %v5244 = vadd.f32 %v5243, 1e-05
    %v5245 = vrsqrt.pop %v5244
    %v5246 = vmul.f32 %v5036, %v5245
    %v5247 = vmul.f32 %v5107, %v5246
    %v5248 = vsub.f32 %v5037, %v5247
    %v5250 = vlaneseq
    %v5251 = vshrl.u32 %v5250, 7
    %v5252 = vsub.s32 0, %v5251
    %v5253 = vrot.slane %v5246, %v5252
    %v5255 = vmul.f32 %v4782, %v5253
    %v5256 = vmul.f32 %v4785, %v5253
    %v5257 = vmul.f32 %v4790, %v5253
    %v5258 = vmul.f32 %v4793, %v5253
    %v5259 = vmul.f32 %v4798, %v5253
    %v5260 = vmul.f32 %v4801, %v5253
    %v5261 = vmul.f32 %v4806, %v5253
    %v5262 = vmul.f32 %v4809, %v5253
    %v5263 = vmul.f32 %v4814, %v5253
    %v5264 = vmul.f32 %v4817, %v5253
    %v5265 = vmul.f32 %v4822, %v5253
    %v5266 = vmul.f32 %v4825, %v5253
    %v5267 = vmul.f32 %v4830, %v5253
    %v5268 = vmul.f32 %v4833, %v5253
    %v5269 = vmul.f32 %v4838, %v5253
    %v5270 = vmul.f32 %v4841, %v5253
    %v5271 = vmul.f32 %v4846, %v5253
    %v5272 = vmul.f32 %v4849, %v5253
    %v5273 = vmul.f32 %v4854, %v5253
    %v5274 = vmul.f32 %v4857, %v5253
    %v5275 = vmul.f32 %v4862, %v5253
    %v5276 = vmul.f32 %v4865, %v5253
    %v5277 = vmul.f32 %v4870, %v5253
    %v5278 = vmul.f32 %v4873, %v5253
    %v5279 = vmul.f32 %v4878, %v5253
    %v5280 = vmul.f32 %v4881, %v5253
    %v5281 = vmul.f32 %v4886, %v5253
    %v5282 = vmul.f32 %v4889, %v5253
    %v5283 = vmul.f32 %v4894, %v5253
    %v5284 = vmul.f32 %v4897, %v5253
    %v5285 = vmul.f32 %v4902, %v5253
    %v5286 = vmul.f32 %v4905, %v5253
    %v5287 = vmul.f32 %v4910, %v5253
    %v5288 = vmul.f32 %v4913, %v5253
    %v5289 = vmul.f32 %v4918, %v5253
    %v5290 = vmul.f32 %v4921, %v5253
    %v5291 = vmul.f32 %v4926, %v5253
    %v5292 = vmul.f32 %v4929, %v5253
    %v5293 = vmul.f32 %v4934, %v5253
    %v5294 = vmul.f32 %v4937, %v5253
    %v5295 = vmul.f32 %v4942, %v5253
    %v5296 = vmul.f32 %v4945, %v5253
    %v5297 = vmul.f32 %v4950, %v5253
    %v5298 = vmul.f32 %v4953, %v5253
    %v5299 = vmul.f32 %v4958, %v5253
    %v5300 = vmul.f32 %v4961, %v5253
    %v5301 = vmul.f32 %v4966, %v5253
    %v5302 = vmul.f32 %v4969, %v5253
    %v5303 = vmul.f32 %v4974, %v5253
    %v5304 = vmul.f32 %v4977, %v5253
    %v5305 = vmul.f32 %v4982, %v5253
    %v5306 = vmul.f32 %v4985, %v5253
    %v5307 = vmul.f32 %v4990, %v5253
    %v5308 = vmul.f32 %v4993, %v5253
    %v5309 = vmul.f32 %v4998, %v5253
    %v5310 = vmul.f32 %v5001, %v5253
    %v5311 = vmul.f32 %v5006, %v5253
    %v5312 = vmul.f32 %v5009, %v5253
    %v5313 = vmul.f32 %v5014, %v5253
    %v5314 = vmul.f32 %v5017, %v5253
    %v5315 = vmul.f32 %v5022, %v5253
    %v5316 = vmul.f32 %v5025, %v5253
    %v5317 = vmul.f32 %v5030, %v5253
    %v5318 = vmul.f32 %v5033, %v5253
    %v5320 = vlaneseq
    %v5321 = vshrl.u32 %v5320, 7
    %v5322 = vsub.s32 0, %v5321
    %v5323 = vrot.slane %v5248, %v5322
    %v5325 = vadd.f32 %v5255, %v5323
    %v5326 = vadd.f32 %v5256, %v5323
    %v5327 = vadd.f32 %v5257, %v5323
    %v5328 = vadd.f32 %v5258, %v5323
    %v5329 = vadd.f32 %v5259, %v5323
    %v5330 = vadd.f32 %v5260, %v5323
    %v5331 = vadd.f32 %v5261, %v5323
    %v5332 = vadd.f32 %v5262, %v5323
    %v5333 = vadd.f32 %v5263, %v5323
    %v5334 = vadd.f32 %v5264, %v5323
    %v5335 = vadd.f32 %v5265, %v5323
    %v5336 = vadd.f32 %v5266, %v5323
    %v5337 = vadd.f32 %v5267, %v5323
    %v5338 = vadd.f32 %v5268, %v5323
    %v5339 = vadd.f32 %v5269, %v5323
    %v5340 = vadd.f32 %v5270, %v5323
    %v5341 = vadd.f32 %v5271, %v5323
    %v5342 = vadd.f32 %v5272, %v5323
    %v5343 = vadd.f32 %v5273, %v5323
    %v5344 = vadd.f32 %v5274, %v5323
    %v5345 = vadd.f32 %v5275, %v5323
    %v5346 = vadd.f32 %v5276, %v5323
    %v5347 = vadd.f32 %v5277, %v5323
    %v5348 = vadd.f32 %v5278, %v5323
    %v5349 = vadd.f32 %v5279, %v5323
    %v5350 = vadd.f32 %v5280, %v5323
    %v5351 = vadd.f32 %v5281, %v5323
    %v5352 = vadd.f32 %v5282, %v5323
    %v5353 = vadd.f32 %v5283, %v5323
    %v5354 = vadd.f32 %v5284, %v5323
    %v5355 = vadd.f32 %v5285, %v5323
    %v5356 = vadd.f32 %v5286, %v5323
    %v5357 = vadd.f32 %v5287, %v5323
    %v5358 = vadd.f32 %v5288, %v5323
    %v5359 = vadd.f32 %v5289, %v5323
    %v5360 = vadd.f32 %v5290, %v5323
    %v5361 = vadd.f32 %v5291, %v5323
    %v5362 = vadd.f32 %v5292, %v5323
    %v5363 = vadd.f32 %v5293, %v5323
    %v5364 = vadd.f32 %v5294, %v5323
    %v5365 = vadd.f32 %v5295, %v5323
    %v5366 = vadd.f32 %v5296, %v5323
    %v5367 = vadd.f32 %v5297, %v5323
    %v5368 = vadd.f32 %v5298, %v5323
    %v5369 = vadd.f32 %v5299, %v5323
    %v5370 = vadd.f32 %v5300, %v5323
    %v5371 = vadd.f32 %v5301, %v5323
    %v5372 = vadd.f32 %v5302, %v5323
    %v5373 = vadd.f32 %v5303, %v5323
    %v5374 = vadd.f32 %v5304, %v5323
    %v5375 = vadd.f32 %v5305, %v5323
    %v5376 = vadd.f32 %v5306, %v5323
    %v5377 = vadd.f32 %v5307, %v5323
    %v5378 = vadd.f32 %v5308, %v5323
    %v5379 = vadd.f32 %v5309, %v5323
    %v5380 = vadd.f32 %v5310, %v5323
    %v5381 = vadd.f32 %v5311, %v5323
    %v5382 = vadd.f32 %v5312, %v5323
    %v5383 = vadd.f32 %v5313, %v5323
    %v5384 = vadd.f32 %v5314, %v5323
    %v5385 = vadd.f32 %v5315, %v5323
    %v5386 = vadd.f32 %v5316, %v5323
    %v5387 = vadd.f32 %v5317, %v5323
    %v5388 = vadd.f32 %v5318, %v5323
    %v5389 = vld [vmem:[#allocation4] sm:$0xff]
    %v5390 = vld [vmem:[#allocation4 + $0x8] sm:$0xff]
    %v5391 = vld [vmem:[#allocation4 + $0x10] sm:$0xff]
    %v5392 = vld [vmem:[#allocation4 + $0x18] sm:$0xff]
    %v5393 = vld [vmem:[#allocation4 + $0x20] sm:$0xff]
    %v5394 = vld [vmem:[#allocation4 + $0x28] sm:$0xff]
    %v5395 = vld [vmem:[#allocation4 + $0x30] sm:$0xff]
    %v5396 = vld [vmem:[#allocation4 + $0x38] sm:$0xff]
    %v5397 = vld [vmem:[#allocation4 + $0x40] sm:$0xff]
    %v5398 = vld [vmem:[#allocation4 + $0x48] sm:$0xff]
    %v5399 = vld [vmem:[#allocation4 + $0x50] sm:$0xff]
    %v5400 = vld [vmem:[#allocation4 + $0x58] sm:$0xff]
    %v5401 = vld [vmem:[#allocation4 + $0x60] sm:$0xff]
    %v5402 = vld [vmem:[#allocation4 + $0x68] sm:$0xff]
    %v5403 = vld [vmem:[#allocation4 + $0x70] sm:$0xff]
    %v5404 = vld [vmem:[#allocation4 + $0x78] sm:$0xff]
    %v5405 = vld [vmem:[#allocation4 + $0x80] sm:$0xff]
    %v5406 = vld [vmem:[#allocation4 + $0x88] sm:$0xff]
    %v5407 = vld [vmem:[#allocation4 + $0x90] sm:$0xff]
    %v5408 = vld [vmem:[#allocation4 + $0x98] sm:$0xff]
    %v5409 = vld [vmem:[#allocation4 + $0xa0] sm:$0xff]
    %v5410 = vld [vmem:[#allocation4 + $0xa8] sm:$0xff]
    %v5411 = vld [vmem:[#allocation4 + $0xb0] sm:$0xff]
    %v5412 = vld [vmem:[#allocation4 + $0xb8] sm:$0xff]
    %v5413 = vld [vmem:[#allocation4 + $0xc0] sm:$0xff]
    %v5414 = vld [vmem:[#allocation4 + $0xc8] sm:$0xff]
    %v5415 = vld [vmem:[#allocation4 + $0xd0] sm:$0xff]
    %v5416 = vld [vmem:[#allocation4 + $0xd8] sm:$0xff]
    %v5417 = vld [vmem:[#allocation4 + $0xe0] sm:$0xff]
    %v5418 = vld [vmem:[#allocation4 + $0xe8] sm:$0xff]
    %v5419 = vld [vmem:[#allocation4 + $0xf0] sm:$0xff]
    %v5420 = vld [vmem:[#allocation4 + $0xf8] sm:$0xff]
    %v5421 = vld [vmem:[#allocation4 + $0x100] sm:$0xff]
    %v5422 = vld [vmem:[#allocation4 + $0x108] sm:$0xff]
    %v5423 = vld [vmem:[#allocation4 + $0x110] sm:$0xff]
    %v5424 = vld [vmem:[#allocation4 + $0x118] sm:$0xff]
    %v5425 = vld [vmem:[#allocation4 + $0x120] sm:$0xff]
    %v5426 = vld [vmem:[#allocation4 + $0x128] sm:$0xff]
    %v5427 = vld [vmem:[#allocation4 + $0x130] sm:$0xff]
    %v5428 = vld [vmem:[#allocation4 + $0x138] sm:$0xff]
    %v5429 = vld [vmem:[#allocation4 + $0x140] sm:$0xff]
    %v5430 = vld [vmem:[#allocation4 + $0x148] sm:$0xff]
    %v5431 = vld [vmem:[#allocation4 + $0x150] sm:$0xff]
    %v5432 = vld [vmem:[#allocation4 + $0x158] sm:$0xff]
    %v5433 = vld [vmem:[#allocation4 + $0x160] sm:$0xff]
    %v5434 = vld [vmem:[#allocation4 + $0x168] sm:$0xff]
    %v5435 = vld [vmem:[#allocation4 + $0x170] sm:$0xff]
    %v5436 = vld [vmem:[#allocation4 + $0x178] sm:$0xff]
    %v5437 = vld [vmem:[#allocation4 + $0x180] sm:$0xff]
    %v5438 = vld [vmem:[#allocation4 + $0x188] sm:$0xff]
    %v5439 = vld [vmem:[#allocation4 + $0x190] sm:$0xff]
    %v5440 = vld [vmem:[#allocation4 + $0x198] sm:$0xff]
    %v5441 = vld [vmem:[#allocation4 + $0x1a0] sm:$0xff]
    %v5442 = vld [vmem:[#allocation4 + $0x1a8] sm:$0xff]
    %v5443 = vld [vmem:[#allocation4 + $0x1b0] sm:$0xff]
    %v5444 = vld [vmem:[#allocation4 + $0x1b8] sm:$0xff]
    %v5445 = vld [vmem:[#allocation4 + $0x1c0] sm:$0xff]
    %v5446 = vld [vmem:[#allocation4 + $0x1c8] sm:$0xff]
    %v5447 = vld [vmem:[#allocation4 + $0x1d0] sm:$0xff]
    %v5448 = vld [vmem:[#allocation4 + $0x1d8] sm:$0xff]
    %v5449 = vld [vmem:[#allocation4 + $0x1e0] sm:$0xff]
    %v5450 = vld [vmem:[#allocation4 + $0x1e8] sm:$0xff]
    %v5451 = vld [vmem:[#allocation4 + $0x1f0] sm:$0xff]
    %v5452 = vld [vmem:[#allocation4 + $0x1f8] sm:$0xff]
    %v5453 = vadd.f32 %v5325, %v5389
    %v5454 = vadd.f32 %v5326, %v5390
    %v5455 = vadd.f32 %v5327, %v5391
    %v5456 = vadd.f32 %v5328, %v5392
    %v5457 = vadd.f32 %v5329, %v5393
    %v5458 = vadd.f32 %v5330, %v5394
    %v5459 = vadd.f32 %v5331, %v5395
    %v5460 = vadd.f32 %v5332, %v5396
    %v5461 = vadd.f32 %v5333, %v5397
    %v5462 = vadd.f32 %v5334, %v5398
    %v5463 = vadd.f32 %v5335, %v5399
    %v5464 = vadd.f32 %v5336, %v5400
    %v5465 = vadd.f32 %v5337, %v5401
    %v5466 = vadd.f32 %v5338, %v5402
    %v5467 = vadd.f32 %v5339, %v5403
    %v5468 = vadd.f32 %v5340, %v5404
    %v5469 = vadd.f32 %v5341, %v5405
    %v5470 = vadd.f32 %v5342, %v5406
    %v5471 = vadd.f32 %v5343, %v5407
    %v5472 = vadd.f32 %v5344, %v5408
    %v5473 = vadd.f32 %v5345, %v5409
    %v5474 = vadd.f32 %v5346, %v5410
    %v5475 = vadd.f32 %v5347, %v5411
    %v5476 = vadd.f32 %v5348, %v5412
    %v5477 = vadd.f32 %v5349, %v5413
    %v5478 = vadd.f32 %v5350, %v5414
    %v5479 = vadd.f32 %v5351, %v5415
    %v5480 = vadd.f32 %v5352, %v5416
    %v5481 = vadd.f32 %v5353, %v5417
    %v5482 = vadd.f32 %v5354, %v5418
    %v5483 = vadd.f32 %v5355, %v5419
    %v5484 = vadd.f32 %v5356, %v5420
    %v5485 = vadd.f32 %v5357, %v5421
    %v5486 = vadd.f32 %v5358, %v5422
    %v5487 = vadd.f32 %v5359, %v5423
    %v5488 = vadd.f32 %v5360, %v5424
    %v5489 = vadd.f32 %v5361, %v5425
    %v5490 = vadd.f32 %v5362, %v5426
    %v5491 = vadd.f32 %v5363, %v5427
    %v5492 = vadd.f32 %v5364, %v5428
    %v5493 = vadd.f32 %v5365, %v5429
    %v5494 = vadd.f32 %v5366, %v5430
    %v5495 = vadd.f32 %v5367, %v5431
    %v5496 = vadd.f32 %v5368, %v5432
    %v5497 = vadd.f32 %v5369, %v5433
    %v5498 = vadd.f32 %v5370, %v5434
    %v5499 = vadd.f32 %v5371, %v5435
    %v5500 = vadd.f32 %v5372, %v5436
    %v5501 = vadd.f32 %v5373, %v5437
    %v5502 = vadd.f32 %v5374, %v5438
    %v5503 = vadd.f32 %v5375, %v5439
    %v5504 = vadd.f32 %v5376, %v5440
    %v5505 = vadd.f32 %v5377, %v5441
    %v5506 = vadd.f32 %v5378, %v5442
    %v5507 = vadd.f32 %v5379, %v5443
    %v5508 = vadd.f32 %v5380, %v5444
    %v5509 = vadd.f32 %v5381, %v5445
    %v5510 = vadd.f32 %v5382, %v5446
    %v5511 = vadd.f32 %v5383, %v5447
    %v5512 = vadd.f32 %v5384, %v5448
    %v5513 = vadd.f32 %v5385, %v5449
    %v5514 = vadd.f32 %v5386, %v5450
    %v5515 = vadd.f32 %v5387, %v5451
    %v5516 = vadd.f32 %v5388, %v5452
    %v5517 = vmax.f32 %v5453, 0.0
    %v5518 = vmax.f32 %v5454, 0.0
    %v5519 = vmax.f32 %v5455, 0.0
    %v5520 = vmax.f32 %v5456, 0.0
    %v5521 = vmax.f32 %v5457, 0.0
    %v5522 = vmax.f32 %v5458, 0.0
    %v5523 = vmax.f32 %v5459, 0.0
    %v5524 = vmax.f32 %v5460, 0.0
    %v5525 = vmax.f32 %v5461, 0.0
    %v5526 = vmax.f32 %v5462, 0.0
    %v5527 = vmax.f32 %v5463, 0.0
    %v5528 = vmax.f32 %v5464, 0.0
    %v5529 = vmax.f32 %v5465, 0.0
    %v5530 = vmax.f32 %v5466, 0.0
    %v5531 = vmax.f32 %v5467, 0.0
    %v5532 = vmax.f32 %v5468, 0.0
    %v5533 = vmax.f32 %v5469, 0.0
    %v5534 = vmax.f32 %v5470, 0.0
    %v5535 = vmax.f32 %v5471, 0.0
    %v5536 = vmax.f32 %v5472, 0.0
    %v5537 = vmax.f32 %v5473, 0.0
    %v5538 = vmax.f32 %v5474, 0.0
    %v5539 = vmax.f32 %v5475, 0.0
    %v5540 = vmax.f32 %v5476, 0.0
    %v5541 = vmax.f32 %v5477, 0.0
    %v5542 = vmax.f32 %v5478, 0.0
    %v5543 = vmax.f32 %v5479, 0.0
    %v5544 = vmax.f32 %v5480, 0.0
    %v5545 = vmax.f32 %v5481, 0.0
    %v5546 = vmax.f32 %v5482, 0.0
    %v5547 = vmax.f32 %v5483, 0.0
    %v5548 = vmax.f32 %v5484, 0.0
    %v5549 = vmax.f32 %v5485, 0.0
    %v5550 = vmax.f32 %v5486, 0.0
    %v5551 = vmax.f32 %v5487, 0.0
    %v5552 = vmax.f32 %v5488, 0.0
    %v5553 = vmax.f32 %v5489, 0.0
    %v5554 = vmax.f32 %v5490, 0.0
    %v5555 = vmax.f32 %v5491, 0.0
    %v5556 = vmax.f32 %v5492, 0.0
    %v5557 = vmax.f32 %v5493, 0.0
    %v5558 = vmax.f32 %v5494, 0.0
    %v5559 = vmax.f32 %v5495, 0.0
    %v5560 = vmax.f32 %v5496, 0.0
    %v5561 = vmax.f32 %v5497, 0.0
    %v5562 = vmax.f32 %v5498, 0.0
    %v5563 = vmax.f32 %v5499, 0.0
    %v5564 = vmax.f32 %v5500, 0.0
    %v5565 = vmax.f32 %v5501, 0.0
    %v5566 = vmax.f32 %v5502, 0.0
    %v5567 = vmax.f32 %v5503, 0.0
    %v5568 = vmax.f32 %v5504, 0.0
    %v5569 = vmax.f32 %v5505, 0.0
    %v5570 = vmax.f32 %v5506, 0.0
    %v5571 = vmax.f32 %v5507, 0.0
    %v5572 = vmax.f32 %v5508, 0.0
    %v5573 = vmax.f32 %v5509, 0.0
    %v5574 = vmax.f32 %v5510, 0.0
    %v5575 = vmax.f32 %v5511, 0.0
    %v5576 = vmax.f32 %v5512, 0.0
    %v5577 = vmax.f32 %v5513, 0.0
    %v5578 = vmax.f32 %v5514, 0.0
    %v5579 = vmax.f32 %v5515, 0.0
    %v5580 = vmax.f32 %v5516, 0.0
    %5581 = vst [vmem:[#allocation7] sm:$0xff] %v5517
    %5582 = vst [vmem:[#allocation7 + $0x8] sm:$0xff] %v5518
    %5583 = vst [vmem:[#allocation7 + $0x10] sm:$0xff] %v5519
    %5584 = vst [vmem:[#allocation7 + $0x18] sm:$0xff] %v5520
    %5585 = vst [vmem:[#allocation7 + $0x20] sm:$0xff] %v5521
    %5586 = vst [vmem:[#allocation7 + $0x28] sm:$0xff] %v5522
    %5587 = vst [vmem:[#allocation7 + $0x30] sm:$0xff] %v5523
    %5588 = vst [vmem:[#allocation7 + $0x38] sm:$0xff] %v5524
    %5589 = vst [vmem:[#allocation7 + $0x40] sm:$0xff] %v5525
    %5590 = vst [vmem:[#allocation7 + $0x48] sm:$0xff] %v5526
    %5591 = vst [vmem:[#allocation7 + $0x50] sm:$0xff] %v5527
    %5592 = vst [vmem:[#allocation7 + $0x58] sm:$0xff] %v5528
    %5593 = vst [vmem:[#allocation7 + $0x60] sm:$0xff] %v5529
    %5594 = vst [vmem:[#allocation7 + $0x68] sm:$0xff] %v5530
    %5595 = vst [vmem:[#allocation7 + $0x70] sm:$0xff] %v5531
    %5596 = vst [vmem:[#allocation7 + $0x78] sm:$0xff] %v5532
    %5597 = vst [vmem:[#allocation7 + $0x80] sm:$0xff] %v5533
    %5598 = vst [vmem:[#allocation7 + $0x88] sm:$0xff] %v5534
    %5599 = vst [vmem:[#allocation7 + $0x90] sm:$0xff] %v5535
    %5600 = vst [vmem:[#allocation7 + $0x98] sm:$0xff] %v5536
    %5601 = vst [vmem:[#allocation7 + $0xa0] sm:$0xff] %v5537
    %5602 = vst [vmem:[#allocation7 + $0xa8] sm:$0xff] %v5538
    %5603 = vst [vmem:[#allocation7 + $0xb0] sm:$0xff] %v5539
    %5604 = vst [vmem:[#allocation7 + $0xb8] sm:$0xff] %v5540
    %5605 = vst [vmem:[#allocation7 + $0xc0] sm:$0xff] %v5541
    %5606 = vst [vmem:[#allocation7 + $0xc8] sm:$0xff] %v5542
    %5607 = vst [vmem:[#allocation7 + $0xd0] sm:$0xff] %v5543
    %5608 = vst [vmem:[#allocation7 + $0xd8] sm:$0xff] %v5544
    %5609 = vst [vmem:[#allocation7 + $0xe0] sm:$0xff] %v5545
    %5610 = vst [vmem:[#allocation7 + $0xe8] sm:$0xff] %v5546
    %5611 = vst [vmem:[#allocation7 + $0xf0] sm:$0xff] %v5547
    %5612 = vst [vmem:[#allocation7 + $0xf8] sm:$0xff] %v5548
    %5613 = vst [vmem:[#allocation7 + $0x100] sm:$0xff] %v5549
    %5614 = vst [vmem:[#allocation7 + $0x108] sm:$0xff] %v5550
    %5615 = vst [vmem:[#allocation7 + $0x110] sm:$0xff] %v5551
    %5616 = vst [vmem:[#allocation7 + $0x118] sm:$0xff] %v5552
    %5617 = vst [vmem:[#allocation7 + $0x120] sm:$0xff] %v5553
    %5618 = vst [vmem:[#allocation7 + $0x128] sm:$0xff] %v5554
    %5619 = vst [vmem:[#allocation7 + $0x130] sm:$0xff] %v5555
    %5620 = vst [vmem:[#allocation7 + $0x138] sm:$0xff] %v5556
    %5621 = vst [vmem:[#allocation7 + $0x140] sm:$0xff] %v5557
    %5622 = vst [vmem:[#allocation7 + $0x148] sm:$0xff] %v5558
    %5623 = vst [vmem:[#allocation7 + $0x150] sm:$0xff] %v5559
    %5624 = vst [vmem:[#allocation7 + $0x158] sm:$0xff] %v5560
    %5625 = vst [vmem:[#allocation7 + $0x160] sm:$0xff] %v5561
    %5626 = vst [vmem:[#allocation7 + $0x168] sm:$0xff] %v5562
    %5627 = vst [vmem:[#allocation7 + $0x170] sm:$0xff] %v5563
    %5628 = vst [vmem:[#allocation7 + $0x178] sm:$0xff] %v5564
    %5629 = vst [vmem:[#allocation7 + $0x180] sm:$0xff] %v5565
    %5630 = vst [vmem:[#allocation7 + $0x188] sm:$0xff] %v5566
    %5631 = vst [vmem:[#allocation7 + $0x190] sm:$0xff] %v5567
    %5632 = vst [vmem:[#allocation7 + $0x198] sm:$0xff] %v5568
    %5633 = vst [vmem:[#allocation7 + $0x1a0] sm:$0xff] %v5569
    %5634 = vst [vmem:[#allocation7 + $0x1a8] sm:$0xff] %v5570
    %5635 = vst [vmem:[#allocation7 + $0x1b0] sm:$0xff] %v5571
    %5636 = vst [vmem:[#allocation7 + $0x1b8] sm:$0xff] %v5572
    %5637 = vst [vmem:[#allocation7 + $0x1c0] sm:$0xff] %v5573
    %5638 = vst [vmem:[#allocation7 + $0x1c8] sm:$0xff] %v5574
    %5639 = vst [vmem:[#allocation7 + $0x1d0] sm:$0xff] %v5575
    %5640 = vst [vmem:[#allocation7 + $0x1d8] sm:$0xff] %v5576
    %5641 = vst [vmem:[#allocation7 + $0x1e0] sm:$0xff] %v5577
    %5642 = vst [vmem:[#allocation7 + $0x1e8] sm:$0xff] %v5578
    %5643 = vst [vmem:[#allocation7 + $0x1f0] sm:$0xff] %v5579
    %5644 = vst [vmem:[#allocation7 + $0x1f8] sm:$0xff] %v5580
    // Predicated region
    $region46: #{tpu_custom_call.1} parent=1 // pred_check
      _
    $region47: #{tpu_custom_call.1} parent=1 // pred_check_branch
      %5646 = sbr.rel (0) target = $region49
    $region48: #{tpu_custom_call.1} parent=1 // pred_region
      %s5648 = ssub.s32 8192, 8192
      %5649 = vsyncadd [#allocation6], %s5648
      %s5650 = sshll.u32 [#allocation7], 4
      %s5651 = int_to_ptr.vmem [resolvable:$true] %s5650
      %5656 = dma.vmem_to_hbm [thread:$0]  %s5651, 8192, %s10, [#allocation6], 128, 128, 8
    $region49: #{tpu_custom_call.1} parent=1 // pred_fallthru
      _
    // Predicated region
    $region50: #{tpu_custom_call.1} parent=1 // pred_check
      _
    $region51: #{tpu_custom_call.1} parent=1 // pred_check_branch
      %5658 = sbr.rel (0) target = $region53
    $region52: #{tpu_custom_call.1} parent=1 // pred_region
      %5659 = dma.done [#allocation6], 8192
    $region53: #{tpu_custom_call.1} parent=1 // pred_fallthru
      _
    %5660 = vsyncpa [#allocation5], 1
    %5661 = vsyncpa [#allocation6], 1

</llo_original>
